<compile_context>
chip_gen: v7x
topology: tpu7x:2x2x1
jax: 0.10.0
libtpu: 0.0.40
codegen_flags: <defaults>
</compile_context>

<pallas_src>
import functools

import jax
import jax.numpy as jnp
from jax.experimental import pallas as pl
from jax.experimental.pallas import tpu as pltpu

_LANES = 128


def _round_up(x, m):
    return (x + m - 1) // m * m


def _vmem_limit_bytes():
    """Per-generation scoped-VMEM limit: ~3/4 of physical, capped at 100 MiB."""
    cap = 64 * 1024 * 1024
    try:
        cap = int(pltpu.get_tpu_info().vmem_capacity_bytes)
    except Exception:
        pass
    return max(32 * 1024 * 1024, min(cap * 3 // 4, 100 * 1024 * 1024))


def _im2col(xp, kh_total, kw_total, stride, h_out, w_out):
    """im2col of a spatially padded (Hp, Wp, C) image (C lane-padded).

    Returns (patch2d, taps): patch2d is (h_out*w_out, KH*KW*C); taps is the
    list of (h_out, w_out, C) per-tap slices (kh-major, kw-minor), matching
    the (KH, KW, C, Cout) -> (KH*KW*C, Cout) weight reshape.  All work stays
    in xp's dtype; lane-axis concat offsets are multiples of 128 because C is
    lane-padded, so the concat is lane-aligned in bf16 as well as f32.
    """
    hp, wp, c = xp.shape
    if stride == 1:
        phases = [xp]
    else:
        # Decimate the W (sublane) axis once per phase instead of doing a
        # strided W gather for every tap.
        phases = [
            jax.lax.slice(xp, (0, p, 0), (hp, wp, c), (1, stride, 1))
            for p in range(stride)
        ]
    taps = []
    for kh in range(kh_total):
        for kw in range(kw_total):
            ph = phases[kw % stride]
            c0 = kw // stride
            taps.append(jax.lax.slice(
                ph,
                (kh, c0, 0),
                (kh + stride * (h_out - 1) + 1, c0 + w_out, c),
                (stride, 1, 1)))
    patch = taps[0] if len(taps) == 1 else jnp.concatenate(taps, axis=-1)
    return patch.reshape(h_out * w_out, kh_total * kw_total * c), taps


def _basic_block_kernel(x_ref, w1_ref, b1_ref, w2_ref, b2_ref, *rest,
                        stride, h1, w1, has_projection):
    """Whole BasicBlock for one image, intermediate activation kept in VMEM.

    x_ref   : (1, H+2, W+2, Cin_pad)   halo + channel padded input
    w1_ref  : (9*Cin_pad, Cout_pad)    BN-folded conv1 weights
    w2_ref  : (9*Cout_pad, Cout_pad)   BN-folded conv2 weights
    b*_ref  : (1, Cout_pad) f32        BN biases
    wsc/bsc : projection-shortcut 1x1 conv (BN folded), only when present
    o_ref   : (1, h1*w1, Cout_pad)     flat lane/sublane-dense output block
    out1p_ref (scratch): (h1+2, w1+2, Cout_pad) halo-padded conv1 activation
    """
    if has_projection:
        wsc_ref, bsc_ref, o_ref, out1p_ref = rest
    else:
        o_ref, out1p_ref = rest
    cdt = out1p_ref.dtype  # compute dtype (bf16 or f32)

    xp = x_ref[0]
    if stride != 1:
        # TODO(synk): stride-2 W-phase decimation kept in f32; move to bf16
        # once the packed-sublane strided slice is verified fast.
        xp = xp.astype(jnp.float32)

    # conv1: one big im2col matmul (K = 9*Cin_pad) + folded BN + ReLU.
    patch1, taps1 = _im2col(xp, 3, 3, stride, h1, w1)
    acc1 = jnp.dot(patch1.astype(w1_ref.dtype), w1_ref[...],
                   preferred_element_type=jnp.float32)
    out1 = jnp.maximum(acc1 + b1_ref[...], 0.0)

    # Halo-pad conv1's activation directly in VMEM (no HBM round trip, no
    # wrapper-side jnp.pad between the two convs).
    out1p_ref[...] = jnp.zeros_like(out1p_ref)
    out1p_ref[1:h1 + 1, 1:w1 + 1, :] = out1.reshape(h1, w1, -1).astype(cdt)

    # conv2 (stride 1) + folded BN.
    patch2, _ = _im2col(out1p_ref[...], 3, 3, 1, h1, w1)
    acc2 = jnp.dot(patch2.astype(w2_ref.dtype), w2_ref[...],
                   preferred_element_type=jnp.float32)
    out2 = acc2 + b2_ref[...]

    # Shortcut.  With a 3x3 / pad=1 conv1, the centre tap (kh=kw=1) of the
    # im2col is exactly x[stride*i, stride*j]; this trick is specific to
    # kernel_size=3, padding=1 (asserted in the wrapper).
    centre = taps1[4]
    centre2d = centre.reshape(h1 * w1, centre.shape[-1])
    if has_projection:
        sc = jnp.dot(centre2d.astype(wsc_ref.dtype), wsc_ref[...],
                     preferred_element_type=jnp.float32) + bsc_ref[...]
    else:
        sc = centre2d.astype(jnp.float32)  # identity: Cin_pad == Cout_pad

    o_ref[0] = jnp.maximum(out2 + sc, 0.0).astype(o_ref.dtype)


def _fold_conv_bn(w_hwio, scale, cin_pad, cout_pad, dtype):
    """Fold BN scale into the conv weights, lane-pad Cin/Cout, and reshape to
    the (KH*KW*Cin_pad, Cout_pad) im2col layout."""
    kh, kw, cin, cout = w_hwio.shape
    w = w_hwio * scale.reshape(1, 1, 1, cout)
    w = jnp.pad(w, ((0, 0), (0, 0), (0, cin_pad - cin), (0, cout_pad - cout)))
    return w.reshape(kh * kw * cin_pad, cout_pad).astype(dtype)


def _pad_bias(bias, cout_pad):
    return jnp.pad(bias, (0, cout_pad - bias.shape[0])).reshape(1, -1).astype(
        jnp.float32)


def basic_block_forward(x_nchw, params, stride, *, compute_dtype=jnp.bfloat16):
    """Matches BasicBlock.forward. Input/output: NCHW (PyTorch convention)."""
    n, in_planes, h, w = x_nchw.shape
    planes = params["w1"].shape[-1]
    assert params["w1"].shape[:2] == (3, 3)  # centre-tap shortcut trick
    cin_pad = _round_up(in_planes, _LANES)
    cout_pad = _round_up(planes, _LANES)
    h1 = (h + 2 - 3) // stride + 1
    w1 = (w + 2 - 3) // stride + 1
    has_projection = "w_sc" in params

    # NCHW -> NHWC, cast, channel pad to lane width + 1px spatial halo; XLA
    # fuses transpose/cast/pad into a single write of the padded input.
    x = jnp.transpose(x_nchw, (0, 2, 3, 1)).astype(compute_dtype)
    x_halo = jnp.pad(x, ((0, 0), (1, 1), (1, 1), (0, cin_pad - in_planes)))

    w1f = _fold_conv_bn(params["w1"], params["scale1"], cin_pad, cout_pad,
                        compute_dtype)
    b1 = _pad_bias(params["bias1"], cout_pad)
    w2f = _fold_conv_bn(params["w2"], params["scale2"], cout_pad, cout_pad,
                        compute_dtype)
    b2 = _pad_bias(params["bias2"], cout_pad)

    hp, wp = h + 2, w + 2
    in_specs = [
        pl.BlockSpec((1, hp, wp, cin_pad), lambda b: (b, 0, 0, 0)),
        pl.BlockSpec((9 * cin_pad, cout_pad), lambda b: (0, 0)),
        pl.BlockSpec((1, cout_pad), lambda b: (0, 0)),
        pl.BlockSpec((9 * cout_pad, cout_pad), lambda b: (0, 0)),
        pl.BlockSpec((1, cout_pad), lambda b: (0, 0)),
    ]
    args = [x_halo, w1f, b1, w2f, b2]
    if has_projection:
        wscf = _fold_conv_bn(params["w_sc"], params["scale_sc"], cin_pad,
                             cout_pad, compute_dtype)
        bsc = _pad_bias(params["bias_sc"], cout_pad)
        in_specs += [pl.BlockSpec((cin_pad, cout_pad), lambda b: (0, 0)),
                     pl.BlockSpec((1, cout_pad), lambda b: (0, 0))]
        args += [wscf, bsc]

    kernel = functools.partial(
        _basic_block_kernel, stride=stride, h1=h1, w1=w1,
        has_projection=has_projection)

    out = pl.pallas_call(
        kernel,
        out_shape=jax.ShapeDtypeStruct((n, h1 * w1, cout_pad), x_nchw.dtype),
        grid=(n,),
        in_specs=in_specs,
        out_specs=pl.BlockSpec((1, h1 * w1, cout_pad), lambda b: (b, 0, 0)),
        scratch_shapes=[pltpu.VMEM((h1 + 2, w1 + 2, cout_pad), compute_dtype)],
        compiler_params=pltpu.CompilerParams(
            dimension_semantics=("parallel",),
            vmem_limit_bytes=_vmem_limit_bytes()),
    )(*args)

    out = out.reshape(n, h1, w1, cout_pad)[..., :planes]
    return jnp.transpose(out, (0, 3, 1, 2))  # NHWC -> NCHW


def init_basic_block_params(key, in_planes, planes, stride):
    """Deterministic synthetic params matching BasicBlock.__init__ shapes."""
    eps = 1e-5
    k1, k2, k3 = jax.random.split(key, 3)

    def conv_w(k, cout, cin, ksz):
        # PyTorch layout (Cout, Cin, KH, KW) -> HWIO (KH, KW, Cin, Cout)
        w = jax.random.normal(k, (cout, cin, ksz, ksz), jnp.float32) * 0.1
        return jnp.transpose(w, (2, 3, 1, 0))

    def bn_affine(c):
        gamma = jnp.ones((c,), jnp.float32)
        beta = jnp.zeros((c,), jnp.float32)
        running_mean = jnp.zeros((c,), jnp.float32)
        running_var = jnp.ones((c,), jnp.float32)
        scale = gamma / jnp.sqrt(running_var + eps)
        bias = beta - running_mean * scale
        return scale, bias

    params = {}
    params["w1"] = conv_w(k1, planes, in_planes, 3)
    params["scale1"], params["bias1"] = bn_affine(planes)
    params["w2"] = conv_w(k2, planes, planes, 3)
    params["scale2"], params["bias2"] = bn_affine(planes)
    if stride != 1 or in_planes != planes:
        params["w_sc"] = conv_w(k3, planes, in_planes, 1)
        params["scale_sc"], params["bias_sc"] = bn_affine(planes)
    return params


def _reference_forward(x_nchw, params, stride):
    """Pure-JAX reference (lax.conv) for a correctness check."""
    def conv(x, w, s, pad):
        return jax.lax.conv_general_dilated(
            x, w, window_strides=(s, s), padding=[(pad, pad), (pad, pad)],
            dimension_numbers=("NHWC", "HWIO", "NHWC"))

    x = jnp.transpose(x_nchw, (0, 2, 3, 1))
    o = conv(x, params["w1"], stride, 1) * params["scale1"] + params["bias1"]
    o = jnp.maximum(o, 0.0)
    o = conv(o, params["w2"], 1, 1) * params["scale2"] + params["bias2"]
    if "w_sc" in params:
        sc = conv(x, params["w_sc"], stride, 0) * params["scale_sc"] + params["bias_sc"]
    else:
        sc = x
    o = jnp.maximum(o + sc, 0.0)
    return jnp.transpose(o, (0, 3, 1, 2))


if __name__ == "__main__":
    N, H, W = 2, 16, 16
    configs = [
        (4, 8, 1),   # channel-changing block -> fused 1x1 projection shortcut
        (8, 8, 1),   # identity shortcut
        (4, 8, 2),   # stride-2 downsample block
    ]
    key = jax.random.PRNGKey(0)
    for in_planes, planes, stride in configs:
        key, kx, kp = jax.random.split(key, 3)
        x = jax.random.normal(kx, (N, in_planes, H, W), jnp.float32)
        params = init_basic_block_params(kp, in_planes, planes, stride)
        ref = jax.block_until_ready(_reference_forward(x, params, stride))

        # f32 path (exact-ish check).
        fwd_f32 = jax.jit(functools.partial(
            basic_block_forward, stride=stride, compute_dtype=jnp.float32))
        out = jax.block_until_ready(fwd_f32(x, params))
        assert out.shape == (N, planes, H // stride, W // stride)
        assert jnp.allclose(out, ref, rtol=1e-3, atol=1e-3), (
            f"f32 mismatch for config {(in_planes, planes, stride)}")

        # bf16 activations/weights (default fast path), f32 accumulation.
        fwd_bf16 = jax.jit(functools.partial(
            basic_block_forward, stride=stride, compute_dtype=jnp.bfloat16))
        out_bf16 = jax.block_until_ready(fwd_bf16(x, params))
        assert jnp.allclose(out_bf16, ref, rtol=5e-2, atol=1e-1), (
            f"bf16 mismatch for config {(in_planes, planes, stride)}")

    print("KERNEL_OK")
</pallas_src>

<mosaic_0001>
module attributes {stable_mosaic.version = 11 : i64} {
  func.func @_basic_block_kernel(%arg0: i32, %arg1: memref<1x18x18x128xf32, #tpu.memory_space<vmem>>, %arg2: memref<1152x128xf32, #tpu.memory_space<vmem>>, %arg3: memref<1x128xf32, #tpu.memory_space<vmem>>, %arg4: memref<1152x128xf32, #tpu.memory_space<vmem>>, %arg5: memref<1x128xf32, #tpu.memory_space<vmem>>, %arg6: memref<128x128xf32, #tpu.memory_space<vmem>>, %arg7: memref<1x128xf32, #tpu.memory_space<vmem>>, %arg8: memref<1x256x128xf32, #tpu.memory_space<vmem>>, %arg9: memref<18x18x128xf32, #tpu.memory_space<vmem>>) attributes {dimension_semantics = [#tpu.dimension_semantics<parallel>], iteration_bounds = array<i64: 2>, scalar_prefetch = 0 : i64, scratch_operands = 1 : i64, tpu.core_type = #tpu.core_type<tc>, window_params = [{transform_indices = @transform_0, window_bounds = array<i64: 1, 18, 18, 128>}, {pipeline_mode = #tpu.pipeline_mode<synchronous>, transform_indices = @transform_1, window_bounds = array<i64: 1152, 128>}, {pipeline_mode = #tpu.pipeline_mode<synchronous>, transform_indices = @transform_2, window_bounds = array<i64: 1, 128>}, {pipeline_mode = #tpu.pipeline_mode<synchronous>, transform_indices = @transform_3, window_bounds = array<i64: 1152, 128>}, {pipeline_mode = #tpu.pipeline_mode<synchronous>, transform_indices = @transform_4, window_bounds = array<i64: 1, 128>}, {pipeline_mode = #tpu.pipeline_mode<synchronous>, transform_indices = @transform_5, window_bounds = array<i64: 128, 128>}, {pipeline_mode = #tpu.pipeline_mode<synchronous>, transform_indices = @transform_6, window_bounds = array<i64: 1, 128>}, {transform_indices = @transform_7, window_bounds = array<i64: 1, 256, 128>}]} {
    %c0 = arith.constant 0 : index
    %c0_0 = arith.constant 0 : index
    %c0_1 = arith.constant 0 : index
    %c0_2 = arith.constant 0 : index
    %0 = vector.load %arg1[%c0, %c0_0, %c0_1, %c0_2] : memref<1x18x18x128xf32, #tpu.memory_space<vmem>>, vector<1x18x18x128xf32>
    %1 = vector.shape_cast %0 : vector<1x18x18x128xf32> to vector<18x18x128xf32>
    %2 = vector.extract_strided_slice %1 {offsets = [0, 0, 0], sizes = [16, 16, 128], strides = [1, 1, 1]} : vector<18x18x128xf32> to vector<16x16x128xf32>
    %3 = vector.extract_strided_slice %1 {offsets = [0, 1, 0], sizes = [16, 16, 128], strides = [1, 1, 1]} : vector<18x18x128xf32> to vector<16x16x128xf32>
    %4 = vector.extract_strided_slice %1 {offsets = [0, 2, 0], sizes = [16, 16, 128], strides = [1, 1, 1]} : vector<18x18x128xf32> to vector<16x16x128xf32>
    %5 = vector.extract_strided_slice %1 {offsets = [1, 0, 0], sizes = [16, 16, 128], strides = [1, 1, 1]} : vector<18x18x128xf32> to vector<16x16x128xf32>
    %6 = vector.extract_strided_slice %1 {offsets = [1, 1, 0], sizes = [16, 16, 128], strides = [1, 1, 1]} : vector<18x18x128xf32> to vector<16x16x128xf32>
    %7 = vector.extract_strided_slice %1 {offsets = [1, 2, 0], sizes = [16, 16, 128], strides = [1, 1, 1]} : vector<18x18x128xf32> to vector<16x16x128xf32>
    %8 = vector.extract_strided_slice %1 {offsets = [2, 0, 0], sizes = [16, 16, 128], strides = [1, 1, 1]} : vector<18x18x128xf32> to vector<16x16x128xf32>
    %9 = vector.extract_strided_slice %1 {offsets = [2, 1, 0], sizes = [16, 16, 128], strides = [1, 1, 1]} : vector<18x18x128xf32> to vector<16x16x128xf32>
    %10 = vector.extract_strided_slice %1 {offsets = [2, 2, 0], sizes = [16, 16, 128], strides = [1, 1, 1]} : vector<18x18x128xf32> to vector<16x16x128xf32>
    %11 = tpu.concatenate %2, %3, %4, %5, %6, %7, %8, %9, %10 in 2 : vector<16x16x128xf32>, vector<16x16x128xf32>, vector<16x16x128xf32>, vector<16x16x128xf32>, vector<16x16x128xf32>, vector<16x16x128xf32>, vector<16x16x128xf32>, vector<16x16x128xf32>, vector<16x16x128xf32> -> vector<16x16x1152xf32>
    %12 = vector.shape_cast %11 : vector<16x16x1152xf32> to vector<256x1152xf32>
    %c0_3 = arith.constant 0 : index
    %c0_4 = arith.constant 0 : index
    %13 = vector.load %arg2[%c0_3, %c0_4] : memref<1152x128xf32, #tpu.memory_space<vmem>>, vector<1152x128xf32>
    %cst = arith.constant dense<0.000000e+00> : vector<256x128xf32>
    %14 = tpu.matmul %12, %13, %cst {dimension_numbers = #tpu.dot_dimension_numbers<[1], [0], [0], [1], [0, 0, 1, 1], [], []>} : vector<256x1152xf32>, vector<1152x128xf32>, vector<256x128xf32> -> vector<256x128xf32>
    %c0_5 = arith.constant 0 : index
    %c0_6 = arith.constant 0 : index
    %15 = vector.load %arg3[%c0_5, %c0_6] : memref<1x128xf32, #tpu.memory_space<vmem>>, vector<1x128xf32>
    %16 = vector.broadcast %15 : vector<1x128xf32> to vector<256x128xf32>
    %17 = arith.addf %14, %16 : vector<256x128xf32>
    %cst_7 = arith.constant 0.000000e+00 : f32
    %18 = vector.broadcast %cst_7 : f32 to vector<256x128xf32>
    %19 = arith.maximumf %17, %18 : vector<256x128xf32>
    %cst_8 = arith.constant 0.000000e+00 : f32
    %20 = vector.broadcast %cst_8 : f32 to vector<18x18x128xf32>
    %c0_9 = arith.constant 0 : index
    %c0_10 = arith.constant 0 : index
    %c0_11 = arith.constant 0 : index
    %21 = vector.load %arg9[%c0_9, %c0_10, %c0_11] : memref<18x18x128xf32, #tpu.memory_space<vmem>>, vector<18x18x128xf32>
    tpu.vector_store %arg9[%c0_9, %c0_10, %c0_11], %20 {strides = array<i32>} : memref<18x18x128xf32, #tpu.memory_space<vmem>>, vector<18x18x128xf32>,
    %22 = vector.shape_cast %19 : vector<256x128xf32> to vector<16x16x128xf32>
    %c1 = arith.constant 1 : index
    %c1_12 = arith.constant 1 : index
    %c0_13 = arith.constant 0 : index
    %23 = vector.load %arg9[%c1, %c1_12, %c0_13] : memref<18x18x128xf32, #tpu.memory_space<vmem>>, vector<16x16x128xf32>
    tpu.vector_store %arg9[%c1, %c1_12, %c0_13], %22 {strides = array<i32>} : memref<18x18x128xf32, #tpu.memory_space<vmem>>, vector<16x16x128xf32>,
    %c0_14 = arith.constant 0 : index
    %c0_15 = arith.constant 0 : index
    %c0_16 = arith.constant 0 : index
    %24 = vector.load %arg9[%c0_14, %c0_15, %c0_16] : memref<18x18x128xf32, #tpu.memory_space<vmem>>, vector<18x18x128xf32>
    %25 = vector.extract_strided_slice %24 {offsets = [0, 0, 0], sizes = [16, 16, 128], strides = [1, 1, 1]} : vector<18x18x128xf32> to vector<16x16x128xf32>
    %26 = vector.extract_strided_slice %24 {offsets = [0, 1, 0], sizes = [16, 16, 128], strides = [1, 1, 1]} : vector<18x18x128xf32> to vector<16x16x128xf32>
    %27 = vector.extract_strided_slice %24 {offsets = [0, 2, 0], sizes = [16, 16, 128], strides = [1, 1, 1]} : vector<18x18x128xf32> to vector<16x16x128xf32>
    %28 = vector.extract_strided_slice %24 {offsets = [1, 0, 0], sizes = [16, 16, 128], strides = [1, 1, 1]} : vector<18x18x128xf32> to vector<16x16x128xf32>
    %29 = vector.extract_strided_slice %24 {offsets = [1, 1, 0], sizes = [16, 16, 128], strides = [1, 1, 1]} : vector<18x18x128xf32> to vector<16x16x128xf32>
    %30 = vector.extract_strided_slice %24 {offsets = [1, 2, 0], sizes = [16, 16, 128], strides = [1, 1, 1]} : vector<18x18x128xf32> to vector<16x16x128xf32>
    %31 = vector.extract_strided_slice %24 {offsets = [2, 0, 0], sizes = [16, 16, 128], strides = [1, 1, 1]} : vector<18x18x128xf32> to vector<16x16x128xf32>
    %32 = vector.extract_strided_slice %24 {offsets = [2, 1, 0], sizes = [16, 16, 128], strides = [1, 1, 1]} : vector<18x18x128xf32> to vector<16x16x128xf32>
    %33 = vector.extract_strided_slice %24 {offsets = [2, 2, 0], sizes = [16, 16, 128], strides = [1, 1, 1]} : vector<18x18x128xf32> to vector<16x16x128xf32>
    %34 = tpu.concatenate %25, %26, %27, %28, %29, %30, %31, %32, %33 in 2 : vector<16x16x128xf32>, vector<16x16x128xf32>, vector<16x16x128xf32>, vector<16x16x128xf32>, vector<16x16x128xf32>, vector<16x16x128xf32>, vector<16x16x128xf32>, vector<16x16x128xf32>, vector<16x16x128xf32> -> vector<16x16x1152xf32>
    %35 = vector.shape_cast %34 : vector<16x16x1152xf32> to vector<256x1152xf32>
    %c0_17 = arith.constant 0 : index
    %c0_18 = arith.constant 0 : index
    %36 = vector.load %arg4[%c0_17, %c0_18] : memref<1152x128xf32, #tpu.memory_space<vmem>>, vector<1152x128xf32>
    %cst_19 = arith.constant dense<0.000000e+00> : vector<256x128xf32>
    %37 = tpu.matmul %35, %36, %cst_19 {dimension_numbers = #tpu.dot_dimension_numbers<[1], [0], [0], [1], [0, 0, 1, 1], [], []>} : vector<256x1152xf32>, vector<1152x128xf32>, vector<256x128xf32> -> vector<256x128xf32>
    %c0_20 = arith.constant 0 : index
    %c0_21 = arith.constant 0 : index
    %38 = vector.load %arg5[%c0_20, %c0_21] : memref<1x128xf32, #tpu.memory_space<vmem>>, vector<1x128xf32>
    %39 = vector.broadcast %38 : vector<1x128xf32> to vector<256x128xf32>
    %40 = arith.addf %37, %39 : vector<256x128xf32>
    %41 = vector.shape_cast %6 : vector<16x16x128xf32> to vector<256x128xf32>
    %c0_22 = arith.constant 0 : index
    %c0_23 = arith.constant 0 : index
    %42 = vector.load %arg6[%c0_22, %c0_23] : memref<128x128xf32, #tpu.memory_space<vmem>>, vector<128x128xf32>
    %cst_24 = arith.constant dense<0.000000e+00> : vector<256x128xf32>
    %43 = tpu.matmul %41, %42, %cst_24 {dimension_numbers = #tpu.dot_dimension_numbers<[1], [0], [0], [1], [0, 0, 1, 1], [], []>} : vector<256x128xf32>, vector<128x128xf32>, vector<256x128xf32> -> vector<256x128xf32>
    %c0_25 = arith.constant 0 : index
    %c0_26 = arith.constant 0 : index
    %44 = vector.load %arg7[%c0_25, %c0_26] : memref<1x128xf32, #tpu.memory_space<vmem>>, vector<1x128xf32>
    %45 = vector.broadcast %44 : vector<1x128xf32> to vector<256x128xf32>
    %46 = arith.addf %43, %45 : vector<256x128xf32>
    %47 = arith.addf %40, %46 : vector<256x128xf32>
    %cst_27 = arith.constant 0.000000e+00 : f32
    %48 = vector.broadcast %cst_27 : f32 to vector<256x128xf32>
    %49 = arith.maximumf %47, %48 : vector<256x128xf32>
    %c0_28 = arith.constant 0 : index
    %c0_29 = arith.constant 0 : index
    %c0_30 = arith.constant 0 : index
    %50 = vector.load %arg8[%c0_28, %c0_29, %c0_30] : memref<1x256x128xf32, #tpu.memory_space<vmem>>, vector<1x256x128xf32>
    %51 = vector.shape_cast %50 : vector<1x256x128xf32> to vector<256x128xf32>
    %52 = vector.shape_cast %49 : vector<256x128xf32> to vector<1x256x128xf32>
    tpu.vector_store %arg8[%c0_28, %c0_29, %c0_30], %52 {strides = array<i32>} : memref<1x256x128xf32, #tpu.memory_space<vmem>>, vector<1x256x128xf32>,
    return
  }
  func.func @transform_0(%arg0: i32) -> (i32, i32, i32, i32) {
    %c0_i32 = arith.constant 0 : i32
    %c0_i32_0 = arith.constant 0 : i32
    %c0_i32_1 = arith.constant 0 : i32
    %c0_i32_2 = arith.constant 0 : i32
    return %arg0, %c0_i32, %c0_i32_0, %c0_i32_1 : i32, i32, i32, i32
  }
  func.func @transform_1(%arg0: i32) -> (i32, i32) {
    %c0_i32 = arith.constant 0 : i32
    %c0_i32_0 = arith.constant 0 : i32
    %c0_i32_1 = arith.constant 0 : i32
    return %c0_i32, %c0_i32_0 : i32, i32
  }
  func.func @transform_2(%arg0: i32) -> (i32, i32) {
    %c0_i32 = arith.constant 0 : i32
    %c0_i32_0 = arith.constant 0 : i32
    %c0_i32_1 = arith.constant 0 : i32
    return %c0_i32, %c0_i32_0 : i32, i32
  }
  func.func @transform_3(%arg0: i32) -> (i32, i32) {
    %c0_i32 = arith.constant 0 : i32
    %c0_i32_0 = arith.constant 0 : i32
    %c0_i32_1 = arith.constant 0 : i32
    return %c0_i32, %c0_i32_0 : i32, i32
  }
  func.func @transform_4(%arg0: i32) -> (i32, i32) {
    %c0_i32 = arith.constant 0 : i32
    %c0_i32_0 = arith.constant 0 : i32
    %c0_i32_1 = arith.constant 0 : i32
    return %c0_i32, %c0_i32_0 : i32, i32
  }
  func.func @transform_5(%arg0: i32) -> (i32, i32) {
    %c0_i32 = arith.constant 0 : i32
    %c0_i32_0 = arith.constant 0 : i32
    %c0_i32_1 = arith.constant 0 : i32
    return %c0_i32, %c0_i32_0 : i32, i32
  }
  func.func @transform_6(%arg0: i32) -> (i32, i32) {
    %c0_i32 = arith.constant 0 : i32
    %c0_i32_0 = arith.constant 0 : i32
    %c0_i32_1 = arith.constant 0 : i32
    return %c0_i32, %c0_i32_0 : i32, i32
  }
  func.func @transform_7(%arg0: i32) -> (i32, i32, i32) {
    %c0_i32 = arith.constant 0 : i32
    %c0_i32_0 = arith.constant 0 : i32
    %c0_i32_1 = arith.constant 0 : i32
    return %arg0, %c0_i32, %c0_i32_0 : i32, i32, i32
  }
}

</mosaic_0001>

<llo_original>
// kernel: basic_block_forward.1
$region0: #{basic_block_forward.1}
  #allocation0 [shape = 'u32[]', space=smem, size = 0x4, offset = 0x4, fixed_abs, tag = 'smem constant byte address 0x4 - core index']
  #allocation1 [shape = 'u32[144,128]{1,0:T(1,128)}', space=vmem, size = 0x12000, scoped, tag = 'internal scratch']
  #allocation2 [shape = 'f32[18,18,128]{2,1,0:T(8,128)}', space=vmem, size = 0x36000, scoped, tag = 'scratch operand']
  %s0 = inlined_call_operand.vmem [shape: f32[2,18,18,128], index: 0, kind: input, shape index: {}]
  %s1 = inlined_call_operand.vmem [shape: f32[1152,128], index: 1, kind: input, shape index: {}]
  %s2 = inlined_call_operand.vmem [shape: f32[1,128], index: 2, kind: input, shape index: {}]
  %s3 = inlined_call_operand.vmem [shape: f32[1152,128], index: 3, kind: input, shape index: {}]
  %s4 = inlined_call_operand.vmem [shape: f32[1,128], index: 4, kind: input, shape index: {}]
  %s5 = inlined_call_operand.vmem [shape: f32[128,128], index: 5, kind: input, shape index: {}]
  %s6 = inlined_call_operand.vmem [shape: f32[1,128], index: 6, kind: input, shape index: {}]
  %s7 = inlined_call_operand.vmem [shape: f32[2,256,128], index: 7, kind: output, shape index: {}]
  %s8 = sld [smem:[#allocation0]]
  $region61: #{basic_block_forward.1} parent=0
    _
  %s10 = ssub.s32 1, %s8
  %s11 = scalar_select 0, %s10, %s8
  loop: start=0, step=1, limit=4
  $region2: #{basic_block_forward.1} parent=0 // loop_pre_header
    _
  $region3: #{basic_block_forward.1} parent=0 // loop_header
    %s13 = sphi 0, %s17
    %p14 = scmp.ge.s32.totalorder %s13, 4
    %s23 = sphi 0, %s25
    %s26 = sphi 0, %s23
    %s27 = sphi 0, %s26
    %s43 = sphi 0, %s27
    %s47 = sphi 0, %s47
    %s49 = sphi 0, %s47
    %s50 = sphi 0, %s49
    %s64 = sphi 0, %s50
    %s68 = sphi 0, %s68
    %s70 = sphi 0, %s68
    %s71 = sphi 0, %s70
    %s85 = sphi 0, %s71
    %s89 = sphi 0, %s89
    %s91 = sphi 0, %s89
    %s92 = sphi 0, %s91
    %s106 = sphi 0, %s92
    %s110 = sphi 0, %s110
    %s112 = sphi 0, %s110
    %s113 = sphi 0, %s112
    %s127 = sphi 0, %s113
    %s131 = sphi 0, %s131
    %s133 = sphi 0, %s131
    %s134 = sphi 0, %s133
    %s148 = sphi 0, %s134
    %s152 = sphi 0, %s152
    %s154 = sphi 0, %s152
    %s155 = sphi 0, %s154
    %s169 = sphi 0, %s155
    %s175 = sphi 0, %s177
    %s178 = sphi 0, %s175
    %s179 = sphi 0, %s178
    %s195 = sphi 0, %s179
  $region4: #{basic_block_forward.1} parent=0 // loop_header_branch
    %16 = sbr.rel (%p14) target = $region8
  $region5: #{basic_block_forward.1} parent=0 // loop_body
    %s18 = ssub.s32 %s13, 1
    %s19 = ssub.s32 %s13, 2
    %s20 = sadd.s32 %s13, 1
    %s21 = ssub.s32 %s13, %s20
    %p22 = scmp.eq.s32.totalorder %s21, 0
    %s24 = sadd.s32 %s23, 1
    %s25 = scalar_select %p22, %s23, %s24
    %p28 = pneg %p22
    %p29 = scmp.eq.s32.totalorder %s13, 1
    %p30 = por %p28, %p29
    %p31 = scmp.ne.s32.totalorder %s23, %s26
    %p32 = scmp.eq.s32.totalorder %s13, 0
    %p33 = por %p31, %p32
    %p34 = scmp.ne.s32.totalorder %s23, %s26
    %p35 = scmp.eq.s32.totalorder %s18, 1
    %p36 = por %p34, %p35
    %p37 = scmp.ne.s32.totalorder %s26, %s27
    %p38 = scmp.eq.s32.totalorder %s18, 0
    %p39 = por %p37, %p38
    %p40 = scmp.ne.s32.totalorder %s26, %s27
    %p41 = scmp.eq.s32.totalorder %s19, 1
    %p42 = por %p40, %p41
    %p44 = scmp.ne.s32.totalorder %s27, %s43
    %p45 = scmp.eq.s32.totalorder %s19, 0
    %p46 = por %p44, %p45
    %s48 = sadd.s32 %s47, 1
    %p51 = scmp.eq.s32.totalorder %s13, 1
    %p52 = scmp.ne.s32.totalorder %s47, %s49
    %p53 = scmp.eq.s32.totalorder %s13, 0
    %p54 = por %p52, %p53
    %p55 = scmp.ne.s32.totalorder %s47, %s49
    %p56 = scmp.eq.s32.totalorder %s18, 1
    %p57 = por %p55, %p56
    %p58 = scmp.ne.s32.totalorder %s49, %s50
    %p59 = scmp.eq.s32.totalorder %s18, 0
    %p60 = por %p58, %p59
    %p61 = scmp.ne.s32.totalorder %s49, %s50
    %p62 = scmp.eq.s32.totalorder %s19, 1
    %p63 = por %p61, %p62
    %p65 = scmp.ne.s32.totalorder %s50, %s64
    %p66 = scmp.eq.s32.totalorder %s19, 0
    %p67 = por %p65, %p66
    %s69 = sadd.s32 %s68, 1
    %p72 = scmp.eq.s32.totalorder %s13, 1
    %p73 = scmp.ne.s32.totalorder %s68, %s70
    %p74 = scmp.eq.s32.totalorder %s13, 0
    %p75 = por %p73, %p74
    %p76 = scmp.ne.s32.totalorder %s68, %s70
    %p77 = scmp.eq.s32.totalorder %s18, 1
    %p78 = por %p76, %p77
    %p79 = scmp.ne.s32.totalorder %s70, %s71
    %p80 = scmp.eq.s32.totalorder %s18, 0
    %p81 = por %p79, %p80
    %p82 = scmp.ne.s32.totalorder %s70, %s71
    %p83 = scmp.eq.s32.totalorder %s19, 1
    %p84 = por %p82, %p83
    %p86 = scmp.ne.s32.totalorder %s71, %s85
    %p87 = scmp.eq.s32.totalorder %s19, 0
    %p88 = por %p86, %p87
    %s90 = sadd.s32 %s89, 1
    %p93 = scmp.eq.s32.totalorder %s13, 1
    %p94 = scmp.ne.s32.totalorder %s89, %s91
    %p95 = scmp.eq.s32.totalorder %s13, 0
    %p96 = por %p94, %p95
    %p97 = scmp.ne.s32.totalorder %s89, %s91
    %p98 = scmp.eq.s32.totalorder %s18, 1
    %p99 = por %p97, %p98
    %p100 = scmp.ne.s32.totalorder %s91, %s92
    %p101 = scmp.eq.s32.totalorder %s18, 0
    %p102 = por %p100, %p101
    %p103 = scmp.ne.s32.totalorder %s91, %s92
    %p104 = scmp.eq.s32.totalorder %s19, 1
    %p105 = por %p103, %p104
    %p107 = scmp.ne.s32.totalorder %s92, %s106
    %p108 = scmp.eq.s32.totalorder %s19, 0
    %p109 = por %p107, %p108
    %s111 = sadd.s32 %s110, 1
    %p114 = scmp.eq.s32.totalorder %s13, 1
    %p115 = scmp.ne.s32.totalorder %s110, %s112
    %p116 = scmp.eq.s32.totalorder %s13, 0
    %p117 = por %p115, %p116
    %p118 = scmp.ne.s32.totalorder %s110, %s112
    %p119 = scmp.eq.s32.totalorder %s18, 1
    %p120 = por %p118, %p119
    %p121 = scmp.ne.s32.totalorder %s112, %s113
    %p122 = scmp.eq.s32.totalorder %s18, 0
    %p123 = por %p121, %p122
    %p124 = scmp.ne.s32.totalorder %s112, %s113
    %p125 = scmp.eq.s32.totalorder %s19, 1
    %p126 = por %p124, %p125
    %p128 = scmp.ne.s32.totalorder %s113, %s127
    %p129 = scmp.eq.s32.totalorder %s19, 0
    %p130 = por %p128, %p129
    %s132 = sadd.s32 %s131, 1
    %p135 = scmp.eq.s32.totalorder %s13, 1
    %p136 = scmp.ne.s32.totalorder %s131, %s133
    %p137 = scmp.eq.s32.totalorder %s13, 0
    %p138 = por %p136, %p137
    %p139 = scmp.ne.s32.totalorder %s131, %s133
    %p140 = scmp.eq.s32.totalorder %s18, 1
    %p141 = por %p139, %p140
    %p142 = scmp.ne.s32.totalorder %s133, %s134
    %p143 = scmp.eq.s32.totalorder %s18, 0
    %p144 = por %p142, %p143
    %p145 = scmp.ne.s32.totalorder %s133, %s134
    %p146 = scmp.eq.s32.totalorder %s19, 1
    %p147 = por %p145, %p146
    %p149 = scmp.ne.s32.totalorder %s134, %s148
    %p150 = scmp.eq.s32.totalorder %s19, 0
    %p151 = por %p149, %p150
    %s153 = sadd.s32 %s152, 1
    %p156 = scmp.eq.s32.totalorder %s13, 1
    %p157 = scmp.ne.s32.totalorder %s152, %s154
    %p158 = scmp.eq.s32.totalorder %s13, 0
    %p159 = por %p157, %p158
    %p160 = scmp.ne.s32.totalorder %s152, %s154
    %p161 = scmp.eq.s32.totalorder %s18, 1
    %p162 = por %p160, %p161
    %p163 = scmp.ne.s32.totalorder %s154, %s155
    %p164 = scmp.eq.s32.totalorder %s18, 0
    %p165 = por %p163, %p164
    %p166 = scmp.ne.s32.totalorder %s154, %s155
    %p167 = scmp.eq.s32.totalorder %s19, 1
    %p168 = por %p166, %p167
    %p170 = scmp.ne.s32.totalorder %s155, %s169
    %p171 = scmp.eq.s32.totalorder %s19, 0
    %p172 = por %p170, %p171
    %s173 = ssub.s32 %s13, %s20
    %p174 = scmp.eq.s32.totalorder %s173, 0
    %s176 = sadd.s32 %s175, 1
    %s177 = scalar_select %p174, %s175, %s176
    %p180 = pneg %p174
    %p181 = scmp.eq.s32.totalorder %s13, 1
    %p182 = por %p180, %p181
    %p183 = scmp.ne.s32.totalorder %s175, %s178
    %p184 = scmp.eq.s32.totalorder %s13, 0
    %p185 = por %p183, %p184
    %p186 = scmp.ne.s32.totalorder %s175, %s178
    %p187 = scmp.eq.s32.totalorder %s18, 1
    %p188 = por %p186, %p187
    %p189 = scmp.ne.s32.totalorder %s178, %s179
    %p190 = scmp.eq.s32.totalorder %s18, 0
    %p191 = por %p189, %p190
    %p192 = scmp.ne.s32.totalorder %s178, %s179
    %p193 = scmp.eq.s32.totalorder %s19, 1
    %p194 = por %p192, %p193
    %p196 = scmp.ne.s32.totalorder %s179, %s195
    %p197 = scmp.eq.s32.totalorder %s19, 0
    %p198 = por %p196, %p197
    %p199 = scmp.le.s32.totalorder 1, %s13
    %p200 = scmp.lt.s32.totalorder %s13, 3
    %p201 = pnand %p199, %p200
    %p202 = pneg %p201
    // Predicated region
    $region9: #{basic_block_forward.1} parent=5 // pred_check
      _
    $region10: #{basic_block_forward.1} parent=5 // pred_check_branch
      %204 = sbr.rel (%p201) target = $region12
    $region11: #{basic_block_forward.1} parent=5 // pred_region
      %s205 = ssub.s32 %s13, 1
      // Predicated region
      $region13: #{basic_block_forward.1} parent=11 // pred_check
        %p206 = pneg %p60
      $region14: #{basic_block_forward.1} parent=11 // pred_check_branch
        %208 = sbr.rel (%p206) target = $region16
      $region15: #{basic_block_forward.1} parent=11 // pred_region
        _
      $region16: #{basic_block_forward.1} parent=11 // pred_fallthru
        _
      // Predicated region
      $region17: #{basic_block_forward.1} parent=11 // pred_check
        %p209 = pneg %p81
      $region18: #{basic_block_forward.1} parent=11 // pred_check_branch
        %211 = sbr.rel (%p209) target = $region20
      $region19: #{basic_block_forward.1} parent=11 // pred_region
        _
      $region20: #{basic_block_forward.1} parent=11 // pred_fallthru
        _
      // Predicated region
      $region21: #{basic_block_forward.1} parent=11 // pred_check
        %p212 = pneg %p102
      $region22: #{basic_block_forward.1} parent=11 // pred_check_branch
        %214 = sbr.rel (%p212) target = $region24
      $region23: #{basic_block_forward.1} parent=11 // pred_region
        _
      $region24: #{basic_block_forward.1} parent=11 // pred_fallthru
        _
      // Predicated region
      $region25: #{basic_block_forward.1} parent=11 // pred_check
        %p215 = pneg %p123
      $region26: #{basic_block_forward.1} parent=11 // pred_check_branch
        %217 = sbr.rel (%p215) target = $region28
      $region27: #{basic_block_forward.1} parent=11 // pred_region
        _
      $region28: #{basic_block_forward.1} parent=11 // pred_fallthru
        _
      // Predicated region
      $region29: #{basic_block_forward.1} parent=11 // pred_check
        %p218 = pneg %p144
      $region30: #{basic_block_forward.1} parent=11 // pred_check_branch
        %220 = sbr.rel (%p218) target = $region32
      $region31: #{basic_block_forward.1} parent=11 // pred_region
        _
      $region32: #{basic_block_forward.1} parent=11 // pred_fallthru
        _
      // Predicated region
      $region33: #{basic_block_forward.1} parent=11 // pred_check
        %p221 = pneg %p165
      $region34: #{basic_block_forward.1} parent=11 // pred_check_branch
        %223 = sbr.rel (%p221) target = $region36
      $region35: #{basic_block_forward.1} parent=11 // pred_region
        _
      $region36: #{basic_block_forward.1} parent=11 // pred_fallthru
        _
    $region12: #{basic_block_forward.1} parent=5 // pred_fallthru
      _
    %p224 = scmp.lt.s32.totalorder %s13, 2
    // Predicated region
    $region37: #{basic_block_forward.1} parent=5 // pred_check
      %p225 = pneg %p224
    $region38: #{basic_block_forward.1} parent=5 // pred_check_branch
      %227 = sbr.rel (%p225) target = $region40
    $region39: #{basic_block_forward.1} parent=5 // pred_region
      // Predicated region
      $region41: #{basic_block_forward.1} parent=39 // pred_check
        %p228 = pneg %p33
      $region42: #{basic_block_forward.1} parent=39 // pred_check_branch
        %230 = sbr.rel (%p228) target = $region44
      $region43: #{basic_block_forward.1} parent=39 // pred_region
        %p231 = scmp.lt.s32.totalorder %s13, 1
        %s232 = scalar_select %p231, %s13, 1
        %s233 = smul.addr %s232, 54
        %s234 = smul.addr %s233, 8
        %s235 = scalar_lea.vmem %s0, %s234
      $region44: #{basic_block_forward.1} parent=39 // pred_fallthru
        _
    $region40: #{basic_block_forward.1} parent=5 // pred_fallthru
      _
    %p236 = scmp.le.s32.totalorder 1, %s13
    %p237 = scmp.lt.s32.totalorder %s13, 3
    %p238 = pnand %p236, %p237
    %p239 = pneg %p238
    // Predicated region
    $region45: #{basic_block_forward.1} parent=5 // pred_check
      _
    $region46: #{basic_block_forward.1} parent=5 // pred_check_branch
      %241 = sbr.rel (%p238) target = $region48
    $region47: #{basic_block_forward.1} parent=5 // pred_region
      %s242 = ssub.s32 %s13, 1
      %p243 = scmp.lt.s32.totalorder %s18, 1
      %s244 = scalar_select %p243, %s18, 1
      %s245 = smul.addr %s244, 54
      %s246 = smul.addr %s245, 8
      %s247 = scalar_lea.vmem %s0, %s246
      %p248 = pneg %p39
      %p249 = pneg %p36
      %p250 = pneg %p60
      %p251 = pneg %p57
      %p252 = pneg %p81
      %p253 = pneg %p78
      %p254 = pneg %p102
      %p255 = pneg %p99
      %p256 = pneg %p123
      %p257 = pneg %p120
      %p258 = pneg %p144
      %p259 = pneg %p141
      %p260 = pneg %p165
      %p261 = pneg %p162
      %p262 = pneg %p191
      %p263 = pneg %p188
      %p264 = scmp.lt.s32.totalorder %s18, 1
      %s265 = scalar_select %p264, %s18, 1
      %s266 = smul.addr %s265, 32
      %s267 = smul.addr %s266, 8
      %s268 = scalar_lea.vmem %s7, %s267
      %p269 = scmp.lt.s32.totalorder %s18, 1
      %s270 = scalar_select %p269, %s18, 1
      %s271 = smul.addr %s270, 54
      %s272 = smul.addr %s271, 8
      %s273 = scalar_lea.vmem %s0, %s272
      %p274 = scmp.lt.s32.totalorder %s18, 1
      %s275 = scalar_select %p274, %s18, 1
      %s276 = smul.addr %s275, 32
      %s277 = smul.addr %s276, 8
      %s278 = scalar_lea.vmem %s7, %s277
      %v279 = vld [vmem:[%s273] sm:$0xff]
      %v280 = vld [vmem:[%s273 + $0x8] sm:$0xff]
      %v281 = vld [vmem:[%s273 + $0x10] sm:$0x3]
      %v282 = vld [vmem:[%s273 + $0x18] sm:$0xff]
      %v283 = vld [vmem:[%s273 + $0x20] sm:$0xff]
      %v284 = vld [vmem:[%s273 + $0x28] sm:$0x3]
      %v285 = vld [vmem:[%s273 + $0x30] sm:$0xff]
      %v286 = vld [vmem:[%s273 + $0x38] sm:$0xff]
      %v287 = vld [vmem:[%s273 + $0x40] sm:$0x3]
      %v288 = vld [vmem:[%s273 + $0x48] sm:$0xff]
      %v289 = vld [vmem:[%s273 + $0x50] sm:$0xff]
      %v290 = vld [vmem:[%s273 + $0x58] sm:$0x3]
      %v291 = vld [vmem:[%s273 + $0x60] sm:$0xff]
      %v292 = vld [vmem:[%s273 + $0x68] sm:$0xff]
      %v293 = vld [vmem:[%s273 + $0x70] sm:$0x3]
      %v294 = vld [vmem:[%s273 + $0x78] sm:$0xff]
      %v295 = vld [vmem:[%s273 + $0x80] sm:$0xff]
      %v296 = vld [vmem:[%s273 + $0x88] sm:$0x3]
      %v297 = vld [vmem:[%s273 + $0x90] sm:$0xff]
      %v298 = vld [vmem:[%s273 + $0x98] sm:$0xff]
      %v299 = vld [vmem:[%s273 + $0xa0] sm:$0x3]
      %v300 = vld [vmem:[%s273 + $0xa8] sm:$0xff]
      %v301 = vld [vmem:[%s273 + $0xb0] sm:$0xff]
      %v302 = vld [vmem:[%s273 + $0xb8] sm:$0x3]
      %v303 = vld [vmem:[%s273 + $0xc0] sm:$0xff]
      %v304 = vld [vmem:[%s273 + $0xc8] sm:$0xff]
      %v305 = vld [vmem:[%s273 + $0xd0] sm:$0x3]
      %v306 = vld [vmem:[%s273 + $0xd8] sm:$0xff]
      %v307 = vld [vmem:[%s273 + $0xe0] sm:$0xff]
      %v308 = vld [vmem:[%s273 + $0xe8] sm:$0x3]
      %v309 = vld [vmem:[%s273 + $0xf0] sm:$0xff]
      %v310 = vld [vmem:[%s273 + $0xf8] sm:$0xff]
      %v311 = vld [vmem:[%s273 + $0x100] sm:$0x3]
      %v312 = vld [vmem:[%s273 + $0x108] sm:$0xff]
      %v313 = vld [vmem:[%s273 + $0x110] sm:$0xff]
      %v314 = vld [vmem:[%s273 + $0x118] sm:$0x3]
      %v315 = vld [vmem:[%s273 + $0x120] sm:$0xff]
      %v316 = vld [vmem:[%s273 + $0x128] sm:$0xff]
      %v317 = vld [vmem:[%s273 + $0x130] sm:$0x3]
      %v318 = vld [vmem:[%s273 + $0x138] sm:$0xff]
      %v319 = vld [vmem:[%s273 + $0x140] sm:$0xff]
      %v320 = vld [vmem:[%s273 + $0x148] sm:$0x3]
      %v321 = vld [vmem:[%s273 + $0x150] sm:$0xff]
      %v322 = vld [vmem:[%s273 + $0x158] sm:$0xff]
      %v323 = vld [vmem:[%s273 + $0x160] sm:$0x3]
      %v324 = vld [vmem:[%s273 + $0x168] sm:$0xff]
      %v325 = vld [vmem:[%s273 + $0x170] sm:$0xff]
      %v326 = vld [vmem:[%s273 + $0x178] sm:$0x3]
      %v327 = vld [vmem:[%s273 + $0x180] sm:$0xff]
      %v328 = vld [vmem:[%s273 + $0x188] sm:$0xff]
      %v329 = vld [vmem:[%s273 + $0x190] sm:$0x3]
      %v330 = vld [vmem:[%s273 + $0x198] sm:$0xff]
      %v331 = vld [vmem:[%s273 + $0x1a0] sm:$0xff]
      %v332 = vld [vmem:[%s273 + $0x1a8] sm:$0x3]
      %vm381 = vcmask 1046528
      %v382 = vrot.slane %v279, 1
      %v383 = vrot.slane %v280, 1
      %v384 = vsel %vm381, %v382, %v383
      %v385 = vrot.slane %v281, 1
      %v386 = vsel %vm381, %v383, %v385
      %v387 = vrot.slane %v282, 1
      %v388 = vrot.slane %v283, 1
      %v389 = vsel %vm381, %v387, %v388
      %v390 = vrot.slane %v284, 1
      %v391 = vsel %vm381, %v388, %v390
      %v392 = vrot.slane %v285, 1
      %v393 = vrot.slane %v286, 1
      %v394 = vsel %vm381, %v392, %v393
      %v395 = vrot.slane %v287, 1
      %v396 = vsel %vm381, %v393, %v395
      %v397 = vrot.slane %v288, 1
      %v398 = vrot.slane %v289, 1
      %v399 = vsel %vm381, %v397, %v398
      %v400 = vrot.slane %v290, 1
      %v401 = vsel %vm381, %v398, %v400
      %v402 = vrot.slane %v291, 1
      %v403 = vrot.slane %v292, 1
      %v404 = vsel %vm381, %v402, %v403
      %v405 = vrot.slane %v293, 1
      %v406 = vsel %vm381, %v403, %v405
      %v407 = vrot.slane %v294, 1
      %v408 = vrot.slane %v295, 1
      %v409 = vsel %vm381, %v407, %v408
      %v410 = vrot.slane %v296, 1
      %v411 = vsel %vm381, %v408, %v410
      %v412 = vrot.slane %v297, 1
      %v413 = vrot.slane %v298, 1
      %v414 = vsel %vm381, %v412, %v413
      %v415 = vrot.slane %v299, 1
      %v416 = vsel %vm381, %v413, %v415
      %v417 = vrot.slane %v300, 1
      %v418 = vrot.slane %v301, 1
      %v419 = vsel %vm381, %v417, %v418
      %v420 = vrot.slane %v302, 1
      %v421 = vsel %vm381, %v418, %v420
      %v422 = vrot.slane %v303, 1
      %v423 = vrot.slane %v304, 1
      %v424 = vsel %vm381, %v422, %v423
      %v425 = vrot.slane %v305, 1
      %v426 = vsel %vm381, %v423, %v425
      %v427 = vrot.slane %v306, 1
      %v428 = vrot.slane %v307, 1
      %v429 = vsel %vm381, %v427, %v428
      %v430 = vrot.slane %v308, 1
      %v431 = vsel %vm381, %v428, %v430
      %v432 = vrot.slane %v309, 1
      %v433 = vrot.slane %v310, 1
      %v434 = vsel %vm381, %v432, %v433
      %v435 = vrot.slane %v311, 1
      %v436 = vsel %vm381, %v433, %v435
      %v437 = vrot.slane %v312, 1
      %v438 = vrot.slane %v313, 1
      %v439 = vsel %vm381, %v437, %v438
      %v440 = vrot.slane %v314, 1
      %v441 = vsel %vm381, %v438, %v440
      %v442 = vrot.slane %v315, 1
      %v443 = vrot.slane %v316, 1
      %v444 = vsel %vm381, %v442, %v443
      %v445 = vrot.slane %v317, 1
      %v446 = vsel %vm381, %v443, %v445
      %v447 = vrot.slane %v318, 1
      %v448 = vrot.slane %v319, 1
      %v449 = vsel %vm381, %v447, %v448
      %v450 = vrot.slane %v320, 1
      %v451 = vsel %vm381, %v448, %v450
      %v452 = vrot.slane %v321, 1
      %v453 = vrot.slane %v322, 1
      %v454 = vsel %vm381, %v452, %v453
      %v455 = vrot.slane %v323, 1
      %v456 = vsel %vm381, %v453, %v455
      %v457 = vrot.slane %v324, 1
      %v458 = vrot.slane %v325, 1
      %v459 = vsel %vm381, %v457, %v458
      %v460 = vrot.slane %v326, 1
      %v461 = vsel %vm381, %v458, %v460
      %vm494 = vcmask 1045504
      %v495 = vrot.slane %v279, 2
      %v496 = vrot.slane %v280, 2
      %v497 = vsel %vm494, %v495, %v496
      %v498 = vrot.slane %v281, 2
      %v499 = vsel %vm494, %v496, %v498
      %v500 = vrot.slane %v282, 2
      %v501 = vrot.slane %v283, 2
      %v502 = vsel %vm494, %v500, %v501
      %v503 = vrot.slane %v284, 2
      %v504 = vsel %vm494, %v501, %v503
      %v505 = vrot.slane %v285, 2
      %v506 = vrot.slane %v286, 2
      %v507 = vsel %vm494, %v505, %v506
      %v508 = vrot.slane %v287, 2
      %v509 = vsel %vm494, %v506, %v508
      %v510 = vrot.slane %v288, 2
      %v511 = vrot.slane %v289, 2
      %v512 = vsel %vm494, %v510, %v511
      %v513 = vrot.slane %v290, 2
      %v514 = vsel %vm494, %v511, %v513
      %v515 = vrot.slane %v291, 2
      %v516 = vrot.slane %v292, 2
      %v517 = vsel %vm494, %v515, %v516
      %v518 = vrot.slane %v293, 2
      %v519 = vsel %vm494, %v516, %v518
      %v520 = vrot.slane %v294, 2
      %v521 = vrot.slane %v295, 2
      %v522 = vsel %vm494, %v520, %v521
      %v523 = vrot.slane %v296, 2
      %v524 = vsel %vm494, %v521, %v523
      %v525 = vrot.slane %v297, 2
      %v526 = vrot.slane %v298, 2
      %v527 = vsel %vm494, %v525, %v526
      %v528 = vrot.slane %v299, 2
      %v529 = vsel %vm494, %v526, %v528
      %v530 = vrot.slane %v300, 2
      %v531 = vrot.slane %v301, 2
      %v532 = vsel %vm494, %v530, %v531
      %v533 = vrot.slane %v302, 2
      %v534 = vsel %vm494, %v531, %v533
      %v535 = vrot.slane %v303, 2
      %v536 = vrot.slane %v304, 2
      %v537 = vsel %vm494, %v535, %v536
      %v538 = vrot.slane %v305, 2
      %v539 = vsel %vm494, %v536, %v538
      %v540 = vrot.slane %v306, 2
      %v541 = vrot.slane %v307, 2
      %v542 = vsel %vm494, %v540, %v541
      %v543 = vrot.slane %v308, 2
      %v544 = vsel %vm494, %v541, %v543
      %v545 = vrot.slane %v309, 2
      %v546 = vrot.slane %v310, 2
      %v547 = vsel %vm494, %v545, %v546
      %v548 = vrot.slane %v311, 2
      %v549 = vsel %vm494, %v546, %v548
      %v550 = vrot.slane %v312, 2
      %v551 = vrot.slane %v313, 2
      %v552 = vsel %vm494, %v550, %v551
      %v553 = vrot.slane %v314, 2
      %v554 = vsel %vm494, %v551, %v553
      %v555 = vrot.slane %v315, 2
      %v556 = vrot.slane %v316, 2
      %v557 = vsel %vm494, %v555, %v556
      %v558 = vrot.slane %v317, 2
      %v559 = vsel %vm494, %v556, %v558
      %v560 = vrot.slane %v318, 2
      %v561 = vrot.slane %v319, 2
      %v562 = vsel %vm494, %v560, %v561
      %v563 = vrot.slane %v320, 2
      %v564 = vsel %vm494, %v561, %v563
      %v565 = vrot.slane %v321, 2
      %v566 = vrot.slane %v322, 2
      %v567 = vsel %vm494, %v565, %v566
      %v568 = vrot.slane %v323, 2
      %v569 = vsel %vm494, %v566, %v568
      %v570 = vrot.slane %v324, 2
      %v571 = vrot.slane %v325, 2
      %v572 = vsel %vm494, %v570, %v571
      %v573 = vrot.slane %v326, 2
      %v574 = vsel %vm494, %v571, %v573
      %v610 = vrot.slane %v327, 1
      %v611 = vrot.slane %v328, 1
      %v612 = vsel %vm381, %v610, %v611
      %v613 = vrot.slane %v329, 1
      %v614 = vsel %vm381, %v611, %v613
      %v617 = vrot.slane %v327, 2
      %v618 = vrot.slane %v328, 2
      %v619 = vsel %vm494, %v617, %v618
      %v620 = vrot.slane %v329, 2
      %v621 = vsel %vm494, %v618, %v620
      %v627 = vrot.slane %v330, 1
      %v628 = vrot.slane %v331, 1
      %v629 = vsel %vm381, %v627, %v628
      %v630 = vrot.slane %v332, 1
      %v631 = vsel %vm381, %v628, %v630
      %v634 = vrot.slane %v330, 2
      %v635 = vrot.slane %v331, 2
      %v636 = vsel %vm494, %v634, %v635
      %v637 = vrot.slane %v332, 2
      %v638 = vsel %vm494, %v635, %v637
      %v641 = vld [vmem:[%s1] sm:$0xff]
      %v642 = vld [vmem:[%s1 + $0x8] sm:$0xff]
      %v643 = vld [vmem:[%s1 + $0x10] sm:$0xff]
      %v644 = vld [vmem:[%s1 + $0x18] sm:$0xff]
      %v645 = vld [vmem:[%s1 + $0x20] sm:$0xff]
      %v646 = vld [vmem:[%s1 + $0x28] sm:$0xff]
      %v647 = vld [vmem:[%s1 + $0x30] sm:$0xff]
      %v648 = vld [vmem:[%s1 + $0x38] sm:$0xff]
      %v649 = vld [vmem:[%s1 + $0x40] sm:$0xff]
      %v650 = vld [vmem:[%s1 + $0x48] sm:$0xff]
      %v651 = vld [vmem:[%s1 + $0x50] sm:$0xff]
      %v652 = vld [vmem:[%s1 + $0x58] sm:$0xff]
      %v653 = vld [vmem:[%s1 + $0x60] sm:$0xff]
      %v654 = vld [vmem:[%s1 + $0x68] sm:$0xff]
      %v655 = vld [vmem:[%s1 + $0x70] sm:$0xff]
      %v656 = vld [vmem:[%s1 + $0x78] sm:$0xff]
      %v657 = vld [vmem:[%s1 + $0x80] sm:$0xff]
      %v658 = vld [vmem:[%s1 + $0x88] sm:$0xff]
      %v659 = vld [vmem:[%s1 + $0x90] sm:$0xff]
      %v660 = vld [vmem:[%s1 + $0x98] sm:$0xff]
      %v661 = vld [vmem:[%s1 + $0xa0] sm:$0xff]
      %v662 = vld [vmem:[%s1 + $0xa8] sm:$0xff]
      %v663 = vld [vmem:[%s1 + $0xb0] sm:$0xff]
      %v664 = vld [vmem:[%s1 + $0xb8] sm:$0xff]
      %v665 = vld [vmem:[%s1 + $0xc0] sm:$0xff]
      %v666 = vld [vmem:[%s1 + $0xc8] sm:$0xff]
      %v667 = vld [vmem:[%s1 + $0xd0] sm:$0xff]
      %v668 = vld [vmem:[%s1 + $0xd8] sm:$0xff]
      %v669 = vld [vmem:[%s1 + $0xe0] sm:$0xff]
      %v670 = vld [vmem:[%s1 + $0xe8] sm:$0xff]
      %v671 = vld [vmem:[%s1 + $0xf0] sm:$0xff]
      %v672 = vld [vmem:[%s1 + $0xf8] sm:$0xff]
      %v673 = vld [vmem:[%s1 + $0x100] sm:$0xff]
      %v674 = vld [vmem:[%s1 + $0x108] sm:$0xff]
      %v675 = vld [vmem:[%s1 + $0x110] sm:$0xff]
      %v676 = vld [vmem:[%s1 + $0x118] sm:$0xff]
      %v677 = vld [vmem:[%s1 + $0x120] sm:$0xff]
      %v678 = vld [vmem:[%s1 + $0x128] sm:$0xff]
      %v679 = vld [vmem:[%s1 + $0x130] sm:$0xff]
      %v680 = vld [vmem:[%s1 + $0x138] sm:$0xff]
      %v681 = vld [vmem:[%s1 + $0x140] sm:$0xff]
      %v682 = vld [vmem:[%s1 + $0x148] sm:$0xff]
      %v683 = vld [vmem:[%s1 + $0x150] sm:$0xff]
      %v684 = vld [vmem:[%s1 + $0x158] sm:$0xff]
      %v685 = vld [vmem:[%s1 + $0x160] sm:$0xff]
      %v686 = vld [vmem:[%s1 + $0x168] sm:$0xff]
      %v687 = vld [vmem:[%s1 + $0x170] sm:$0xff]
      %v688 = vld [vmem:[%s1 + $0x178] sm:$0xff]
      %v689 = vld [vmem:[%s1 + $0x180] sm:$0xff]
      %v690 = vld [vmem:[%s1 + $0x188] sm:$0xff]
      %v691 = vld [vmem:[%s1 + $0x190] sm:$0xff]
      %v692 = vld [vmem:[%s1 + $0x198] sm:$0xff]
      %v693 = vld [vmem:[%s1 + $0x1a0] sm:$0xff]
      %v694 = vld [vmem:[%s1 + $0x1a8] sm:$0xff]
      %v695 = vld [vmem:[%s1 + $0x1b0] sm:$0xff]
      %v696 = vld [vmem:[%s1 + $0x1b8] sm:$0xff]
      %v697 = vld [vmem:[%s1 + $0x1c0] sm:$0xff]
      %v698 = vld [vmem:[%s1 + $0x1c8] sm:$0xff]
      %v699 = vld [vmem:[%s1 + $0x1d0] sm:$0xff]
      %v700 = vld [vmem:[%s1 + $0x1d8] sm:$0xff]
      %v701 = vld [vmem:[%s1 + $0x1e0] sm:$0xff]
      %v702 = vld [vmem:[%s1 + $0x1e8] sm:$0xff]
      %v703 = vld [vmem:[%s1 + $0x1f0] sm:$0xff]
      %v704 = vld [vmem:[%s1 + $0x1f8] sm:$0xff]
      %v705 = vld [vmem:[%s1 + $0x200] sm:$0xff]
      %v706 = vld [vmem:[%s1 + $0x208] sm:$0xff]
      %v707 = vld [vmem:[%s1 + $0x210] sm:$0xff]
      %v708 = vld [vmem:[%s1 + $0x218] sm:$0xff]
      %v709 = vld [vmem:[%s1 + $0x220] sm:$0xff]
      %v710 = vld [vmem:[%s1 + $0x228] sm:$0xff]
      %v711 = vld [vmem:[%s1 + $0x230] sm:$0xff]
      %v712 = vld [vmem:[%s1 + $0x238] sm:$0xff]
      %v713 = vld [vmem:[%s1 + $0x240] sm:$0xff]
      %v714 = vld [vmem:[%s1 + $0x248] sm:$0xff]
      %v715 = vld [vmem:[%s1 + $0x250] sm:$0xff]
      %v716 = vld [vmem:[%s1 + $0x258] sm:$0xff]
      %v717 = vld [vmem:[%s1 + $0x260] sm:$0xff]
      %v718 = vld [vmem:[%s1 + $0x268] sm:$0xff]
      %v719 = vld [vmem:[%s1 + $0x270] sm:$0xff]
      %v720 = vld [vmem:[%s1 + $0x278] sm:$0xff]
      %v721 = vld [vmem:[%s1 + $0x280] sm:$0xff]
      %v722 = vld [vmem:[%s1 + $0x288] sm:$0xff]
      %v723 = vld [vmem:[%s1 + $0x290] sm:$0xff]
      %v724 = vld [vmem:[%s1 + $0x298] sm:$0xff]
      %v725 = vld [vmem:[%s1 + $0x2a0] sm:$0xff]
      %v726 = vld [vmem:[%s1 + $0x2a8] sm:$0xff]
      %v727 = vld [vmem:[%s1 + $0x2b0] sm:$0xff]
      %v728 = vld [vmem:[%s1 + $0x2b8] sm:$0xff]
      %v729 = vld [vmem:[%s1 + $0x2c0] sm:$0xff]
      %v730 = vld [vmem:[%s1 + $0x2c8] sm:$0xff]
      %v731 = vld [vmem:[%s1 + $0x2d0] sm:$0xff]
      %v732 = vld [vmem:[%s1 + $0x2d8] sm:$0xff]
      %v733 = vld [vmem:[%s1 + $0x2e0] sm:$0xff]
      %v734 = vld [vmem:[%s1 + $0x2e8] sm:$0xff]
      %v735 = vld [vmem:[%s1 + $0x2f0] sm:$0xff]
      %v736 = vld [vmem:[%s1 + $0x2f8] sm:$0xff]
      %v737 = vld [vmem:[%s1 + $0x300] sm:$0xff]
      %v738 = vld [vmem:[%s1 + $0x308] sm:$0xff]
      %v739 = vld [vmem:[%s1 + $0x310] sm:$0xff]
      %v740 = vld [vmem:[%s1 + $0x318] sm:$0xff]
      %v741 = vld [vmem:[%s1 + $0x320] sm:$0xff]
      %v742 = vld [vmem:[%s1 + $0x328] sm:$0xff]
      %v743 = vld [vmem:[%s1 + $0x330] sm:$0xff]
      %v744 = vld [vmem:[%s1 + $0x338] sm:$0xff]
      %v745 = vld [vmem:[%s1 + $0x340] sm:$0xff]
      %v746 = vld [vmem:[%s1 + $0x348] sm:$0xff]
      %v747 = vld [vmem:[%s1 + $0x350] sm:$0xff]
      %v748 = vld [vmem:[%s1 + $0x358] sm:$0xff]
      %v749 = vld [vmem:[%s1 + $0x360] sm:$0xff]
      %v750 = vld [vmem:[%s1 + $0x368] sm:$0xff]
      %v751 = vld [vmem:[%s1 + $0x370] sm:$0xff]
      %v752 = vld [vmem:[%s1 + $0x378] sm:$0xff]
      %v753 = vld [vmem:[%s1 + $0x380] sm:$0xff]
      %v754 = vld [vmem:[%s1 + $0x388] sm:$0xff]
      %v755 = vld [vmem:[%s1 + $0x390] sm:$0xff]
      %v756 = vld [vmem:[%s1 + $0x398] sm:$0xff]
      %v757 = vld [vmem:[%s1 + $0x3a0] sm:$0xff]
      %v758 = vld [vmem:[%s1 + $0x3a8] sm:$0xff]
      %v759 = vld [vmem:[%s1 + $0x3b0] sm:$0xff]
      %v760 = vld [vmem:[%s1 + $0x3b8] sm:$0xff]
      %v761 = vld [vmem:[%s1 + $0x3c0] sm:$0xff]
      %v762 = vld [vmem:[%s1 + $0x3c8] sm:$0xff]
      %v763 = vld [vmem:[%s1 + $0x3d0] sm:$0xff]
      %v764 = vld [vmem:[%s1 + $0x3d8] sm:$0xff]
      %v765 = vld [vmem:[%s1 + $0x3e0] sm:$0xff]
      %v766 = vld [vmem:[%s1 + $0x3e8] sm:$0xff]
      %v767 = vld [vmem:[%s1 + $0x3f0] sm:$0xff]
      %v768 = vld [vmem:[%s1 + $0x3f8] sm:$0xff]
      %v769 = vld [vmem:[%s1 + $0x400] sm:$0xff]
      %v770 = vld [vmem:[%s1 + $0x408] sm:$0xff]
      %v771 = vld [vmem:[%s1 + $0x410] sm:$0xff]
      %v772 = vld [vmem:[%s1 + $0x418] sm:$0xff]
      %v773 = vld [vmem:[%s1 + $0x420] sm:$0xff]
      %v774 = vld [vmem:[%s1 + $0x428] sm:$0xff]
      %v775 = vld [vmem:[%s1 + $0x430] sm:$0xff]
      %v776 = vld [vmem:[%s1 + $0x438] sm:$0xff]
      %v777 = vld [vmem:[%s1 + $0x440] sm:$0xff]
      %v778 = vld [vmem:[%s1 + $0x448] sm:$0xff]
      %v779 = vld [vmem:[%s1 + $0x450] sm:$0xff]
      %v780 = vld [vmem:[%s1 + $0x458] sm:$0xff]
      %v781 = vld [vmem:[%s1 + $0x460] sm:$0xff]
      %v782 = vld [vmem:[%s1 + $0x468] sm:$0xff]
      %v783 = vld [vmem:[%s1 + $0x470] sm:$0xff]
      %v784 = vld [vmem:[%s1 + $0x478] sm:$0xff]
      %v785 = vld [vmem:[%s2] sm:$0x1]
      %v787 = vlaneseq
      %v788 = vshrl.u32 %v787, 7
      %v789 = vsub.s32 0, %v788
      %v790 = vrot.slane %v785, %v789
      %792 = vmatprep.subr.mxu0 0.0
      %793 = vmatpush1.msra.mxu0 %v641
      %794 = vmatprep.subr.mxu0 0.0
      %795 = vmatpush1.msra.mxu0 %v642
      %796 = vmatprep.subr.mxu0 0.0
      %797 = vmatpush1.msra.mxu0 %v643
      %798 = vmatprep.subr.mxu0 0.0
      %799 = vmatpush1.msra.mxu0 %v644
      %800 = vmatprep.subr.mxu0 0.0
      %801 = vmatpush1.msra.mxu0 %v645
      %802 = vmatprep.subr.mxu0 0.0
      %803 = vmatpush1.msra.mxu0 %v646
      %804 = vmatprep.subr.mxu0 0.0
      %805 = vmatpush1.msra.mxu0 %v647
      %806 = vmatprep.subr.mxu0 0.0
      %807 = vmatpush1.msra.mxu0 %v648
      %808 = vmatprep.subr.mxu0 0.0
      %809 = vmatpush1.msra.mxu0 %v649
      %810 = vmatprep.subr.mxu0 0.0
      %811 = vmatpush1.msra.mxu0 %v650
      %812 = vmatprep.subr.mxu0 0.0
      %813 = vmatpush1.msra.mxu0 %v651
      %814 = vmatprep.subr.mxu0 0.0
      %815 = vmatpush1.msra.mxu0 %v652
      %816 = vmatprep.subr.mxu0 0.0
      %817 = vmatpush1.msra.mxu0 %v653
      %818 = vmatprep.subr.mxu0 0.0
      %819 = vmatpush1.msra.mxu0 %v654
      %820 = vmatprep.subr.mxu0 0.0
      %821 = vmatpush1.msra.mxu0 %v655
      %822 = vmatprep.subr.mxu0 0.0
      %823 = vmatpush1.msra.mxu0 %v656
      %824 = vmatprep.subr.mxu0 0.0
      %825 = vmatpush1.msra.mxu0 %v657
      %826 = vmatprep.subr.mxu0 0.0
      %827 = vmatpush1.msra.mxu0 %v658
      %828 = vmatprep.subr.mxu0 0.0
      %829 = vmatpush1.msra.mxu0 %v659
      %830 = vmatprep.subr.mxu0 0.0
      %831 = vmatpush1.msra.mxu0 %v660
      %832 = vmatprep.subr.mxu0 0.0
      %833 = vmatpush1.msra.mxu0 %v661
      %834 = vmatprep.subr.mxu0 0.0
      %835 = vmatpush1.msra.mxu0 %v662
      %836 = vmatprep.subr.mxu0 0.0
      %837 = vmatpush1.msra.mxu0 %v663
      %838 = vmatprep.subr.mxu0 0.0
      %839 = vmatpush1.msra.mxu0 %v664
      %840 = vmatprep.subr.mxu0 0.0
      %841 = vmatpush1.msra.mxu0 %v665
      %842 = vmatprep.subr.mxu0 0.0
      %843 = vmatpush1.msra.mxu0 %v666
      %844 = vmatprep.subr.mxu0 0.0
      %845 = vmatpush1.msra.mxu0 %v667
      %846 = vmatprep.subr.mxu0 0.0
      %847 = vmatpush1.msra.mxu0 %v668
      %848 = vmatprep.subr.mxu0 0.0
      %849 = vmatpush1.msra.mxu0 %v669
      %850 = vmatprep.subr.mxu0 0.0
      %851 = vmatpush1.msra.mxu0 %v670
      %852 = vmatprep.subr.mxu0 0.0
      %853 = vmatpush1.msra.mxu0 %v671
      %854 = vmatprep.subr.mxu0 0.0
      %855 = vmatpush1.msra.mxu0 %v672
      %856 = vmatprep.mubr.f32.mxu0 %v384
      %857 = vmatmul.mubr.f32.gmra.mrb[0].mxu0 %v279
      %v858 = vpop.f32.mrb[0].mxu0
      %v859 = vadd.f32 %v790, %v858
      %v860 = vpop.f32.mrb[0].mxu0
      %861 = vmatprep.mubr.f32.mxu0 %v386
      %862 = vmatmul.mubr.f32.gmra.mrb[0].mxu0 %v280
      %v863 = vpop.f32.mrb[0].mxu0
      %v864 = vadd.f32 %v790, %v863
      %v865 = vpop.f32.mrb[0].mxu0
      %866 = vmatprep.mubr.f32.mxu0 %v389
      %867 = vmatmul.mubr.f32.gmra.mrb[0].mxu0 %v282
      %v868 = vpop.f32.mrb[0].mxu0
      %v869 = vadd.f32 %v790, %v868
      %v870 = vpop.f32.mrb[0].mxu0
      %871 = vmatprep.mubr.f32.mxu0 %v391
      %872 = vmatmul.mubr.f32.gmra.mrb[0].mxu0 %v283
      %v873 = vpop.f32.mrb[0].mxu0
      %v874 = vadd.f32 %v790, %v873
      %v875 = vpop.f32.mrb[0].mxu0
      %876 = vmatprep.mubr.f32.mxu0 %v394
      %877 = vmatmul.mubr.f32.gmra.mrb[0].mxu0 %v285
      %v878 = vpop.f32.mrb[0].mxu0
      %v879 = vadd.f32 %v790, %v878
      %v880 = vpop.f32.mrb[0].mxu0
      %881 = vmatprep.mubr.f32.mxu0 %v396
      %882 = vmatmul.mubr.f32.gmra.mrb[0].mxu0 %v286
      %v883 = vpop.f32.mrb[0].mxu0
      %v884 = vadd.f32 %v790, %v883
      %v885 = vpop.f32.mrb[0].mxu0
      %886 = vmatprep.mubr.f32.mxu0 %v399
      %887 = vmatmul.mubr.f32.gmra.mrb[0].mxu0 %v288
      %v888 = vpop.f32.mrb[0].mxu0
      %v889 = vadd.f32 %v790, %v888
      %v890 = vpop.f32.mrb[0].mxu0
      %891 = vmatprep.mubr.f32.mxu0 %v401
      %892 = vmatmul.mubr.f32.gmra.mrb[0].mxu0 %v289
      %v893 = vpop.f32.mrb[0].mxu0
      %v894 = vadd.f32 %v790, %v893
      %v895 = vpop.f32.mrb[0].mxu0
      %896 = vmatprep.mubr.f32.mxu0 %v404
      %897 = vmatmul.mubr.f32.gmra.mrb[0].mxu0 %v291
      %v898 = vpop.f32.mrb[0].mxu0
      %v899 = vadd.f32 %v790, %v898
      %v900 = vpop.f32.mrb[0].mxu0
      %901 = vmatprep.mubr.f32.mxu0 %v406
      %902 = vmatmul.mubr.f32.gmra.mrb[0].mxu0 %v292
      %v903 = vpop.f32.mrb[0].mxu0
      %v904 = vadd.f32 %v790, %v903
      %v905 = vpop.f32.mrb[0].mxu0
      %906 = vmatprep.mubr.f32.mxu0 %v409
      %907 = vmatmul.mubr.f32.gmra.mrb[0].mxu0 %v294
      %v908 = vpop.f32.mrb[0].mxu0
      %v909 = vadd.f32 %v790, %v908
      %v910 = vpop.f32.mrb[0].mxu0
      %911 = vmatprep.mubr.f32.mxu0 %v411
      %912 = vmatmul.mubr.f32.gmra.mrb[0].mxu0 %v295
      %v913 = vpop.f32.mrb[0].mxu0
      %v914 = vadd.f32 %v790, %v913
      %v915 = vpop.f32.mrb[0].mxu0
      %916 = vmatprep.mubr.f32.mxu0 %v414
      %917 = vmatmul.mubr.f32.gmra.mrb[0].mxu0 %v297
      %v918 = vpop.f32.mrb[0].mxu0
      %v919 = vadd.f32 %v790, %v918
      %v920 = vpop.f32.mrb[0].mxu0
      %921 = vmatprep.mubr.f32.mxu0 %v416
      %922 = vmatmul.mubr.f32.gmra.mrb[0].mxu0 %v298
      %v923 = vpop.f32.mrb[0].mxu0
      %v924 = vadd.f32 %v790, %v923
      %v925 = vpop.f32.mrb[0].mxu0
      %926 = vmatprep.mubr.f32.mxu0 %v419
      %927 = vmatmul.mubr.f32.gmra.mrb[0].mxu0 %v300
      %v928 = vpop.f32.mrb[0].mxu0
      %v929 = vadd.f32 %v790, %v928
      %v930 = vpop.f32.mrb[0].mxu0
      %931 = vmatprep.mubr.f32.mxu0 %v421
      %932 = vmatmul.mubr.f32.gmra.mrb[0].mxu0 %v301
      %v933 = vpop.f32.mrb[0].mxu0
      %v934 = vadd.f32 %v790, %v933
      %v935 = vpop.f32.mrb[0].mxu0
      %936 = vmatprep.mubr.f32.mxu0 %v424
      %937 = vmatmul.mubr.f32.gmra.mrb[0].mxu0 %v303
      %v938 = vpop.f32.mrb[0].mxu0
      %v939 = vadd.f32 %v790, %v938
      %v940 = vpop.f32.mrb[0].mxu0
      %941 = vmatprep.mubr.f32.mxu0 %v426
      %942 = vmatmul.mubr.f32.gmra.mrb[0].mxu0 %v304
      %v943 = vpop.f32.mrb[0].mxu0
      %v944 = vadd.f32 %v790, %v943
      %v945 = vpop.f32.mrb[0].mxu0
      %946 = vmatprep.mubr.f32.mxu0 %v429
      %947 = vmatmul.mubr.f32.gmra.mrb[0].mxu0 %v306
      %v948 = vpop.f32.mrb[0].mxu0
      %v949 = vadd.f32 %v790, %v948
      %v950 = vpop.f32.mrb[0].mxu0
      %951 = vmatprep.mubr.f32.mxu0 %v431
      %952 = vmatmul.mubr.f32.gmra.mrb[0].mxu0 %v307
      %v953 = vpop.f32.mrb[0].mxu0
      %v954 = vadd.f32 %v790, %v953
      %v955 = vpop.f32.mrb[0].mxu0
      %956 = vmatprep.mubr.f32.mxu0 %v434
      %957 = vmatmul.mubr.f32.gmra.mrb[0].mxu0 %v309
      %v958 = vpop.f32.mrb[0].mxu0
      %v959 = vadd.f32 %v790, %v958
      %v960 = vpop.f32.mrb[0].mxu0
      %961 = vmatprep.mubr.f32.mxu0 %v436
      %962 = vmatmul.mubr.f32.gmra.mrb[0].mxu0 %v310
      %v963 = vpop.f32.mrb[0].mxu0
      %v964 = vadd.f32 %v790, %v963
      %v965 = vpop.f32.mrb[0].mxu0
      %966 = vmatprep.mubr.f32.mxu0 %v439
      %967 = vmatmul.mubr.f32.gmra.mrb[0].mxu0 %v312
      %v968 = vpop.f32.mrb[0].mxu0
      %v969 = vadd.f32 %v790, %v968
      %v970 = vpop.f32.mrb[0].mxu0
      %971 = vmatprep.mubr.f32.mxu0 %v441
      %972 = vmatmul.mubr.f32.gmra.mrb[0].mxu0 %v313
      %v973 = vpop.f32.mrb[0].mxu0
      %v974 = vadd.f32 %v790, %v973
      %v975 = vpop.f32.mrb[0].mxu0
      %976 = vmatprep.mubr.f32.mxu0 %v444
      %977 = vmatmul.mubr.f32.gmra.mrb[0].mxu0 %v315
      %v978 = vpop.f32.mrb[0].mxu0
      %v979 = vadd.f32 %v790, %v978
      %v980 = vpop.f32.mrb[0].mxu0
      %981 = vmatprep.mubr.f32.mxu0 %v446
      %982 = vmatmul.mubr.f32.gmra.mrb[0].mxu0 %v316
      %v983 = vpop.f32.mrb[0].mxu0
      %v984 = vadd.f32 %v790, %v983
      %v985 = vpop.f32.mrb[0].mxu0
      %986 = vmatprep.mubr.f32.mxu0 %v449
      %987 = vmatmul.mubr.f32.gmra.mrb[0].mxu0 %v318
      %v988 = vpop.f32.mrb[0].mxu0
      %v989 = vadd.f32 %v790, %v988
      %v990 = vpop.f32.mrb[0].mxu0
      %991 = vmatprep.mubr.f32.mxu0 %v451
      %992 = vmatmul.mubr.f32.gmra.mrb[0].mxu0 %v319
      %v993 = vpop.f32.mrb[0].mxu0
      %v994 = vadd.f32 %v790, %v993
      %v995 = vpop.f32.mrb[0].mxu0
      %996 = vmatprep.mubr.f32.mxu0 %v454
      %997 = vmatmul.mubr.f32.gmra.mrb[0].mxu0 %v321
      %v998 = vpop.f32.mrb[0].mxu0
      %v999 = vadd.f32 %v790, %v998
      %v1000 = vpop.f32.mrb[0].mxu0
      %1001 = vmatprep.mubr.f32.mxu0 %v456
      %1002 = vmatmul.mubr.f32.gmra.mrb[0].mxu0 %v322
      %v1003 = vpop.f32.mrb[0].mxu0
      %v1004 = vadd.f32 %v790, %v1003
      %v1005 = vpop.f32.mrb[0].mxu0
      %1006 = vmatprep.mubr.f32.mxu0 %v459
      %1007 = vmatmul.mubr.f32.gmra.mrb[0].mxu0 %v324
      %v1008 = vpop.f32.mrb[0].mxu0
      %v1009 = vadd.f32 %v790, %v1008
      %v1010 = vpop.f32.mrb[0].mxu0
      %1011 = vmatprep.mubr.f32.mxu0 %v461
      %1012 = vmatmul.mubr.f32.gmra.mrb[0].mxu0 %v325
      %v1013 = vpop.f32.mrb[0].mxu0
      %v1014 = vadd.f32 %v790, %v1013
      %v1015 = vpop.f32.mrb[0].mxu0
      %1016 = vdwg.mxu0
      %1017 = vmatprep.subr.mxu0 0.0
      %1018 = vmatpush1.msra.mxu0 %v673
      %1019 = vmatprep.subr.mxu0 0.0
      %1020 = vmatpush1.msra.mxu0 %v674
      %1021 = vmatprep.subr.mxu0 0.0
      %1022 = vmatpush1.msra.mxu0 %v675
      %1023 = vmatprep.subr.mxu0 0.0
      %1024 = vmatpush1.msra.mxu0 %v676
      %1025 = vmatprep.subr.mxu0 0.0
      %1026 = vmatpush1.msra.mxu0 %v677
      %1027 = vmatprep.subr.mxu0 0.0
      %1028 = vmatpush1.msra.mxu0 %v678
      %1029 = vmatprep.subr.mxu0 0.0
      %1030 = vmatpush1.msra.mxu0 %v679
      %1031 = vmatprep.subr.mxu0 0.0
      %1032 = vmatpush1.msra.mxu0 %v680
      %1033 = vmatprep.subr.mxu0 0.0
      %1034 = vmatpush1.msra.mxu0 %v681
      %1035 = vmatprep.subr.mxu0 0.0
      %1036 = vmatpush1.msra.mxu0 %v682
      %1037 = vmatprep.subr.mxu0 0.0
      %1038 = vmatpush1.msra.mxu0 %v683
      %1039 = vmatprep.subr.mxu0 0.0
      %1040 = vmatpush1.msra.mxu0 %v684
      %1041 = vmatprep.subr.mxu0 0.0
      %1042 = vmatpush1.msra.mxu0 %v685
      %1043 = vmatprep.subr.mxu0 0.0
      %1044 = vmatpush1.msra.mxu0 %v686
      %1045 = vmatprep.subr.mxu0 0.0
      %1046 = vmatpush1.msra.mxu0 %v687
      %1047 = vmatprep.subr.mxu0 0.0
      %1048 = vmatpush1.msra.mxu0 %v688
      %1049 = vmatprep.subr.mxu0 0.0
      %1050 = vmatpush1.msra.mxu0 %v689
      %1051 = vmatprep.subr.mxu0 0.0
      %1052 = vmatpush1.msra.mxu0 %v690
      %1053 = vmatprep.subr.mxu0 0.0
      %1054 = vmatpush1.msra.mxu0 %v691
      %1055 = vmatprep.subr.mxu0 0.0
      %1056 = vmatpush1.msra.mxu0 %v692
      %1057 = vmatprep.subr.mxu0 0.0
      %1058 = vmatpush1.msra.mxu0 %v693
      %1059 = vmatprep.subr.mxu0 0.0
      %1060 = vmatpush1.msra.mxu0 %v694
      %1061 = vmatprep.subr.mxu0 0.0
      %1062 = vmatpush1.msra.mxu0 %v695
      %1063 = vmatprep.subr.mxu0 0.0
      %1064 = vmatpush1.msra.mxu0 %v696
      %1065 = vmatprep.subr.mxu0 0.0
      %1066 = vmatpush1.msra.mxu0 %v697
      %1067 = vmatprep.subr.mxu0 0.0
      %1068 = vmatpush1.msra.mxu0 %v698
      %1069 = vmatprep.subr.mxu0 0.0
      %1070 = vmatpush1.msra.mxu0 %v699
      %1071 = vmatprep.subr.mxu0 0.0
      %1072 = vmatpush1.msra.mxu0 %v700
      %1073 = vmatprep.subr.mxu0 0.0
      %1074 = vmatpush1.msra.mxu0 %v701
      %1075 = vmatprep.subr.mxu0 0.0
      %1076 = vmatpush1.msra.mxu0 %v702
      %1077 = vmatprep.subr.mxu0 0.0
      %1078 = vmatpush1.msra.mxu0 %v703
      %1079 = vmatprep.subr.mxu0 0.0
      %1080 = vmatpush1.msra.mxu0 %v704
      %1081 = vmatprep.mubr.f32.mxu0 %v282
      %1082 = vmatmul.mubr.f32.gmra.mrb[0].mxu0 %v497
      %v1083 = vpop.f32.mrb[0].mxu0
      %v1084 = vadd.f32 %v859, %v1083
      %v1085 = vpop.f32.mrb[0].mxu0
      %1086 = vmatprep.mubr.f32.mxu0 %v283
      %1087 = vmatmul.mubr.f32.gmra.mrb[0].mxu0 %v499
      %v1088 = vpop.f32.mrb[0].mxu0
      %v1089 = vadd.f32 %v864, %v1088
      %v1090 = vpop.f32.mrb[0].mxu0
      %1091 = vmatprep.mubr.f32.mxu0 %v285
      %1092 = vmatmul.mubr.f32.gmra.mrb[0].mxu0 %v502
      %v1093 = vpop.f32.mrb[0].mxu0
      %v1094 = vadd.f32 %v869, %v1093
      %v1095 = vpop.f32.mrb[0].mxu0
      %1096 = vmatprep.mubr.f32.mxu0 %v286
      %1097 = vmatmul.mubr.f32.gmra.mrb[0].mxu0 %v504
      %v1098 = vpop.f32.mrb[0].mxu0
      %v1099 = vadd.f32 %v874, %v1098
      %v1100 = vpop.f32.mrb[0].mxu0
      %1101 = vmatprep.mubr.f32.mxu0 %v288
      %1102 = vmatmul.mubr.f32.gmra.mrb[0].mxu0 %v507
      %v1103 = vpop.f32.mrb[0].mxu0
      %v1104 = vadd.f32 %v879, %v1103
      %v1105 = vpop.f32.mrb[0].mxu0
      %1106 = vmatprep.mubr.f32.mxu0 %v289
      %1107 = vmatmul.mubr.f32.gmra.mrb[0].mxu0 %v509
      %v1108 = vpop.f32.mrb[0].mxu0
      %v1109 = vadd.f32 %v884, %v1108
      %v1110 = vpop.f32.mrb[0].mxu0
      %1111 = vmatprep.mubr.f32.mxu0 %v291
      %1112 = vmatmul.mubr.f32.gmra.mrb[0].mxu0 %v512
      %v1113 = vpop.f32.mrb[0].mxu0
      %v1114 = vadd.f32 %v889, %v1113
      %v1115 = vpop.f32.mrb[0].mxu0
      %1116 = vmatprep.mubr.f32.mxu0 %v292
      %1117 = vmatmul.mubr.f32.gmra.mrb[0].mxu0 %v514
      %v1118 = vpop.f32.mrb[0].mxu0
      %v1119 = vadd.f32 %v894, %v1118
      %v1120 = vpop.f32.mrb[0].mxu0
      %1121 = vmatprep.mubr.f32.mxu0 %v294
      %1122 = vmatmul.mubr.f32.gmra.mrb[0].mxu0 %v517
      %v1123 = vpop.f32.mrb[0].mxu0
      %v1124 = vadd.f32 %v899, %v1123
      %v1125 = vpop.f32.mrb[0].mxu0
      %1126 = vmatprep.mubr.f32.mxu0 %v295
      %1127 = vmatmul.mubr.f32.gmra.mrb[0].mxu0 %v519
      %v1128 = vpop.f32.mrb[0].mxu0
      %v1129 = vadd.f32 %v904, %v1128
      %v1130 = vpop.f32.mrb[0].mxu0
      %1131 = vmatprep.mubr.f32.mxu0 %v297
      %1132 = vmatmul.mubr.f32.gmra.mrb[0].mxu0 %v522
      %v1133 = vpop.f32.mrb[0].mxu0
      %v1134 = vadd.f32 %v909, %v1133
      %v1135 = vpop.f32.mrb[0].mxu0
      %1136 = vmatprep.mubr.f32.mxu0 %v298
      %1137 = vmatmul.mubr.f32.gmra.mrb[0].mxu0 %v524
      %v1138 = vpop.f32.mrb[0].mxu0
      %v1139 = vadd.f32 %v914, %v1138
      %v1140 = vpop.f32.mrb[0].mxu0
      %1141 = vmatprep.mubr.f32.mxu0 %v300
      %1142 = vmatmul.mubr.f32.gmra.mrb[0].mxu0 %v527
      %v1143 = vpop.f32.mrb[0].mxu0
      %v1144 = vadd.f32 %v919, %v1143
      %v1145 = vpop.f32.mrb[0].mxu0
      %1146 = vmatprep.mubr.f32.mxu0 %v301
      %1147 = vmatmul.mubr.f32.gmra.mrb[0].mxu0 %v529
      %v1148 = vpop.f32.mrb[0].mxu0
      %v1149 = vadd.f32 %v924, %v1148
      %v1150 = vpop.f32.mrb[0].mxu0
      %1151 = vmatprep.mubr.f32.mxu0 %v303
      %1152 = vmatmul.mubr.f32.gmra.mrb[0].mxu0 %v532
      %v1153 = vpop.f32.mrb[0].mxu0
      %v1154 = vadd.f32 %v929, %v1153
      %v1155 = vpop.f32.mrb[0].mxu0
      %1156 = vmatprep.mubr.f32.mxu0 %v304
      %1157 = vmatmul.mubr.f32.gmra.mrb[0].mxu0 %v534
      %v1158 = vpop.f32.mrb[0].mxu0
      %v1159 = vadd.f32 %v934, %v1158
      %v1160 = vpop.f32.mrb[0].mxu0
      %1161 = vmatprep.mubr.f32.mxu0 %v306
      %1162 = vmatmul.mubr.f32.gmra.mrb[0].mxu0 %v537
      %v1163 = vpop.f32.mrb[0].mxu0
      %v1164 = vadd.f32 %v939, %v1163
      %v1165 = vpop.f32.mrb[0].mxu0
      %1166 = vmatprep.mubr.f32.mxu0 %v307
      %1167 = vmatmul.mubr.f32.gmra.mrb[0].mxu0 %v539
      %v1168 = vpop.f32.mrb[0].mxu0
      %v1169 = vadd.f32 %v944, %v1168
      %v1170 = vpop.f32.mrb[0].mxu0
      %1171 = vmatprep.mubr.f32.mxu0 %v309
      %1172 = vmatmul.mubr.f32.gmra.mrb[0].mxu0 %v542
      %v1173 = vpop.f32.mrb[0].mxu0
      %v1174 = vadd.f32 %v949, %v1173
      %v1175 = vpop.f32.mrb[0].mxu0
      %1176 = vmatprep.mubr.f32.mxu0 %v310
      %1177 = vmatmul.mubr.f32.gmra.mrb[0].mxu0 %v544
      %v1178 = vpop.f32.mrb[0].mxu0
      %v1179 = vadd.f32 %v954, %v1178
      %v1180 = vpop.f32.mrb[0].mxu0
      %1181 = vmatprep.mubr.f32.mxu0 %v312
      %1182 = vmatmul.mubr.f32.gmra.mrb[0].mxu0 %v547
      %v1183 = vpop.f32.mrb[0].mxu0
      %v1184 = vadd.f32 %v959, %v1183
      %v1185 = vpop.f32.mrb[0].mxu0
      %1186 = vmatprep.mubr.f32.mxu0 %v313
      %1187 = vmatmul.mubr.f32.gmra.mrb[0].mxu0 %v549
      %v1188 = vpop.f32.mrb[0].mxu0
      %v1189 = vadd.f32 %v964, %v1188
      %v1190 = vpop.f32.mrb[0].mxu0
      %1191 = vmatprep.mubr.f32.mxu0 %v315
      %1192 = vmatmul.mubr.f32.gmra.mrb[0].mxu0 %v552
      %v1193 = vpop.f32.mrb[0].mxu0
      %v1194 = vadd.f32 %v969, %v1193
      %v1195 = vpop.f32.mrb[0].mxu0
      %1196 = vmatprep.mubr.f32.mxu0 %v316
      %1197 = vmatmul.mubr.f32.gmra.mrb[0].mxu0 %v554
      %v1198 = vpop.f32.mrb[0].mxu0
      %v1199 = vadd.f32 %v974, %v1198
      %v1200 = vpop.f32.mrb[0].mxu0
      %1201 = vmatprep.mubr.f32.mxu0 %v318
      %1202 = vmatmul.mubr.f32.gmra.mrb[0].mxu0 %v557
      %v1203 = vpop.f32.mrb[0].mxu0
      %v1204 = vadd.f32 %v979, %v1203
      %v1205 = vpop.f32.mrb[0].mxu0
      %1206 = vmatprep.mubr.f32.mxu0 %v319
      %1207 = vmatmul.mubr.f32.gmra.mrb[0].mxu0 %v559
      %v1208 = vpop.f32.mrb[0].mxu0
      %v1209 = vadd.f32 %v984, %v1208
      %v1210 = vpop.f32.mrb[0].mxu0
      %1211 = vmatprep.mubr.f32.mxu0 %v321
      %1212 = vmatmul.mubr.f32.gmra.mrb[0].mxu0 %v562
      %v1213 = vpop.f32.mrb[0].mxu0
      %v1214 = vadd.f32 %v989, %v1213
      %v1215 = vpop.f32.mrb[0].mxu0
      %1216 = vmatprep.mubr.f32.mxu0 %v322
      %1217 = vmatmul.mubr.f32.gmra.mrb[0].mxu0 %v564
      %v1218 = vpop.f32.mrb[0].mxu0
      %v1219 = vadd.f32 %v994, %v1218
      %v1220 = vpop.f32.mrb[0].mxu0
      %1221 = vmatprep.mubr.f32.mxu0 %v324
      %1222 = vmatmul.mubr.f32.gmra.mrb[0].mxu0 %v567
      %v1223 = vpop.f32.mrb[0].mxu0
      %v1224 = vadd.f32 %v999, %v1223
      %v1225 = vpop.f32.mrb[0].mxu0
      %1226 = vmatprep.mubr.f32.mxu0 %v325
      %1227 = vmatmul.mubr.f32.gmra.mrb[0].mxu0 %v569
      %v1228 = vpop.f32.mrb[0].mxu0
      %v1229 = vadd.f32 %v1004, %v1228
      %v1230 = vpop.f32.mrb[0].mxu0
      %1231 = vmatprep.mubr.f32.mxu0 %v327
      %1232 = vmatmul.mubr.f32.gmra.mrb[0].mxu0 %v572
      %v1233 = vpop.f32.mrb[0].mxu0
      %v1234 = vadd.f32 %v1009, %v1233
      %v1235 = vpop.f32.mrb[0].mxu0
      %1236 = vmatprep.mubr.f32.mxu0 %v328
      %1237 = vmatmul.mubr.f32.gmra.mrb[0].mxu0 %v574
      %v1238 = vpop.f32.mrb[0].mxu0
      %v1239 = vadd.f32 %v1014, %v1238
      %v1240 = vpop.f32.mrb[0].mxu0
      %1241 = vdwg.mxu0
      %1242 = vmatprep.subr.mxu0 0.0
      %1243 = vmatpush1.msra.mxu0 %v705
      %1244 = vmatprep.subr.mxu0 0.0
      %1245 = vmatpush1.msra.mxu0 %v706
      %1246 = vmatprep.subr.mxu0 0.0
      %1247 = vmatpush1.msra.mxu0 %v707
      %1248 = vmatprep.subr.mxu0 0.0
      %1249 = vmatpush1.msra.mxu0 %v708
      %1250 = vmatprep.subr.mxu0 0.0
      %1251 = vmatpush1.msra.mxu0 %v709
      %1252 = vmatprep.subr.mxu0 0.0
      %1253 = vmatpush1.msra.mxu0 %v710
      %1254 = vmatprep.subr.mxu0 0.0
      %1255 = vmatpush1.msra.mxu0 %v711
      %1256 = vmatprep.subr.mxu0 0.0
      %1257 = vmatpush1.msra.mxu0 %v712
      %1258 = vmatprep.subr.mxu0 0.0
      %1259 = vmatpush1.msra.mxu0 %v713
      %1260 = vmatprep.subr.mxu0 0.0
      %1261 = vmatpush1.msra.mxu0 %v714
      %1262 = vmatprep.subr.mxu0 0.0
      %1263 = vmatpush1.msra.mxu0 %v715
      %1264 = vmatprep.subr.mxu0 0.0
      %1265 = vmatpush1.msra.mxu0 %v716
      %1266 = vmatprep.subr.mxu0 0.0
      %1267 = vmatpush1.msra.mxu0 %v717
      %1268 = vmatprep.subr.mxu0 0.0
      %1269 = vmatpush1.msra.mxu0 %v718
      %1270 = vmatprep.subr.mxu0 0.0
      %1271 = vmatpush1.msra.mxu0 %v719
      %1272 = vmatprep.subr.mxu0 0.0
      %1273 = vmatpush1.msra.mxu0 %v720
      %1274 = vmatprep.subr.mxu0 0.0
      %1275 = vmatpush1.msra.mxu0 %v721
      %1276 = vmatprep.subr.mxu0 0.0
      %1277 = vmatpush1.msra.mxu0 %v722
      %1278 = vmatprep.subr.mxu0 0.0
      %1279 = vmatpush1.msra.mxu0 %v723
      %1280 = vmatprep.subr.mxu0 0.0
      %1281 = vmatpush1.msra.mxu0 %v724
      %1282 = vmatprep.subr.mxu0 0.0
      %1283 = vmatpush1.msra.mxu0 %v725
      %1284 = vmatprep.subr.mxu0 0.0
      %1285 = vmatpush1.msra.mxu0 %v726
      %1286 = vmatprep.subr.mxu0 0.0
      %1287 = vmatpush1.msra.mxu0 %v727
      %1288 = vmatprep.subr.mxu0 0.0
      %1289 = vmatpush1.msra.mxu0 %v728
      %1290 = vmatprep.subr.mxu0 0.0
      %1291 = vmatpush1.msra.mxu0 %v729
      %1292 = vmatprep.subr.mxu0 0.0
      %1293 = vmatpush1.msra.mxu0 %v730
      %1294 = vmatprep.subr.mxu0 0.0
      %1295 = vmatpush1.msra.mxu0 %v731
      %1296 = vmatprep.subr.mxu0 0.0
      %1297 = vmatpush1.msra.mxu0 %v732
      %1298 = vmatprep.subr.mxu0 0.0
      %1299 = vmatpush1.msra.mxu0 %v733
      %1300 = vmatprep.subr.mxu0 0.0
      %1301 = vmatpush1.msra.mxu0 %v734
      %1302 = vmatprep.subr.mxu0 0.0
      %1303 = vmatpush1.msra.mxu0 %v735
      %1304 = vmatprep.subr.mxu0 0.0
      %1305 = vmatpush1.msra.mxu0 %v736
      %1306 = vmatprep.mubr.f32.mxu0 %v502
      %1307 = vmatmul.mubr.f32.gmra.mrb[0].mxu0 %v389
      %v1308 = vpop.f32.mrb[0].mxu0
      %v1309 = vadd.f32 %v1084, %v1308
      %v1310 = vpop.f32.mrb[0].mxu0
      %1311 = vmatprep.mubr.f32.mxu0 %v504
      %1312 = vmatmul.mubr.f32.gmra.mrb[0].mxu0 %v391
      %v1313 = vpop.f32.mrb[0].mxu0
      %v1314 = vadd.f32 %v1089, %v1313
      %v1315 = vpop.f32.mrb[0].mxu0
      %1316 = vmatprep.mubr.f32.mxu0 %v507
      %1317 = vmatmul.mubr.f32.gmra.mrb[0].mxu0 %v394
      %v1318 = vpop.f32.mrb[0].mxu0
      %v1319 = vadd.f32 %v1094, %v1318
      %v1320 = vpop.f32.mrb[0].mxu0
      %1321 = vmatprep.mubr.f32.mxu0 %v509
      %1322 = vmatmul.mubr.f32.gmra.mrb[0].mxu0 %v396
      %v1323 = vpop.f32.mrb[0].mxu0
      %v1324 = vadd.f32 %v1099, %v1323
      %v1325 = vpop.f32.mrb[0].mxu0
      %1326 = vmatprep.mubr.f32.mxu0 %v512
      %1327 = vmatmul.mubr.f32.gmra.mrb[0].mxu0 %v399
      %v1328 = vpop.f32.mrb[0].mxu0
      %v1329 = vadd.f32 %v1104, %v1328
      %v1330 = vpop.f32.mrb[0].mxu0
      %1331 = vmatprep.mubr.f32.mxu0 %v514
      %1332 = vmatmul.mubr.f32.gmra.mrb[0].mxu0 %v401
      %v1333 = vpop.f32.mrb[0].mxu0
      %v1334 = vadd.f32 %v1109, %v1333
      %v1335 = vpop.f32.mrb[0].mxu0
      %1336 = vmatprep.mubr.f32.mxu0 %v517
      %1337 = vmatmul.mubr.f32.gmra.mrb[0].mxu0 %v404
      %v1338 = vpop.f32.mrb[0].mxu0
      %v1339 = vadd.f32 %v1114, %v1338
      %v1340 = vpop.f32.mrb[0].mxu0
      %1341 = vmatprep.mubr.f32.mxu0 %v519
      %1342 = vmatmul.mubr.f32.gmra.mrb[0].mxu0 %v406
      %v1343 = vpop.f32.mrb[0].mxu0
      %v1344 = vadd.f32 %v1119, %v1343
      %v1345 = vpop.f32.mrb[0].mxu0
      %1346 = vmatprep.mubr.f32.mxu0 %v522
      %1347 = vmatmul.mubr.f32.gmra.mrb[0].mxu0 %v409
      %v1348 = vpop.f32.mrb[0].mxu0
      %v1349 = vadd.f32 %v1124, %v1348
      %v1350 = vpop.f32.mrb[0].mxu0
      %1351 = vmatprep.mubr.f32.mxu0 %v524
      %1352 = vmatmul.mubr.f32.gmra.mrb[0].mxu0 %v411
      %v1353 = vpop.f32.mrb[0].mxu0
      %v1354 = vadd.f32 %v1129, %v1353
      %v1355 = vpop.f32.mrb[0].mxu0
      %1356 = vmatprep.mubr.f32.mxu0 %v527
      %1357 = vmatmul.mubr.f32.gmra.mrb[0].mxu0 %v414
      %v1358 = vpop.f32.mrb[0].mxu0
      %v1359 = vadd.f32 %v1134, %v1358
      %v1360 = vpop.f32.mrb[0].mxu0
      %1361 = vmatprep.mubr.f32.mxu0 %v529
      %1362 = vmatmul.mubr.f32.gmra.mrb[0].mxu0 %v416
      %v1363 = vpop.f32.mrb[0].mxu0
      %v1364 = vadd.f32 %v1139, %v1363
      %v1365 = vpop.f32.mrb[0].mxu0
      %1366 = vmatprep.mubr.f32.mxu0 %v532
      %1367 = vmatmul.mubr.f32.gmra.mrb[0].mxu0 %v419
      %v1368 = vpop.f32.mrb[0].mxu0
      %v1369 = vadd.f32 %v1144, %v1368
      %v1370 = vpop.f32.mrb[0].mxu0
      %1371 = vmatprep.mubr.f32.mxu0 %v534
      %1372 = vmatmul.mubr.f32.gmra.mrb[0].mxu0 %v421
      %v1373 = vpop.f32.mrb[0].mxu0
      %v1374 = vadd.f32 %v1149, %v1373
      %v1375 = vpop.f32.mrb[0].mxu0
      %1376 = vmatprep.mubr.f32.mxu0 %v537
      %1377 = vmatmul.mubr.f32.gmra.mrb[0].mxu0 %v424
      %v1378 = vpop.f32.mrb[0].mxu0
      %v1379 = vadd.f32 %v1154, %v1378
      %v1380 = vpop.f32.mrb[0].mxu0
      %1381 = vmatprep.mubr.f32.mxu0 %v539
      %1382 = vmatmul.mubr.f32.gmra.mrb[0].mxu0 %v426
      %v1383 = vpop.f32.mrb[0].mxu0
      %v1384 = vadd.f32 %v1159, %v1383
      %v1385 = vpop.f32.mrb[0].mxu0
      %1386 = vmatprep.mubr.f32.mxu0 %v542
      %1387 = vmatmul.mubr.f32.gmra.mrb[0].mxu0 %v429
      %v1388 = vpop.f32.mrb[0].mxu0
      %v1389 = vadd.f32 %v1164, %v1388
      %v1390 = vpop.f32.mrb[0].mxu0
      %1391 = vmatprep.mubr.f32.mxu0 %v544
      %1392 = vmatmul.mubr.f32.gmra.mrb[0].mxu0 %v431
      %v1393 = vpop.f32.mrb[0].mxu0
      %v1394 = vadd.f32 %v1169, %v1393
      %v1395 = vpop.f32.mrb[0].mxu0
      %1396 = vmatprep.mubr.f32.mxu0 %v547
      %1397 = vmatmul.mubr.f32.gmra.mrb[0].mxu0 %v434
      %v1398 = vpop.f32.mrb[0].mxu0
      %v1399 = vadd.f32 %v1174, %v1398
      %v1400 = vpop.f32.mrb[0].mxu0
      %1401 = vmatprep.mubr.f32.mxu0 %v549
      %1402 = vmatmul.mubr.f32.gmra.mrb[0].mxu0 %v436
      %v1403 = vpop.f32.mrb[0].mxu0
      %v1404 = vadd.f32 %v1179, %v1403
      %v1405 = vpop.f32.mrb[0].mxu0
      %1406 = vmatprep.mubr.f32.mxu0 %v552
      %1407 = vmatmul.mubr.f32.gmra.mrb[0].mxu0 %v439
      %v1408 = vpop.f32.mrb[0].mxu0
      %v1409 = vadd.f32 %v1184, %v1408
      %v1410 = vpop.f32.mrb[0].mxu0
      %1411 = vmatprep.mubr.f32.mxu0 %v554
      %1412 = vmatmul.mubr.f32.gmra.mrb[0].mxu0 %v441
      %v1413 = vpop.f32.mrb[0].mxu0
      %v1414 = vadd.f32 %v1189, %v1413
      %v1415 = vpop.f32.mrb[0].mxu0
      %1416 = vmatprep.mubr.f32.mxu0 %v557
      %1417 = vmatmul.mubr.f32.gmra.mrb[0].mxu0 %v444
      %v1418 = vpop.f32.mrb[0].mxu0
      %v1419 = vadd.f32 %v1194, %v1418
      %v1420 = vpop.f32.mrb[0].mxu0
      %1421 = vmatprep.mubr.f32.mxu0 %v559
      %1422 = vmatmul.mubr.f32.gmra.mrb[0].mxu0 %v446
      %v1423 = vpop.f32.mrb[0].mxu0
      %v1424 = vadd.f32 %v1199, %v1423
      %v1425 = vpop.f32.mrb[0].mxu0
      %1426 = vmatprep.mubr.f32.mxu0 %v562
      %1427 = vmatmul.mubr.f32.gmra.mrb[0].mxu0 %v449
      %v1428 = vpop.f32.mrb[0].mxu0
      %v1429 = vadd.f32 %v1204, %v1428
      %v1430 = vpop.f32.mrb[0].mxu0
      %1431 = vmatprep.mubr.f32.mxu0 %v564
      %1432 = vmatmul.mubr.f32.gmra.mrb[0].mxu0 %v451
      %v1433 = vpop.f32.mrb[0].mxu0
      %v1434 = vadd.f32 %v1209, %v1433
      %v1435 = vpop.f32.mrb[0].mxu0
      %1436 = vmatprep.mubr.f32.mxu0 %v567
      %1437 = vmatmul.mubr.f32.gmra.mrb[0].mxu0 %v454
      %v1438 = vpop.f32.mrb[0].mxu0
      %v1439 = vadd.f32 %v1214, %v1438
      %v1440 = vpop.f32.mrb[0].mxu0
      %1441 = vmatprep.mubr.f32.mxu0 %v569
      %1442 = vmatmul.mubr.f32.gmra.mrb[0].mxu0 %v456
      %v1443 = vpop.f32.mrb[0].mxu0
      %v1444 = vadd.f32 %v1219, %v1443
      %v1445 = vpop.f32.mrb[0].mxu0
      %1446 = vmatprep.mubr.f32.mxu0 %v572
      %1447 = vmatmul.mubr.f32.gmra.mrb[0].mxu0 %v459
      %v1448 = vpop.f32.mrb[0].mxu0
      %v1449 = vadd.f32 %v1224, %v1448
      %v1450 = vpop.f32.mrb[0].mxu0
      %1451 = vmatprep.mubr.f32.mxu0 %v574
      %1452 = vmatmul.mubr.f32.gmra.mrb[0].mxu0 %v461
      %v1453 = vpop.f32.mrb[0].mxu0
      %v1454 = vadd.f32 %v1229, %v1453
      %v1455 = vpop.f32.mrb[0].mxu0
      %1456 = vmatprep.mubr.f32.mxu0 %v619
      %1457 = vmatmul.mubr.f32.gmra.mrb[0].mxu0 %v612
      %v1458 = vpop.f32.mrb[0].mxu0
      %v1459 = vadd.f32 %v1234, %v1458
      %v1460 = vpop.f32.mrb[0].mxu0
      %1461 = vmatprep.mubr.f32.mxu0 %v621
      %1462 = vmatmul.mubr.f32.gmra.mrb[0].mxu0 %v614
      %v1463 = vpop.f32.mrb[0].mxu0
      %v1464 = vadd.f32 %v1239, %v1463
      %v1465 = vpop.f32.mrb[0].mxu0
      %1466 = vdwg.mxu0
      %1467 = vmatprep.subr.mxu0 0.0
      %1468 = vmatpush1.msra.mxu0 %v737
      %1469 = vmatprep.subr.mxu0 0.0
      %1470 = vmatpush1.msra.mxu0 %v738
      %1471 = vmatprep.subr.mxu0 0.0
      %1472 = vmatpush1.msra.mxu0 %v739
      %1473 = vmatprep.subr.mxu0 0.0
      %1474 = vmatpush1.msra.mxu0 %v740
      %1475 = vmatprep.subr.mxu0 0.0
      %1476 = vmatpush1.msra.mxu0 %v741
      %1477 = vmatprep.subr.mxu0 0.0
      %1478 = vmatpush1.msra.mxu0 %v742
      %1479 = vmatprep.subr.mxu0 0.0
      %1480 = vmatpush1.msra.mxu0 %v743
      %1481 = vmatprep.subr.mxu0 0.0
      %1482 = vmatpush1.msra.mxu0 %v744
      %1483 = vmatprep.subr.mxu0 0.0
      %1484 = vmatpush1.msra.mxu0 %v745
      %1485 = vmatprep.subr.mxu0 0.0
      %1486 = vmatpush1.msra.mxu0 %v746
      %1487 = vmatprep.subr.mxu0 0.0
      %1488 = vmatpush1.msra.mxu0 %v747
      %1489 = vmatprep.subr.mxu0 0.0
      %1490 = vmatpush1.msra.mxu0 %v748
      %1491 = vmatprep.subr.mxu0 0.0
      %1492 = vmatpush1.msra.mxu0 %v749
      %1493 = vmatprep.subr.mxu0 0.0
      %1494 = vmatpush1.msra.mxu0 %v750
      %1495 = vmatprep.subr.mxu0 0.0
      %1496 = vmatpush1.msra.mxu0 %v751
      %1497 = vmatprep.subr.mxu0 0.0
      %1498 = vmatpush1.msra.mxu0 %v752
      %1499 = vmatprep.subr.mxu0 0.0
      %1500 = vmatpush1.msra.mxu0 %v753
      %1501 = vmatprep.subr.mxu0 0.0
      %1502 = vmatpush1.msra.mxu0 %v754
      %1503 = vmatprep.subr.mxu0 0.0
      %1504 = vmatpush1.msra.mxu0 %v755
      %1505 = vmatprep.subr.mxu0 0.0
      %1506 = vmatpush1.msra.mxu0 %v756
      %1507 = vmatprep.subr.mxu0 0.0
      %1508 = vmatpush1.msra.mxu0 %v757
      %1509 = vmatprep.subr.mxu0 0.0
      %1510 = vmatpush1.msra.mxu0 %v758
      %1511 = vmatprep.subr.mxu0 0.0
      %1512 = vmatpush1.msra.mxu0 %v759
      %1513 = vmatprep.subr.mxu0 0.0
      %1514 = vmatpush1.msra.mxu0 %v760
      %1515 = vmatprep.subr.mxu0 0.0
      %1516 = vmatpush1.msra.mxu0 %v761
      %1517 = vmatprep.subr.mxu0 0.0
      %1518 = vmatpush1.msra.mxu0 %v762
      %1519 = vmatprep.subr.mxu0 0.0
      %1520 = vmatpush1.msra.mxu0 %v763
      %1521 = vmatprep.subr.mxu0 0.0
      %1522 = vmatpush1.msra.mxu0 %v764
      %1523 = vmatprep.subr.mxu0 0.0
      %1524 = vmatpush1.msra.mxu0 %v765
      %1525 = vmatprep.subr.mxu0 0.0
      %1526 = vmatpush1.msra.mxu0 %v766
      %1527 = vmatprep.subr.mxu0 0.0
      %1528 = vmatpush1.msra.mxu0 %v767
      %1529 = vmatprep.subr.mxu0 0.0
      %1530 = vmatpush1.msra.mxu0 %v768
      %1531 = vmatprep.mubr.f32.mxu0 %v394
      %1532 = vmatmul.mubr.f32.gmra.mrb[0].mxu0 %v285
      %v1533 = vpop.f32.mrb[0].mxu0
      %v1534 = vadd.f32 %v1309, %v1533
      %v1535 = vpop.f32.mrb[0].mxu0
      %1536 = vmatprep.mubr.f32.mxu0 %v396
      %1537 = vmatmul.mubr.f32.gmra.mrb[0].mxu0 %v286
      %v1538 = vpop.f32.mrb[0].mxu0
      %v1539 = vadd.f32 %v1314, %v1538
      %v1540 = vpop.f32.mrb[0].mxu0
      %1541 = vmatprep.mubr.f32.mxu0 %v399
      %1542 = vmatmul.mubr.f32.gmra.mrb[0].mxu0 %v288
      %v1543 = vpop.f32.mrb[0].mxu0
      %v1544 = vadd.f32 %v1319, %v1543
      %v1545 = vpop.f32.mrb[0].mxu0
      %1546 = vmatprep.mubr.f32.mxu0 %v401
      %1547 = vmatmul.mubr.f32.gmra.mrb[0].mxu0 %v289
      %v1548 = vpop.f32.mrb[0].mxu0
      %v1549 = vadd.f32 %v1324, %v1548
      %v1550 = vpop.f32.mrb[0].mxu0
      %1551 = vmatprep.mubr.f32.mxu0 %v404
      %1552 = vmatmul.mubr.f32.gmra.mrb[0].mxu0 %v291
      %v1553 = vpop.f32.mrb[0].mxu0
      %v1554 = vadd.f32 %v1329, %v1553
      %v1555 = vpop.f32.mrb[0].mxu0
      %1556 = vmatprep.mubr.f32.mxu0 %v406
      %1557 = vmatmul.mubr.f32.gmra.mrb[0].mxu0 %v292
      %v1558 = vpop.f32.mrb[0].mxu0
      %v1559 = vadd.f32 %v1334, %v1558
      %v1560 = vpop.f32.mrb[0].mxu0
      %1561 = vmatprep.mubr.f32.mxu0 %v409
      %1562 = vmatmul.mubr.f32.gmra.mrb[0].mxu0 %v294
      %v1563 = vpop.f32.mrb[0].mxu0
      %v1564 = vadd.f32 %v1339, %v1563
      %v1565 = vpop.f32.mrb[0].mxu0
      %1566 = vmatprep.mubr.f32.mxu0 %v411
      %1567 = vmatmul.mubr.f32.gmra.mrb[0].mxu0 %v295
      %v1568 = vpop.f32.mrb[0].mxu0
      %v1569 = vadd.f32 %v1344, %v1568
      %v1570 = vpop.f32.mrb[0].mxu0
      %1571 = vmatprep.mubr.f32.mxu0 %v414
      %1572 = vmatmul.mubr.f32.gmra.mrb[0].mxu0 %v297
      %v1573 = vpop.f32.mrb[0].mxu0
      %v1574 = vadd.f32 %v1349, %v1573
      %v1575 = vpop.f32.mrb[0].mxu0
      %1576 = vmatprep.mubr.f32.mxu0 %v416
      %1577 = vmatmul.mubr.f32.gmra.mrb[0].mxu0 %v298
      %v1578 = vpop.f32.mrb[0].mxu0
      %v1579 = vadd.f32 %v1354, %v1578
      %v1580 = vpop.f32.mrb[0].mxu0
      %1581 = vmatprep.mubr.f32.mxu0 %v419
      %1582 = vmatmul.mubr.f32.gmra.mrb[0].mxu0 %v300
      %v1583 = vpop.f32.mrb[0].mxu0
      %v1584 = vadd.f32 %v1359, %v1583
      %v1585 = vpop.f32.mrb[0].mxu0
      %1586 = vmatprep.mubr.f32.mxu0 %v421
      %1587 = vmatmul.mubr.f32.gmra.mrb[0].mxu0 %v301
      %v1588 = vpop.f32.mrb[0].mxu0
      %v1589 = vadd.f32 %v1364, %v1588
      %v1590 = vpop.f32.mrb[0].mxu0
      %1591 = vmatprep.mubr.f32.mxu0 %v424
      %1592 = vmatmul.mubr.f32.gmra.mrb[0].mxu0 %v303
      %v1593 = vpop.f32.mrb[0].mxu0
      %v1594 = vadd.f32 %v1369, %v1593
      %v1595 = vpop.f32.mrb[0].mxu0
      %1596 = vmatprep.mubr.f32.mxu0 %v426
      %1597 = vmatmul.mubr.f32.gmra.mrb[0].mxu0 %v304
      %v1598 = vpop.f32.mrb[0].mxu0
      %v1599 = vadd.f32 %v1374, %v1598
      %v1600 = vpop.f32.mrb[0].mxu0
      %1601 = vmatprep.mubr.f32.mxu0 %v429
      %1602 = vmatmul.mubr.f32.gmra.mrb[0].mxu0 %v306
      %v1603 = vpop.f32.mrb[0].mxu0
      %v1604 = vadd.f32 %v1379, %v1603
      %v1605 = vpop.f32.mrb[0].mxu0
      %1606 = vmatprep.mubr.f32.mxu0 %v431
      %1607 = vmatmul.mubr.f32.gmra.mrb[0].mxu0 %v307
      %v1608 = vpop.f32.mrb[0].mxu0
      %v1609 = vadd.f32 %v1384, %v1608
      %v1610 = vpop.f32.mrb[0].mxu0
      %1611 = vmatprep.mubr.f32.mxu0 %v434
      %1612 = vmatmul.mubr.f32.gmra.mrb[0].mxu0 %v309
      %v1613 = vpop.f32.mrb[0].mxu0
      %v1614 = vadd.f32 %v1389, %v1613
      %v1615 = vpop.f32.mrb[0].mxu0
      %1616 = vmatprep.mubr.f32.mxu0 %v436
      %1617 = vmatmul.mubr.f32.gmra.mrb[0].mxu0 %v310
      %v1618 = vpop.f32.mrb[0].mxu0
      %v1619 = vadd.f32 %v1394, %v1618
      %v1620 = vpop.f32.mrb[0].mxu0
      %1621 = vmatprep.mubr.f32.mxu0 %v439
      %1622 = vmatmul.mubr.f32.gmra.mrb[0].mxu0 %v312
      %v1623 = vpop.f32.mrb[0].mxu0
      %v1624 = vadd.f32 %v1399, %v1623
      %v1625 = vpop.f32.mrb[0].mxu0
      %1626 = vmatprep.mubr.f32.mxu0 %v441
      %1627 = vmatmul.mubr.f32.gmra.mrb[0].mxu0 %v313
      %v1628 = vpop.f32.mrb[0].mxu0
      %v1629 = vadd.f32 %v1404, %v1628
      %v1630 = vpop.f32.mrb[0].mxu0
      %1631 = vmatprep.mubr.f32.mxu0 %v444
      %1632 = vmatmul.mubr.f32.gmra.mrb[0].mxu0 %v315
      %v1633 = vpop.f32.mrb[0].mxu0
      %v1634 = vadd.f32 %v1409, %v1633
      %v1635 = vpop.f32.mrb[0].mxu0
      %1636 = vmatprep.mubr.f32.mxu0 %v446
      %1637 = vmatmul.mubr.f32.gmra.mrb[0].mxu0 %v316
      %v1638 = vpop.f32.mrb[0].mxu0
      %v1639 = vadd.f32 %v1414, %v1638
      %v1640 = vpop.f32.mrb[0].mxu0
      %1641 = vmatprep.mubr.f32.mxu0 %v449
      %1642 = vmatmul.mubr.f32.gmra.mrb[0].mxu0 %v318
      %v1643 = vpop.f32.mrb[0].mxu0
      %v1644 = vadd.f32 %v1419, %v1643
      %v1645 = vpop.f32.mrb[0].mxu0
      %1646 = vmatprep.mubr.f32.mxu0 %v451
      %1647 = vmatmul.mubr.f32.gmra.mrb[0].mxu0 %v319
      %v1648 = vpop.f32.mrb[0].mxu0
      %v1649 = vadd.f32 %v1424, %v1648
      %v1650 = vpop.f32.mrb[0].mxu0
      %1651 = vmatprep.mubr.f32.mxu0 %v454
      %1652 = vmatmul.mubr.f32.gmra.mrb[0].mxu0 %v321
      %v1653 = vpop.f32.mrb[0].mxu0
      %v1654 = vadd.f32 %v1429, %v1653
      %v1655 = vpop.f32.mrb[0].mxu0
      %1656 = vmatprep.mubr.f32.mxu0 %v456
      %1657 = vmatmul.mubr.f32.gmra.mrb[0].mxu0 %v322
      %v1658 = vpop.f32.mrb[0].mxu0
      %v1659 = vadd.f32 %v1434, %v1658
      %v1660 = vpop.f32.mrb[0].mxu0
      %1661 = vmatprep.mubr.f32.mxu0 %v459
      %1662 = vmatmul.mubr.f32.gmra.mrb[0].mxu0 %v324
      %v1663 = vpop.f32.mrb[0].mxu0
      %v1664 = vadd.f32 %v1439, %v1663
      %v1665 = vpop.f32.mrb[0].mxu0
      %1666 = vmatprep.mubr.f32.mxu0 %v461
      %1667 = vmatmul.mubr.f32.gmra.mrb[0].mxu0 %v325
      %v1668 = vpop.f32.mrb[0].mxu0
      %v1669 = vadd.f32 %v1444, %v1668
      %v1670 = vpop.f32.mrb[0].mxu0
      %1671 = vmatprep.mubr.f32.mxu0 %v612
      %1672 = vmatmul.mubr.f32.gmra.mrb[0].mxu0 %v327
      %v1673 = vpop.f32.mrb[0].mxu0
      %v1674 = vadd.f32 %v1449, %v1673
      %v1675 = vpop.f32.mrb[0].mxu0
      %1676 = vmatprep.mubr.f32.mxu0 %v614
      %1677 = vmatmul.mubr.f32.gmra.mrb[0].mxu0 %v328
      %v1678 = vpop.f32.mrb[0].mxu0
      %v1679 = vadd.f32 %v1454, %v1678
      %v1680 = vpop.f32.mrb[0].mxu0
      %1681 = vmatprep.mubr.f32.mxu0 %v629
      %1682 = vmatmul.mubr.f32.gmra.mrb[0].mxu0 %v330
      %v1683 = vpop.f32.mrb[0].mxu0
      %v1684 = vadd.f32 %v1459, %v1683
      %v1685 = vpop.f32.mrb[0].mxu0
      %1686 = vmatprep.mubr.f32.mxu0 %v631
      %1687 = vmatmul.mubr.f32.gmra.mrb[0].mxu0 %v331
      %v1688 = vpop.f32.mrb[0].mxu0
      %v1689 = vadd.f32 %v1464, %v1688
      %v1690 = vpop.f32.mrb[0].mxu0
      %1691 = vdwg.mxu0
      %1692 = vmatprep.subr.mxu0 0.0
      %1693 = vmatpush1.msra.mxu0 %v769
      %1694 = vmatprep.subr.mxu0 0.0
      %1695 = vmatpush1.msra.mxu0 %v770
      %1696 = vmatprep.subr.mxu0 0.0
      %1697 = vmatpush1.msra.mxu0 %v771
      %1698 = vmatprep.subr.mxu0 0.0
      %1699 = vmatpush1.msra.mxu0 %v772
      %1700 = vmatprep.subr.mxu0 0.0
      %1701 = vmatpush1.msra.mxu0 %v773
      %1702 = vmatprep.subr.mxu0 0.0
      %1703 = vmatpush1.msra.mxu0 %v774
      %1704 = vmatprep.subr.mxu0 0.0
      %1705 = vmatpush1.msra.mxu0 %v775
      %1706 = vmatprep.subr.mxu0 0.0
      %1707 = vmatpush1.msra.mxu0 %v776
      %1708 = vmatprep.subr.mxu0 0.0
      %1709 = vmatpush1.msra.mxu0 %v777
      %1710 = vmatprep.subr.mxu0 0.0
      %1711 = vmatpush1.msra.mxu0 %v778
      %1712 = vmatprep.subr.mxu0 0.0
      %1713 = vmatpush1.msra.mxu0 %v779
      %1714 = vmatprep.subr.mxu0 0.0
      %1715 = vmatpush1.msra.mxu0 %v780
      %1716 = vmatprep.subr.mxu0 0.0
      %1717 = vmatpush1.msra.mxu0 %v781
      %1718 = vmatprep.subr.mxu0 0.0
      %1719 = vmatpush1.msra.mxu0 %v782
      %1720 = vmatprep.subr.mxu0 0.0
      %1721 = vmatpush1.msra.mxu0 %v783
      %1722 = vmatprep.subr.mxu0 0.0
      %1723 = vmatpush1.msra.mxu0 %v784
      %1724 = vmatprep.subr.mxu0 0.0
      %1725 = vmatpush1.msra.mxu0 0.0
      %1726 = vmatprep.subr.mxu0 0.0
      %1727 = vmatpush1.msra.mxu0 0.0
      %1728 = vmatprep.subr.mxu0 0.0
      %1729 = vmatpush1.msra.mxu0 0.0
      %1730 = vmatprep.subr.mxu0 0.0
      %1731 = vmatpush1.msra.mxu0 0.0
      %1732 = vmatprep.subr.mxu0 0.0
      %1733 = vmatpush1.msra.mxu0 0.0
      %1734 = vmatprep.subr.mxu0 0.0
      %1735 = vmatpush1.msra.mxu0 0.0
      %1736 = vmatprep.subr.mxu0 0.0
      %1737 = vmatpush1.msra.mxu0 0.0
      %1738 = vmatprep.subr.mxu0 0.0
      %1739 = vmatpush1.msra.mxu0 0.0
      %1740 = vmatprep.subr.mxu0 0.0
      %1741 = vmatpush1.msra.mxu0 0.0
      %1742 = vmatprep.subr.mxu0 0.0
      %1743 = vmatpush1.msra.mxu0 0.0
      %1744 = vmatprep.subr.mxu0 0.0
      %1745 = vmatpush1.msra.mxu0 0.0
      %1746 = vmatprep.subr.mxu0 0.0
      %1747 = vmatpush1.msra.mxu0 0.0
      %1748 = vmatprep.subr.mxu0 0.0
      %1749 = vmatpush1.msra.mxu0 0.0
      %1750 = vmatprep.subr.mxu0 0.0
      %1751 = vmatpush1.msra.mxu0 0.0
      %1752 = vmatprep.subr.mxu0 0.0
      %1753 = vmatpush1.msra.mxu0 0.0
      %1754 = vmatprep.subr.mxu0 0.0
      %1755 = vmatpush1.msra.mxu0 0.0
      %1756 = vmatprep.mubr.f32.mxu0 0.0
      %1757 = vmatmul.mubr.f32.gmra.mrb[0].mxu0 %v507
      %v1758 = vpop.f32.mrb[0].mxu0
      %v1759 = vadd.f32 %v1534, %v1758
      %v1760 = vpop.f32.mrb[0].mxu0
      %1761 = vmatprep.mubr.f32.mxu0 0.0
      %1762 = vmatmul.mubr.f32.gmra.mrb[0].mxu0 %v509
      %v1763 = vpop.f32.mrb[0].mxu0
      %v1764 = vadd.f32 %v1539, %v1763
      %v1765 = vpop.f32.mrb[0].mxu0
      %1766 = vmatprep.mubr.f32.mxu0 0.0
      %1767 = vmatmul.mubr.f32.gmra.mrb[0].mxu0 %v512
      %v1768 = vpop.f32.mrb[0].mxu0
      %v1769 = vadd.f32 %v1544, %v1768
      %v1770 = vpop.f32.mrb[0].mxu0
      %1771 = vmatprep.mubr.f32.mxu0 0.0
      %1772 = vmatmul.mubr.f32.gmra.mrb[0].mxu0 %v514
      %v1773 = vpop.f32.mrb[0].mxu0
      %v1774 = vadd.f32 %v1549, %v1773
      %v1775 = vpop.f32.mrb[0].mxu0
      %1776 = vmatprep.mubr.f32.mxu0 0.0
      %1777 = vmatmul.mubr.f32.gmra.mrb[0].mxu0 %v517
      %v1778 = vpop.f32.mrb[0].mxu0
      %v1779 = vadd.f32 %v1554, %v1778
      %v1780 = vpop.f32.mrb[0].mxu0
      %1781 = vmatprep.mubr.f32.mxu0 0.0
      %1782 = vmatmul.mubr.f32.gmra.mrb[0].mxu0 %v519
      %v1783 = vpop.f32.mrb[0].mxu0
      %v1784 = vadd.f32 %v1559, %v1783
      %v1785 = vpop.f32.mrb[0].mxu0
      %1786 = vmatprep.mubr.f32.mxu0 0.0
      %1787 = vmatmul.mubr.f32.gmra.mrb[0].mxu0 %v522
      %v1788 = vpop.f32.mrb[0].mxu0
      %v1789 = vadd.f32 %v1564, %v1788
      %v1790 = vpop.f32.mrb[0].mxu0
      %1791 = vmatprep.mubr.f32.mxu0 0.0
      %1792 = vmatmul.mubr.f32.gmra.mrb[0].mxu0 %v524
      %v1793 = vpop.f32.mrb[0].mxu0
      %v1794 = vadd.f32 %v1569, %v1793
      %v1795 = vpop.f32.mrb[0].mxu0
      %1796 = vmatprep.mubr.f32.mxu0 0.0
      %1797 = vmatmul.mubr.f32.gmra.mrb[0].mxu0 %v527
      %v1798 = vpop.f32.mrb[0].mxu0
      %v1799 = vadd.f32 %v1574, %v1798
      %v1800 = vpop.f32.mrb[0].mxu0
      %1801 = vmatprep.mubr.f32.mxu0 0.0
      %1802 = vmatmul.mubr.f32.gmra.mrb[0].mxu0 %v529
      %v1803 = vpop.f32.mrb[0].mxu0
      %v1804 = vadd.f32 %v1579, %v1803
      %v1805 = vpop.f32.mrb[0].mxu0
      %1806 = vmatprep.mubr.f32.mxu0 0.0
      %1807 = vmatmul.mubr.f32.gmra.mrb[0].mxu0 %v532
      %v1808 = vpop.f32.mrb[0].mxu0
      %v1809 = vadd.f32 %v1584, %v1808
      %v1810 = vpop.f32.mrb[0].mxu0
      %1811 = vmatprep.mubr.f32.mxu0 0.0
      %1812 = vmatmul.mubr.f32.gmra.mrb[0].mxu0 %v534
      %v1813 = vpop.f32.mrb[0].mxu0
      %v1814 = vadd.f32 %v1589, %v1813
      %v1815 = vpop.f32.mrb[0].mxu0
      %1816 = vmatprep.mubr.f32.mxu0 0.0
      %1817 = vmatmul.mubr.f32.gmra.mrb[0].mxu0 %v537
      %v1818 = vpop.f32.mrb[0].mxu0
      %v1819 = vadd.f32 %v1594, %v1818
      %v1820 = vpop.f32.mrb[0].mxu0
      %1821 = vmatprep.mubr.f32.mxu0 0.0
      %1822 = vmatmul.mubr.f32.gmra.mrb[0].mxu0 %v539
      %v1823 = vpop.f32.mrb[0].mxu0
      %v1824 = vadd.f32 %v1599, %v1823
      %v1825 = vpop.f32.mrb[0].mxu0
      %1826 = vmatprep.mubr.f32.mxu0 0.0
      %1827 = vmatmul.mubr.f32.gmra.mrb[0].mxu0 %v542
      %v1828 = vpop.f32.mrb[0].mxu0
      %v1829 = vadd.f32 %v1604, %v1828
      %v1830 = vpop.f32.mrb[0].mxu0
      %1831 = vmatprep.mubr.f32.mxu0 0.0
      %1832 = vmatmul.mubr.f32.gmra.mrb[0].mxu0 %v544
      %v1833 = vpop.f32.mrb[0].mxu0
      %v1834 = vadd.f32 %v1609, %v1833
      %v1835 = vpop.f32.mrb[0].mxu0
      %1836 = vmatprep.mubr.f32.mxu0 0.0
      %1837 = vmatmul.mubr.f32.gmra.mrb[0].mxu0 %v547
      %v1838 = vpop.f32.mrb[0].mxu0
      %v1839 = vadd.f32 %v1614, %v1838
      %v1840 = vpop.f32.mrb[0].mxu0
      %1841 = vmatprep.mubr.f32.mxu0 0.0
      %1842 = vmatmul.mubr.f32.gmra.mrb[0].mxu0 %v549
      %v1843 = vpop.f32.mrb[0].mxu0
      %v1844 = vadd.f32 %v1619, %v1843
      %v1845 = vpop.f32.mrb[0].mxu0
      %1846 = vmatprep.mubr.f32.mxu0 0.0
      %1847 = vmatmul.mubr.f32.gmra.mrb[0].mxu0 %v552
      %v1848 = vpop.f32.mrb[0].mxu0
      %v1849 = vadd.f32 %v1624, %v1848
      %v1850 = vpop.f32.mrb[0].mxu0
      %1851 = vmatprep.mubr.f32.mxu0 0.0
      %1852 = vmatmul.mubr.f32.gmra.mrb[0].mxu0 %v554
      %v1853 = vpop.f32.mrb[0].mxu0
      %v1854 = vadd.f32 %v1629, %v1853
      %v1855 = vpop.f32.mrb[0].mxu0
      %1856 = vmatprep.mubr.f32.mxu0 0.0
      %1857 = vmatmul.mubr.f32.gmra.mrb[0].mxu0 %v557
      %v1858 = vpop.f32.mrb[0].mxu0
      %v1859 = vadd.f32 %v1634, %v1858
      %v1860 = vpop.f32.mrb[0].mxu0
      %1861 = vmatprep.mubr.f32.mxu0 0.0
      %1862 = vmatmul.mubr.f32.gmra.mrb[0].mxu0 %v559
      %v1863 = vpop.f32.mrb[0].mxu0
      %v1864 = vadd.f32 %v1639, %v1863
      %v1865 = vpop.f32.mrb[0].mxu0
      %1866 = vmatprep.mubr.f32.mxu0 0.0
      %1867 = vmatmul.mubr.f32.gmra.mrb[0].mxu0 %v562
      %v1868 = vpop.f32.mrb[0].mxu0
      %v1869 = vadd.f32 %v1644, %v1868
      %v1870 = vpop.f32.mrb[0].mxu0
      %1871 = vmatprep.mubr.f32.mxu0 0.0
      %1872 = vmatmul.mubr.f32.gmra.mrb[0].mxu0 %v564
      %v1873 = vpop.f32.mrb[0].mxu0
      %v1874 = vadd.f32 %v1649, %v1873
      %v1875 = vpop.f32.mrb[0].mxu0
      %1876 = vmatprep.mubr.f32.mxu0 0.0
      %1877 = vmatmul.mubr.f32.gmra.mrb[0].mxu0 %v567
      %v1878 = vpop.f32.mrb[0].mxu0
      %v1879 = vadd.f32 %v1654, %v1878
      %v1880 = vpop.f32.mrb[0].mxu0
      %1881 = vmatprep.mubr.f32.mxu0 0.0
      %1882 = vmatmul.mubr.f32.gmra.mrb[0].mxu0 %v569
      %v1883 = vpop.f32.mrb[0].mxu0
      %v1884 = vadd.f32 %v1659, %v1883
      %v1885 = vpop.f32.mrb[0].mxu0
      %1886 = vmatprep.mubr.f32.mxu0 0.0
      %1887 = vmatmul.mubr.f32.gmra.mrb[0].mxu0 %v572
      %v1888 = vpop.f32.mrb[0].mxu0
      %v1889 = vadd.f32 %v1664, %v1888
      %v1890 = vpop.f32.mrb[0].mxu0
      %1891 = vmatprep.mubr.f32.mxu0 0.0
      %1892 = vmatmul.mubr.f32.gmra.mrb[0].mxu0 %v574
      %v1893 = vpop.f32.mrb[0].mxu0
      %v1894 = vadd.f32 %v1669, %v1893
      %v1895 = vpop.f32.mrb[0].mxu0
      %1896 = vmatprep.mubr.f32.mxu0 0.0
      %1897 = vmatmul.mubr.f32.gmra.mrb[0].mxu0 %v619
      %v1898 = vpop.f32.mrb[0].mxu0
      %v1899 = vadd.f32 %v1674, %v1898
      %v1900 = vpop.f32.mrb[0].mxu0
      %1901 = vmatprep.mubr.f32.mxu0 0.0
      %1902 = vmatmul.mubr.f32.gmra.mrb[0].mxu0 %v621
      %v1903 = vpop.f32.mrb[0].mxu0
      %v1904 = vadd.f32 %v1679, %v1903
      %v1905 = vpop.f32.mrb[0].mxu0
      %1906 = vmatprep.mubr.f32.mxu0 0.0
      %1907 = vmatmul.mubr.f32.gmra.mrb[0].mxu0 %v636
      %v1908 = vpop.f32.mrb[0].mxu0
      %v1909 = vadd.f32 %v1684, %v1908
      %v1910 = vpop.f32.mrb[0].mxu0
      %1911 = vmatprep.mubr.f32.mxu0 0.0
      %1912 = vmatmul.mubr.f32.gmra.mrb[0].mxu0 %v638
      %v1913 = vpop.f32.mrb[0].mxu0
      %v1914 = vadd.f32 %v1689, %v1913
      %v1915 = vpop.f32.mrb[0].mxu0
      %1916 = vdwg.mxu0
      %v1917 = vmax.f32 %v1759, 0.0
      %v1918 = vmax.f32 %v1764, 0.0
      %v1919 = vmax.f32 %v1769, 0.0
      %v1920 = vmax.f32 %v1774, 0.0
      %v1921 = vmax.f32 %v1779, 0.0
      %v1922 = vmax.f32 %v1784, 0.0
      %v1923 = vmax.f32 %v1789, 0.0
      %v1924 = vmax.f32 %v1794, 0.0
      %v1925 = vmax.f32 %v1799, 0.0
      %v1926 = vmax.f32 %v1804, 0.0
      %v1927 = vmax.f32 %v1809, 0.0
      %v1928 = vmax.f32 %v1814, 0.0
      %v1929 = vmax.f32 %v1819, 0.0
      %v1930 = vmax.f32 %v1824, 0.0
      %v1931 = vmax.f32 %v1829, 0.0
      %v1932 = vmax.f32 %v1834, 0.0
      %v1933 = vmax.f32 %v1839, 0.0
      %v1934 = vmax.f32 %v1844, 0.0
      %v1935 = vmax.f32 %v1849, 0.0
      %v1936 = vmax.f32 %v1854, 0.0
      %v1937 = vmax.f32 %v1859, 0.0
      %v1938 = vmax.f32 %v1864, 0.0
      %v1939 = vmax.f32 %v1869, 0.0
      %v1940 = vmax.f32 %v1874, 0.0
      %v1941 = vmax.f32 %v1879, 0.0
      %v1942 = vmax.f32 %v1884, 0.0
      %v1943 = vmax.f32 %v1889, 0.0
      %v1944 = vmax.f32 %v1894, 0.0
      %v1945 = vmax.f32 %v1899, 0.0
      %v1946 = vmax.f32 %v1904, 0.0
      %v1947 = vmax.f32 %v1909, 0.0
      %v1948 = vmax.f32 %v1914, 0.0
      %1949 = vst [vmem:[#allocation2] sm:$0xff] 0.0
      %1950 = vst [vmem:[#allocation2 + $0x8] sm:$0xff] 0.0
      %1951 = vst [vmem:[#allocation2 + $0x10] sm:$0x3] 0.0
      %1952 = vst [vmem:[#allocation2 + $0x18] sm:$0xff] 0.0
      %1953 = vst [vmem:[#allocation2 + $0x20] sm:$0xff] 0.0
      %1954 = vst [vmem:[#allocation2 + $0x28] sm:$0x3] 0.0
      %1955 = vst [vmem:[#allocation2 + $0x30] sm:$0xff] 0.0
      %1956 = vst [vmem:[#allocation2 + $0x38] sm:$0xff] 0.0
      %1957 = vst [vmem:[#allocation2 + $0x40] sm:$0x3] 0.0
      %1958 = vst [vmem:[#allocation2 + $0x48] sm:$0xff] 0.0
      %1959 = vst [vmem:[#allocation2 + $0x50] sm:$0xff] 0.0
      %1960 = vst [vmem:[#allocation2 + $0x58] sm:$0x3] 0.0
      %1961 = vst [vmem:[#allocation2 + $0x60] sm:$0xff] 0.0
      %1962 = vst [vmem:[#allocation2 + $0x68] sm:$0xff] 0.0
      %1963 = vst [vmem:[#allocation2 + $0x70] sm:$0x3] 0.0
      %1964 = vst [vmem:[#allocation2 + $0x78] sm:$0xff] 0.0
      %1965 = vst [vmem:[#allocation2 + $0x80] sm:$0xff] 0.0
      %1966 = vst [vmem:[#allocation2 + $0x88] sm:$0x3] 0.0
      %1967 = vst [vmem:[#allocation2 + $0x90] sm:$0xff] 0.0
      %1968 = vst [vmem:[#allocation2 + $0x98] sm:$0xff] 0.0
      %1969 = vst [vmem:[#allocation2 + $0xa0] sm:$0x3] 0.0
      %1970 = vst [vmem:[#allocation2 + $0xa8] sm:$0xff] 0.0
      %1971 = vst [vmem:[#allocation2 + $0xb0] sm:$0xff] 0.0
      %1972 = vst [vmem:[#allocation2 + $0xb8] sm:$0x3] 0.0
      %1973 = vst [vmem:[#allocation2 + $0xc0] sm:$0xff] 0.0
      %1974 = vst [vmem:[#allocation2 + $0xc8] sm:$0xff] 0.0
      %1975 = vst [vmem:[#allocation2 + $0xd0] sm:$0x3] 0.0
      %1976 = vst [vmem:[#allocation2 + $0xd8] sm:$0xff] 0.0
      %1977 = vst [vmem:[#allocation2 + $0xe0] sm:$0xff] 0.0
      %1978 = vst [vmem:[#allocation2 + $0xe8] sm:$0x3] 0.0
      %1979 = vst [vmem:[#allocation2 + $0xf0] sm:$0xff] 0.0
      %1980 = vst [vmem:[#allocation2 + $0xf8] sm:$0xff] 0.0
      %1981 = vst [vmem:[#allocation2 + $0x100] sm:$0x3] 0.0
      %1982 = vst [vmem:[#allocation2 + $0x108] sm:$0xff] 0.0
      %1983 = vst [vmem:[#allocation2 + $0x110] sm:$0xff] 0.0
      %1984 = vst [vmem:[#allocation2 + $0x118] sm:$0x3] 0.0
      %1985 = vst [vmem:[#allocation2 + $0x120] sm:$0xff] 0.0
      %1986 = vst [vmem:[#allocation2 + $0x128] sm:$0xff] 0.0
      %1987 = vst [vmem:[#allocation2 + $0x130] sm:$0x3] 0.0
      %1988 = vst [vmem:[#allocation2 + $0x138] sm:$0xff] 0.0
      %1989 = vst [vmem:[#allocation2 + $0x140] sm:$0xff] 0.0
      %1990 = vst [vmem:[#allocation2 + $0x148] sm:$0x3] 0.0
      %1991 = vst [vmem:[#allocation2 + $0x150] sm:$0xff] 0.0
      %1992 = vst [vmem:[#allocation2 + $0x158] sm:$0xff] 0.0
      %1993 = vst [vmem:[#allocation2 + $0x160] sm:$0x3] 0.0
      %1994 = vst [vmem:[#allocation2 + $0x168] sm:$0xff] 0.0
      %1995 = vst [vmem:[#allocation2 + $0x170] sm:$0xff] 0.0
      %1996 = vst [vmem:[#allocation2 + $0x178] sm:$0x3] 0.0
      %1997 = vst [vmem:[#allocation2 + $0x180] sm:$0xff] 0.0
      %1998 = vst [vmem:[#allocation2 + $0x188] sm:$0xff] 0.0
      %1999 = vst [vmem:[#allocation2 + $0x190] sm:$0x3] 0.0
      %2000 = vst [vmem:[#allocation2 + $0x198] sm:$0xff] 0.0
      %2001 = vst [vmem:[#allocation2 + $0x1a0] sm:$0xff] 0.0
      %2002 = vst [vmem:[#allocation2 + $0x1a8] sm:$0x3] 0.0
      %s2003 = scalar_lea.vmem [#allocation2], 24
      %2004 = vst [vmem:[%s2003 + $0x1] sm:$0xff] %v1917
      %2005 = vst [vmem:[%s2003 + $0x9] sm:$0xff] %v1918
      %2006 = vst [vmem:[%s2003 + $0x19] sm:$0xff] %v1919
      %2007 = vst [vmem:[%s2003 + $0x21] sm:$0xff] %v1920
      %2008 = vst [vmem:[%s2003 + $0x31] sm:$0xff] %v1921
      %2009 = vst [vmem:[%s2003 + $0x39] sm:$0xff] %v1922
      %2010 = vst [vmem:[%s2003 + $0x49] sm:$0xff] %v1923
      %2011 = vst [vmem:[%s2003 + $0x51] sm:$0xff] %v1924
      %2012 = vst [vmem:[%s2003 + $0x61] sm:$0xff] %v1925
      %2013 = vst [vmem:[%s2003 + $0x69] sm:$0xff] %v1926
      %2014 = vst [vmem:[%s2003 + $0x79] sm:$0xff] %v1927
      %2015 = vst [vmem:[%s2003 + $0x81] sm:$0xff] %v1928
      %2016 = vst [vmem:[%s2003 + $0x91] sm:$0xff] %v1929
      %2017 = vst [vmem:[%s2003 + $0x99] sm:$0xff] %v1930
      %2018 = vst [vmem:[%s2003 + $0xa9] sm:$0xff] %v1931
      %2019 = vst [vmem:[%s2003 + $0xb1] sm:$0xff] %v1932
      %2020 = vst [vmem:[%s2003 + $0xc1] sm:$0xff] %v1933
      %2021 = vst [vmem:[%s2003 + $0xc9] sm:$0xff] %v1934
      %2022 = vst [vmem:[%s2003 + $0xd9] sm:$0xff] %v1935
      %2023 = vst [vmem:[%s2003 + $0xe1] sm:$0xff] %v1936
      %2024 = vst [vmem:[%s2003 + $0xf1] sm:$0xff] %v1937
      %2025 = vst [vmem:[%s2003 + $0xf9] sm:$0xff] %v1938
      %2026 = vst [vmem:[%s2003 + $0x109] sm:$0xff] %v1939
      %2027 = vst [vmem:[%s2003 + $0x111] sm:$0xff] %v1940
      %2028 = vst [vmem:[%s2003 + $0x121] sm:$0xff] %v1941
      %2029 = vst [vmem:[%s2003 + $0x129] sm:$0xff] %v1942
      %2030 = vst [vmem:[%s2003 + $0x139] sm:$0xff] %v1943
      %2031 = vst [vmem:[%s2003 + $0x141] sm:$0xff] %v1944
      %2032 = vst [vmem:[%s2003 + $0x151] sm:$0xff] %v1945
      %2033 = vst [vmem:[%s2003 + $0x159] sm:$0xff] %v1946
      %2034 = vst [vmem:[%s2003 + $0x169] sm:$0xff] %v1947
      %2035 = vst [vmem:[%s2003 + $0x171] sm:$0xff] %v1948
      %v2036 = vld [vmem:[#allocation2] sm:$0xff]
      %v2037 = vld [vmem:[#allocation2 + $0x8] sm:$0xff]
      %v2038 = vld [vmem:[#allocation2 + $0x10] sm:$0x3]
      %v2039 = vld [vmem:[#allocation2 + $0x18] sm:$0xff]
      %v2040 = vld [vmem:[#allocation2 + $0x20] sm:$0xff]
      %v2041 = vld [vmem:[#allocation2 + $0x28] sm:$0x3]
      %v2042 = vld [vmem:[#allocation2 + $0x30] sm:$0xff]
      %v2043 = vld [vmem:[#allocation2 + $0x38] sm:$0xff]
      %v2044 = vld [vmem:[#allocation2 + $0x40] sm:$0x3]
      %v2045 = vld [vmem:[#allocation2 + $0x48] sm:$0xff]
      %v2046 = vld [vmem:[#allocation2 + $0x50] sm:$0xff]
      %v2047 = vld [vmem:[#allocation2 + $0x58] sm:$0x3]
      %v2048 = vld [vmem:[#allocation2 + $0x60] sm:$0xff]
      %v2049 = vld [vmem:[#allocation2 + $0x68] sm:$0xff]
      %v2050 = vld [vmem:[#allocation2 + $0x70] sm:$0x3]
      %v2051 = vld [vmem:[#allocation2 + $0x78] sm:$0xff]
      %v2052 = vld [vmem:[#allocation2 + $0x80] sm:$0xff]
      %v2053 = vld [vmem:[#allocation2 + $0x88] sm:$0x3]
      %v2054 = vld [vmem:[#allocation2 + $0x90] sm:$0xff]
      %v2055 = vld [vmem:[#allocation2 + $0x98] sm:$0xff]
      %v2056 = vld [vmem:[#allocation2 + $0xa0] sm:$0x3]
      %v2057 = vld [vmem:[#allocation2 + $0xa8] sm:$0xff]
      %v2058 = vld [vmem:[#allocation2 + $0xb0] sm:$0xff]
      %v2059 = vld [vmem:[#allocation2 + $0xb8] sm:$0x3]
      %v2060 = vld [vmem:[#allocation2 + $0xc0] sm:$0xff]
      %v2061 = vld [vmem:[#allocation2 + $0xc8] sm:$0xff]
      %v2062 = vld [vmem:[#allocation2 + $0xd0] sm:$0x3]
      %v2063 = vld [vmem:[#allocation2 + $0xd8] sm:$0xff]
      %v2064 = vld [vmem:[#allocation2 + $0xe0] sm:$0xff]
      %v2065 = vld [vmem:[#allocation2 + $0xe8] sm:$0x3]
      %v2066 = vld [vmem:[#allocation2 + $0xf0] sm:$0xff]
      %v2067 = vld [vmem:[#allocation2 + $0xf8] sm:$0xff]
      %v2068 = vld [vmem:[#allocation2 + $0x100] sm:$0x3]
      %v2069 = vld [vmem:[#allocation2 + $0x108] sm:$0xff]
      %v2070 = vld [vmem:[#allocation2 + $0x110] sm:$0xff]
      %v2071 = vld [vmem:[#allocation2 + $0x118] sm:$0x3]
      %v2072 = vld [vmem:[#allocation2 + $0x120] sm:$0xff]
      %v2073 = vld [vmem:[#allocation2 + $0x128] sm:$0xff]
      %v2074 = vld [vmem:[#allocation2 + $0x130] sm:$0x3]
      %v2075 = vld [vmem:[#allocation2 + $0x138] sm:$0xff]
      %v2076 = vld [vmem:[#allocation2 + $0x140] sm:$0xff]
      %v2077 = vld [vmem:[#allocation2 + $0x148] sm:$0x3]
      %v2078 = vld [vmem:[#allocation2 + $0x150] sm:$0xff]
      %v2079 = vld [vmem:[#allocation2 + $0x158] sm:$0xff]
      %v2080 = vld [vmem:[#allocation2 + $0x160] sm:$0x3]
      %v2081 = vld [vmem:[#allocation2 + $0x168] sm:$0xff]
      %v2082 = vld [vmem:[#allocation2 + $0x170] sm:$0xff]
      %v2083 = vld [vmem:[#allocation2 + $0x178] sm:$0x3]
      %v2084 = vld [vmem:[#allocation2 + $0x180] sm:$0xff]
      %v2085 = vld [vmem:[#allocation2 + $0x188] sm:$0xff]
      %v2086 = vld [vmem:[#allocation2 + $0x190] sm:$0x3]
      %v2087 = vld [vmem:[#allocation2 + $0x198] sm:$0xff]
      %v2088 = vld [vmem:[#allocation2 + $0x1a0] sm:$0xff]
      %v2089 = vld [vmem:[#allocation2 + $0x1a8] sm:$0x3]
      %v2138 = vrot.slane %v2036, 1
      %v2139 = vrot.slane %v2037, 1
      %v2140 = vsel %vm381, %v2138, %v2139
      %v2141 = vrot.slane %v2038, 1
      %v2142 = vsel %vm381, %v2139, %v2141
      %v2143 = vrot.slane %v2039, 1
      %v2144 = vrot.slane %v2040, 1
      %v2145 = vsel %vm381, %v2143, %v2144
      %v2146 = vrot.slane %v2041, 1
      %v2147 = vsel %vm381, %v2144, %v2146
      %v2148 = vrot.slane %v2042, 1
      %v2149 = vrot.slane %v2043, 1
      %v2150 = vsel %vm381, %v2148, %v2149
      %v2151 = vrot.slane %v2044, 1
      %v2152 = vsel %vm381, %v2149, %v2151
      %v2153 = vrot.slane %v2045, 1
      %v2154 = vrot.slane %v2046, 1
      %v2155 = vsel %vm381, %v2153, %v2154
      %v2156 = vrot.slane %v2047, 1
      %v2157 = vsel %vm381, %v2154, %v2156
      %v2158 = vrot.slane %v2048, 1
      %v2159 = vrot.slane %v2049, 1
      %v2160 = vsel %vm381, %v2158, %v2159
      %v2161 = vrot.slane %v2050, 1
      %v2162 = vsel %vm381, %v2159, %v2161
      %v2163 = vrot.slane %v2051, 1
      %v2164 = vrot.slane %v2052, 1
      %v2165 = vsel %vm381, %v2163, %v2164
      %v2166 = vrot.slane %v2053, 1
      %v2167 = vsel %vm381, %v2164, %v2166
      %v2168 = vrot.slane %v2054, 1
      %v2169 = vrot.slane %v2055, 1
      %v2170 = vsel %vm381, %v2168, %v2169
      %v2171 = vrot.slane %v2056, 1
      %v2172 = vsel %vm381, %v2169, %v2171
      %v2173 = vrot.slane %v2057, 1
      %v2174 = vrot.slane %v2058, 1
      %v2175 = vsel %vm381, %v2173, %v2174
      %v2176 = vrot.slane %v2059, 1
      %v2177 = vsel %vm381, %v2174, %v2176
      %v2178 = vrot.slane %v2060, 1
      %v2179 = vrot.slane %v2061, 1
      %v2180 = vsel %vm381, %v2178, %v2179
      %v2181 = vrot.slane %v2062, 1
      %v2182 = vsel %vm381, %v2179, %v2181
      %v2183 = vrot.slane %v2063, 1
      %v2184 = vrot.slane %v2064, 1
      %v2185 = vsel %vm381, %v2183, %v2184
      %v2186 = vrot.slane %v2065, 1
      %v2187 = vsel %vm381, %v2184, %v2186
      %v2188 = vrot.slane %v2066, 1
      %v2189 = vrot.slane %v2067, 1
      %v2190 = vsel %vm381, %v2188, %v2189
      %v2191 = vrot.slane %v2068, 1
      %v2192 = vsel %vm381, %v2189, %v2191
      %v2193 = vrot.slane %v2069, 1
      %v2194 = vrot.slane %v2070, 1
      %v2195 = vsel %vm381, %v2193, %v2194
      %v2196 = vrot.slane %v2071, 1
      %v2197 = vsel %vm381, %v2194, %v2196
      %v2198 = vrot.slane %v2072, 1
      %v2199 = vrot.slane %v2073, 1
      %v2200 = vsel %vm381, %v2198, %v2199
      %v2201 = vrot.slane %v2074, 1
      %v2202 = vsel %vm381, %v2199, %v2201
      %v2203 = vrot.slane %v2075, 1
      %v2204 = vrot.slane %v2076, 1
      %v2205 = vsel %vm381, %v2203, %v2204
      %v2206 = vrot.slane %v2077, 1
      %v2207 = vsel %vm381, %v2204, %v2206
      %v2208 = vrot.slane %v2078, 1
      %v2209 = vrot.slane %v2079, 1
      %v2210 = vsel %vm381, %v2208, %v2209
      %v2211 = vrot.slane %v2080, 1
      %v2212 = vsel %vm381, %v2209, %v2211
      %v2213 = vrot.slane %v2081, 1
      %v2214 = vrot.slane %v2082, 1
      %v2215 = vsel %vm381, %v2213, %v2214
      %v2216 = vrot.slane %v2083, 1
      %v2217 = vsel %vm381, %v2214, %v2216
      %v2250 = vrot.slane %v2036, 2
      %v2251 = vrot.slane %v2037, 2
      %v2252 = vsel %vm494, %v2250, %v2251
      %v2253 = vrot.slane %v2038, 2
      %v2254 = vsel %vm494, %v2251, %v2253
      %v2255 = vrot.slane %v2039, 2
      %v2256 = vrot.slane %v2040, 2
      %v2257 = vsel %vm494, %v2255, %v2256
      %v2258 = vrot.slane %v2041, 2
      %v2259 = vsel %vm494, %v2256, %v2258
      %v2260 = vrot.slane %v2042, 2
      %v2261 = vrot.slane %v2043, 2
      %v2262 = vsel %vm494, %v2260, %v2261
      %v2263 = vrot.slane %v2044, 2
      %v2264 = vsel %vm494, %v2261, %v2263
      %v2265 = vrot.slane %v2045, 2
      %v2266 = vrot.slane %v2046, 2
      %v2267 = vsel %vm494, %v2265, %v2266
      %v2268 = vrot.slane %v2047, 2
      %v2269 = vsel %vm494, %v2266, %v2268
      %v2270 = vrot.slane %v2048, 2
      %v2271 = vrot.slane %v2049, 2
      %v2272 = vsel %vm494, %v2270, %v2271
      %v2273 = vrot.slane %v2050, 2
      %v2274 = vsel %vm494, %v2271, %v2273
      %v2275 = vrot.slane %v2051, 2
      %v2276 = vrot.slane %v2052, 2
      %v2277 = vsel %vm494, %v2275, %v2276
      %v2278 = vrot.slane %v2053, 2
      %v2279 = vsel %vm494, %v2276, %v2278
      %v2280 = vrot.slane %v2054, 2
      %v2281 = vrot.slane %v2055, 2
      %v2282 = vsel %vm494, %v2280, %v2281
      %v2283 = vrot.slane %v2056, 2
      %v2284 = vsel %vm494, %v2281, %v2283
      %v2285 = vrot.slane %v2057, 2
      %v2286 = vrot.slane %v2058, 2
      %v2287 = vsel %vm494, %v2285, %v2286
      %v2288 = vrot.slane %v2059, 2
      %v2289 = vsel %vm494, %v2286, %v2288
      %v2290 = vrot.slane %v2060, 2
      %v2291 = vrot.slane %v2061, 2
      %v2292 = vsel %vm494, %v2290, %v2291
      %v2293 = vrot.slane %v2062, 2
      %v2294 = vsel %vm494, %v2291, %v2293
      %v2295 = vrot.slane %v2063, 2
      %v2296 = vrot.slane %v2064, 2
      %v2297 = vsel %vm494, %v2295, %v2296
      %v2298 = vrot.slane %v2065, 2
      %v2299 = vsel %vm494, %v2296, %v2298
      %v2300 = vrot.slane %v2066, 2
      %v2301 = vrot.slane %v2067, 2
      %v2302 = vsel %vm494, %v2300, %v2301
      %v2303 = vrot.slane %v2068, 2
      %v2304 = vsel %vm494, %v2301, %v2303
      %v2305 = vrot.slane %v2069, 2
      %v2306 = vrot.slane %v2070, 2
      %v2307 = vsel %vm494, %v2305, %v2306
      %v2308 = vrot.slane %v2071, 2
      %v2309 = vsel %vm494, %v2306, %v2308
      %v2310 = vrot.slane %v2072, 2
      %v2311 = vrot.slane %v2073, 2
      %v2312 = vsel %vm494, %v2310, %v2311
      %v2313 = vrot.slane %v2074, 2
      %v2314 = vsel %vm494, %v2311, %v2313
      %v2315 = vrot.slane %v2075, 2
      %v2316 = vrot.slane %v2076, 2
      %v2317 = vsel %vm494, %v2315, %v2316
      %v2318 = vrot.slane %v2077, 2
      %v2319 = vsel %vm494, %v2316, %v2318
      %v2320 = vrot.slane %v2078, 2
      %v2321 = vrot.slane %v2079, 2
      %v2322 = vsel %vm494, %v2320, %v2321
      %v2323 = vrot.slane %v2080, 2
      %v2324 = vsel %vm494, %v2321, %v2323
      %v2325 = vrot.slane %v2081, 2
      %v2326 = vrot.slane %v2082, 2
      %v2327 = vsel %vm494, %v2325, %v2326
      %v2328 = vrot.slane %v2083, 2
      %v2329 = vsel %vm494, %v2326, %v2328
      %v2365 = vrot.slane %v2084, 1
      %v2366 = vrot.slane %v2085, 1
      %v2367 = vsel %vm381, %v2365, %v2366
      %v2368 = vrot.slane %v2086, 1
      %v2369 = vsel %vm381, %v2366, %v2368
      %v2372 = vrot.slane %v2084, 2
      %v2373 = vrot.slane %v2085, 2
      %v2374 = vsel %vm494, %v2372, %v2373
      %v2375 = vrot.slane %v2086, 2
      %v2376 = vsel %vm494, %v2373, %v2375
      %v2382 = vrot.slane %v2087, 1
      %v2383 = vrot.slane %v2088, 1
      %v2384 = vsel %vm381, %v2382, %v2383
      %v2385 = vrot.slane %v2089, 1
      %v2386 = vsel %vm381, %v2383, %v2385
      %v2389 = vrot.slane %v2087, 2
      %v2390 = vrot.slane %v2088, 2
      %v2391 = vsel %vm494, %v2389, %v2390
      %v2392 = vrot.slane %v2089, 2
      %v2393 = vsel %vm494, %v2390, %v2392
      %v2396 = vld [vmem:[%s3] sm:$0xff]
      %v2397 = vld [vmem:[%s3 + $0x8] sm:$0xff]
      %v2398 = vld [vmem:[%s3 + $0x10] sm:$0xff]
      %v2399 = vld [vmem:[%s3 + $0x18] sm:$0xff]
      %v2400 = vld [vmem:[%s3 + $0x20] sm:$0xff]
      %v2401 = vld [vmem:[%s3 + $0x28] sm:$0xff]
      %v2402 = vld [vmem:[%s3 + $0x30] sm:$0xff]
      %v2403 = vld [vmem:[%s3 + $0x38] sm:$0xff]
      %v2404 = vld [vmem:[%s3 + $0x40] sm:$0xff]
      %v2405 = vld [vmem:[%s3 + $0x48] sm:$0xff]
      %v2406 = vld [vmem:[%s3 + $0x50] sm:$0xff]
      %v2407 = vld [vmem:[%s3 + $0x58] sm:$0xff]
      %v2408 = vld [vmem:[%s3 + $0x60] sm:$0xff]
      %v2409 = vld [vmem:[%s3 + $0x68] sm:$0xff]
      %v2410 = vld [vmem:[%s3 + $0x70] sm:$0xff]
      %v2411 = vld [vmem:[%s3 + $0x78] sm:$0xff]
      %v2412 = vld [vmem:[%s3 + $0x80] sm:$0xff]
      %v2413 = vld [vmem:[%s3 + $0x88] sm:$0xff]
      %v2414 = vld [vmem:[%s3 + $0x90] sm:$0xff]
      %v2415 = vld [vmem:[%s3 + $0x98] sm:$0xff]
      %v2416 = vld [vmem:[%s3 + $0xa0] sm:$0xff]
      %v2417 = vld [vmem:[%s3 + $0xa8] sm:$0xff]
      %v2418 = vld [vmem:[%s3 + $0xb0] sm:$0xff]
      %v2419 = vld [vmem:[%s3 + $0xb8] sm:$0xff]
      %v2420 = vld [vmem:[%s3 + $0xc0] sm:$0xff]
      %v2421 = vld [vmem:[%s3 + $0xc8] sm:$0xff]
      %v2422 = vld [vmem:[%s3 + $0xd0] sm:$0xff]
      %v2423 = vld [vmem:[%s3 + $0xd8] sm:$0xff]
      %v2424 = vld [vmem:[%s3 + $0xe0] sm:$0xff]
      %v2425 = vld [vmem:[%s3 + $0xe8] sm:$0xff]
      %v2426 = vld [vmem:[%s3 + $0xf0] sm:$0xff]
      %v2427 = vld [vmem:[%s3 + $0xf8] sm:$0xff]
      %v2428 = vld [vmem:[%s3 + $0x100] sm:$0xff]
      %v2429 = vld [vmem:[%s3 + $0x108] sm:$0xff]
      %v2430 = vld [vmem:[%s3 + $0x110] sm:$0xff]
      %v2431 = vld [vmem:[%s3 + $0x118] sm:$0xff]
      %v2432 = vld [vmem:[%s3 + $0x120] sm:$0xff]
      %v2433 = vld [vmem:[%s3 + $0x128] sm:$0xff]
      %v2434 = vld [vmem:[%s3 + $0x130] sm:$0xff]
      %v2435 = vld [vmem:[%s3 + $0x138] sm:$0xff]
      %v2436 = vld [vmem:[%s3 + $0x140] sm:$0xff]
      %v2437 = vld [vmem:[%s3 + $0x148] sm:$0xff]
      %v2438 = vld [vmem:[%s3 + $0x150] sm:$0xff]
      %v2439 = vld [vmem:[%s3 + $0x158] sm:$0xff]
      %v2440 = vld [vmem:[%s3 + $0x160] sm:$0xff]
      %v2441 = vld [vmem:[%s3 + $0x168] sm:$0xff]
      %v2442 = vld [vmem:[%s3 + $0x170] sm:$0xff]
      %v2443 = vld [vmem:[%s3 + $0x178] sm:$0xff]
      %v2444 = vld [vmem:[%s3 + $0x180] sm:$0xff]
      %v2445 = vld [vmem:[%s3 + $0x188] sm:$0xff]
      %v2446 = vld [vmem:[%s3 + $0x190] sm:$0xff]
      %v2447 = vld [vmem:[%s3 + $0x198] sm:$0xff]
      %v2448 = vld [vmem:[%s3 + $0x1a0] sm:$0xff]
      %v2449 = vld [vmem:[%s3 + $0x1a8] sm:$0xff]
      %v2450 = vld [vmem:[%s3 + $0x1b0] sm:$0xff]
      %v2451 = vld [vmem:[%s3 + $0x1b8] sm:$0xff]
      %v2452 = vld [vmem:[%s3 + $0x1c0] sm:$0xff]
      %v2453 = vld [vmem:[%s3 + $0x1c8] sm:$0xff]
      %v2454 = vld [vmem:[%s3 + $0x1d0] sm:$0xff]
      %v2455 = vld [vmem:[%s3 + $0x1d8] sm:$0xff]
      %v2456 = vld [vmem:[%s3 + $0x1e0] sm:$0xff]
      %v2457 = vld [vmem:[%s3 + $0x1e8] sm:$0xff]
      %v2458 = vld [vmem:[%s3 + $0x1f0] sm:$0xff]
      %v2459 = vld [vmem:[%s3 + $0x1f8] sm:$0xff]
      %v2460 = vld [vmem:[%s3 + $0x200] sm:$0xff]
      %v2461 = vld [vmem:[%s3 + $0x208] sm:$0xff]
      %v2462 = vld [vmem:[%s3 + $0x210] sm:$0xff]
      %v2463 = vld [vmem:[%s3 + $0x218] sm:$0xff]
      %v2464 = vld [vmem:[%s3 + $0x220] sm:$0xff]
      %v2465 = vld [vmem:[%s3 + $0x228] sm:$0xff]
      %v2466 = vld [vmem:[%s3 + $0x230] sm:$0xff]
      %v2467 = vld [vmem:[%s3 + $0x238] sm:$0xff]
      %v2468 = vld [vmem:[%s3 + $0x240] sm:$0xff]
      %v2469 = vld [vmem:[%s3 + $0x248] sm:$0xff]
      %v2470 = vld [vmem:[%s3 + $0x250] sm:$0xff]
      %v2471 = vld [vmem:[%s3 + $0x258] sm:$0xff]
      %v2472 = vld [vmem:[%s3 + $0x260] sm:$0xff]
      %v2473 = vld [vmem:[%s3 + $0x268] sm:$0xff]
      %v2474 = vld [vmem:[%s3 + $0x270] sm:$0xff]
      %v2475 = vld [vmem:[%s3 + $0x278] sm:$0xff]
      %v2476 = vld [vmem:[%s3 + $0x280] sm:$0xff]
      %v2477 = vld [vmem:[%s3 + $0x288] sm:$0xff]
      %v2478 = vld [vmem:[%s3 + $0x290] sm:$0xff]
      %v2479 = vld [vmem:[%s3 + $0x298] sm:$0xff]
      %v2480 = vld [vmem:[%s3 + $0x2a0] sm:$0xff]
      %v2481 = vld [vmem:[%s3 + $0x2a8] sm:$0xff]
      %v2482 = vld [vmem:[%s3 + $0x2b0] sm:$0xff]
      %v2483 = vld [vmem:[%s3 + $0x2b8] sm:$0xff]
      %v2484 = vld [vmem:[%s3 + $0x2c0] sm:$0xff]
      %v2485 = vld [vmem:[%s3 + $0x2c8] sm:$0xff]
      %v2486 = vld [vmem:[%s3 + $0x2d0] sm:$0xff]
      %v2487 = vld [vmem:[%s3 + $0x2d8] sm:$0xff]
      %v2488 = vld [vmem:[%s3 + $0x2e0] sm:$0xff]
      %v2489 = vld [vmem:[%s3 + $0x2e8] sm:$0xff]
      %v2490 = vld [vmem:[%s3 + $0x2f0] sm:$0xff]
      %v2491 = vld [vmem:[%s3 + $0x2f8] sm:$0xff]
      %v2492 = vld [vmem:[%s3 + $0x300] sm:$0xff]
      %v2493 = vld [vmem:[%s3 + $0x308] sm:$0xff]
      %v2494 = vld [vmem:[%s3 + $0x310] sm:$0xff]
      %v2495 = vld [vmem:[%s3 + $0x318] sm:$0xff]
      %v2496 = vld [vmem:[%s3 + $0x320] sm:$0xff]
      %v2497 = vld [vmem:[%s3 + $0x328] sm:$0xff]
      %v2498 = vld [vmem:[%s3 + $0x330] sm:$0xff]
      %v2499 = vld [vmem:[%s3 + $0x338] sm:$0xff]
      %v2500 = vld [vmem:[%s3 + $0x340] sm:$0xff]
      %v2501 = vld [vmem:[%s3 + $0x348] sm:$0xff]
      %v2502 = vld [vmem:[%s3 + $0x350] sm:$0xff]
      %v2503 = vld [vmem:[%s3 + $0x358] sm:$0xff]
      %v2504 = vld [vmem:[%s3 + $0x360] sm:$0xff]
      %v2505 = vld [vmem:[%s3 + $0x368] sm:$0xff]
      %v2506 = vld [vmem:[%s3 + $0x370] sm:$0xff]
      %v2507 = vld [vmem:[%s3 + $0x378] sm:$0xff]
      %v2508 = vld [vmem:[%s3 + $0x380] sm:$0xff]
      %v2509 = vld [vmem:[%s3 + $0x388] sm:$0xff]
      %v2510 = vld [vmem:[%s3 + $0x390] sm:$0xff]
      %v2511 = vld [vmem:[%s3 + $0x398] sm:$0xff]
      %v2512 = vld [vmem:[%s3 + $0x3a0] sm:$0xff]
      %v2513 = vld [vmem:[%s3 + $0x3a8] sm:$0xff]
      %v2514 = vld [vmem:[%s3 + $0x3b0] sm:$0xff]
      %v2515 = vld [vmem:[%s3 + $0x3b8] sm:$0xff]
      %v2516 = vld [vmem:[%s3 + $0x3c0] sm:$0xff]
      %v2517 = vld [vmem:[%s3 + $0x3c8] sm:$0xff]
      %v2518 = vld [vmem:[%s3 + $0x3d0] sm:$0xff]
      %v2519 = vld [vmem:[%s3 + $0x3d8] sm:$0xff]
      %v2520 = vld [vmem:[%s3 + $0x3e0] sm:$0xff]
      %v2521 = vld [vmem:[%s3 + $0x3e8] sm:$0xff]
      %v2522 = vld [vmem:[%s3 + $0x3f0] sm:$0xff]
      %v2523 = vld [vmem:[%s3 + $0x3f8] sm:$0xff]
      %v2524 = vld [vmem:[%s3 + $0x400] sm:$0xff]
      %v2525 = vld [vmem:[%s3 + $0x408] sm:$0xff]
      %v2526 = vld [vmem:[%s3 + $0x410] sm:$0xff]
      %v2527 = vld [vmem:[%s3 + $0x418] sm:$0xff]
      %v2528 = vld [vmem:[%s3 + $0x420] sm:$0xff]
      %v2529 = vld [vmem:[%s3 + $0x428] sm:$0xff]
      %v2530 = vld [vmem:[%s3 + $0x430] sm:$0xff]
      %v2531 = vld [vmem:[%s3 + $0x438] sm:$0xff]
      %v2532 = vld [vmem:[%s3 + $0x440] sm:$0xff]
      %v2533 = vld [vmem:[%s3 + $0x448] sm:$0xff]
      %v2534 = vld [vmem:[%s3 + $0x450] sm:$0xff]
      %v2535 = vld [vmem:[%s3 + $0x458] sm:$0xff]
      %v2536 = vld [vmem:[%s3 + $0x460] sm:$0xff]
      %v2537 = vld [vmem:[%s3 + $0x468] sm:$0xff]
      %v2538 = vld [vmem:[%s3 + $0x470] sm:$0xff]
      %v2539 = vld [vmem:[%s3 + $0x478] sm:$0xff]
      %v2540 = vld [vmem:[%s4] sm:$0x1]
      %v2542 = vlaneseq
      %v2543 = vshrl.u32 %v2542, 7
      %v2544 = vsub.s32 0, %v2543
      %v2545 = vrot.slane %v2540, %v2544
      %2547 = vmatprep.subr.mxu0 0.0
      %2548 = vmatpush1.msra.mxu0 %v2396
      %2549 = vmatprep.subr.mxu0 0.0
      %2550 = vmatpush1.msra.mxu0 %v2397
      %2551 = vmatprep.subr.mxu0 0.0
      %2552 = vmatpush1.msra.mxu0 %v2398
      %2553 = vmatprep.subr.mxu0 0.0
      %2554 = vmatpush1.msra.mxu0 %v2399
      %2555 = vmatprep.subr.mxu0 0.0
      %2556 = vmatpush1.msra.mxu0 %v2400
      %2557 = vmatprep.subr.mxu0 0.0
      %2558 = vmatpush1.msra.mxu0 %v2401
      %2559 = vmatprep.subr.mxu0 0.0
      %2560 = vmatpush1.msra.mxu0 %v2402
      %2561 = vmatprep.subr.mxu0 0.0
      %2562 = vmatpush1.msra.mxu0 %v2403
      %2563 = vmatprep.subr.mxu0 0.0
      %2564 = vmatpush1.msra.mxu0 %v2404
      %2565 = vmatprep.subr.mxu0 0.0
      %2566 = vmatpush1.msra.mxu0 %v2405
      %2567 = vmatprep.subr.mxu0 0.0
      %2568 = vmatpush1.msra.mxu0 %v2406
      %2569 = vmatprep.subr.mxu0 0.0
      %2570 = vmatpush1.msra.mxu0 %v2407
      %2571 = vmatprep.subr.mxu0 0.0
      %2572 = vmatpush1.msra.mxu0 %v2408
      %2573 = vmatprep.subr.mxu0 0.0
      %2574 = vmatpush1.msra.mxu0 %v2409
      %2575 = vmatprep.subr.mxu0 0.0
      %2576 = vmatpush1.msra.mxu0 %v2410
      %2577 = vmatprep.subr.mxu0 0.0
      %2578 = vmatpush1.msra.mxu0 %v2411
      %2579 = vmatprep.subr.mxu0 0.0
      %2580 = vmatpush1.msra.mxu0 %v2412
      %2581 = vmatprep.subr.mxu0 0.0
      %2582 = vmatpush1.msra.mxu0 %v2413
      %2583 = vmatprep.subr.mxu0 0.0
      %2584 = vmatpush1.msra.mxu0 %v2414
      %2585 = vmatprep.subr.mxu0 0.0
      %2586 = vmatpush1.msra.mxu0 %v2415
      %2587 = vmatprep.subr.mxu0 0.0
      %2588 = vmatpush1.msra.mxu0 %v2416
      %2589 = vmatprep.subr.mxu0 0.0
      %2590 = vmatpush1.msra.mxu0 %v2417
      %2591 = vmatprep.subr.mxu0 0.0
      %2592 = vmatpush1.msra.mxu0 %v2418
      %2593 = vmatprep.subr.mxu0 0.0
      %2594 = vmatpush1.msra.mxu0 %v2419
      %2595 = vmatprep.subr.mxu0 0.0
      %2596 = vmatpush1.msra.mxu0 %v2420
      %2597 = vmatprep.subr.mxu0 0.0
      %2598 = vmatpush1.msra.mxu0 %v2421
      %2599 = vmatprep.subr.mxu0 0.0
      %2600 = vmatpush1.msra.mxu0 %v2422
      %2601 = vmatprep.subr.mxu0 0.0
      %2602 = vmatpush1.msra.mxu0 %v2423
      %2603 = vmatprep.subr.mxu0 0.0
      %2604 = vmatpush1.msra.mxu0 %v2424
      %2605 = vmatprep.subr.mxu0 0.0
      %2606 = vmatpush1.msra.mxu0 %v2425
      %2607 = vmatprep.subr.mxu0 0.0
      %2608 = vmatpush1.msra.mxu0 %v2426
      %2609 = vmatprep.subr.mxu0 0.0
      %2610 = vmatpush1.msra.mxu0 %v2427
      %2611 = vmatprep.mubr.f32.mxu0 %v2140
      %2612 = vmatmul.mubr.f32.gmra.mrb[0].mxu0 %v2036
      %v2613 = vpop.f32.mrb[0].mxu0
      %v2614 = vadd.f32 %v2545, %v2613
      %v2615 = vpop.f32.mrb[0].mxu0
      %2616 = vmatprep.mubr.f32.mxu0 %v2142
      %2617 = vmatmul.mubr.f32.gmra.mrb[0].mxu0 %v2037
      %v2618 = vpop.f32.mrb[0].mxu0
      %v2619 = vadd.f32 %v2545, %v2618
      %v2620 = vpop.f32.mrb[0].mxu0
      %2621 = vmatprep.mubr.f32.mxu0 %v2145
      %2622 = vmatmul.mubr.f32.gmra.mrb[0].mxu0 %v2039
      %v2623 = vpop.f32.mrb[0].mxu0
      %v2624 = vadd.f32 %v2545, %v2623
      %v2625 = vpop.f32.mrb[0].mxu0
      %2626 = vmatprep.mubr.f32.mxu0 %v2147
      %2627 = vmatmul.mubr.f32.gmra.mrb[0].mxu0 %v2040
      %v2628 = vpop.f32.mrb[0].mxu0
      %v2629 = vadd.f32 %v2545, %v2628
      %v2630 = vpop.f32.mrb[0].mxu0
      %2631 = vmatprep.mubr.f32.mxu0 %v2150
      %2632 = vmatmul.mubr.f32.gmra.mrb[0].mxu0 %v2042
      %v2633 = vpop.f32.mrb[0].mxu0
      %v2634 = vadd.f32 %v2545, %v2633
      %v2635 = vpop.f32.mrb[0].mxu0
      %2636 = vmatprep.mubr.f32.mxu0 %v2152
      %2637 = vmatmul.mubr.f32.gmra.mrb[0].mxu0 %v2043
      %v2638 = vpop.f32.mrb[0].mxu0
      %v2639 = vadd.f32 %v2545, %v2638
      %v2640 = vpop.f32.mrb[0].mxu0
      %2641 = vmatprep.mubr.f32.mxu0 %v2155
      %2642 = vmatmul.mubr.f32.gmra.mrb[0].mxu0 %v2045
      %v2643 = vpop.f32.mrb[0].mxu0
      %v2644 = vadd.f32 %v2545, %v2643
      %v2645 = vpop.f32.mrb[0].mxu0
      %2646 = vmatprep.mubr.f32.mxu0 %v2157
      %2647 = vmatmul.mubr.f32.gmra.mrb[0].mxu0 %v2046
      %v2648 = vpop.f32.mrb[0].mxu0
      %v2649 = vadd.f32 %v2545, %v2648
      %v2650 = vpop.f32.mrb[0].mxu0
      %2651 = vmatprep.mubr.f32.mxu0 %v2160
      %2652 = vmatmul.mubr.f32.gmra.mrb[0].mxu0 %v2048
      %v2653 = vpop.f32.mrb[0].mxu0
      %v2654 = vadd.f32 %v2545, %v2653
      %v2655 = vpop.f32.mrb[0].mxu0
      %2656 = vmatprep.mubr.f32.mxu0 %v2162
      %2657 = vmatmul.mubr.f32.gmra.mrb[0].mxu0 %v2049
      %v2658 = vpop.f32.mrb[0].mxu0
      %v2659 = vadd.f32 %v2545, %v2658
      %v2660 = vpop.f32.mrb[0].mxu0
      %2661 = vmatprep.mubr.f32.mxu0 %v2165
      %2662 = vmatmul.mubr.f32.gmra.mrb[0].mxu0 %v2051
      %v2663 = vpop.f32.mrb[0].mxu0
      %v2664 = vadd.f32 %v2545, %v2663
      %v2665 = vpop.f32.mrb[0].mxu0
      %2666 = vmatprep.mubr.f32.mxu0 %v2167
      %2667 = vmatmul.mubr.f32.gmra.mrb[0].mxu0 %v2052
      %v2668 = vpop.f32.mrb[0].mxu0
      %v2669 = vadd.f32 %v2545, %v2668
      %v2670 = vpop.f32.mrb[0].mxu0
      %2671 = vmatprep.mubr.f32.mxu0 %v2170
      %2672 = vmatmul.mubr.f32.gmra.mrb[0].mxu0 %v2054
      %v2673 = vpop.f32.mrb[0].mxu0
      %v2674 = vadd.f32 %v2545, %v2673
      %v2675 = vpop.f32.mrb[0].mxu0
      %2676 = vmatprep.mubr.f32.mxu0 %v2172
      %2677 = vmatmul.mubr.f32.gmra.mrb[0].mxu0 %v2055
      %v2678 = vpop.f32.mrb[0].mxu0
      %v2679 = vadd.f32 %v2545, %v2678
      %v2680 = vpop.f32.mrb[0].mxu0
      %2681 = vmatprep.mubr.f32.mxu0 %v2175
      %2682 = vmatmul.mubr.f32.gmra.mrb[0].mxu0 %v2057
      %v2683 = vpop.f32.mrb[0].mxu0
      %v2684 = vadd.f32 %v2545, %v2683
      %v2685 = vpop.f32.mrb[0].mxu0
      %2686 = vmatprep.mubr.f32.mxu0 %v2177
      %2687 = vmatmul.mubr.f32.gmra.mrb[0].mxu0 %v2058
      %v2688 = vpop.f32.mrb[0].mxu0
      %v2689 = vadd.f32 %v2545, %v2688
      %v2690 = vpop.f32.mrb[0].mxu0
      %2691 = vmatprep.mubr.f32.mxu0 %v2180
      %2692 = vmatmul.mubr.f32.gmra.mrb[0].mxu0 %v2060
      %v2693 = vpop.f32.mrb[0].mxu0
      %v2694 = vadd.f32 %v2545, %v2693
      %v2695 = vpop.f32.mrb[0].mxu0
      %2696 = vmatprep.mubr.f32.mxu0 %v2182
      %2697 = vmatmul.mubr.f32.gmra.mrb[0].mxu0 %v2061
      %v2698 = vpop.f32.mrb[0].mxu0
      %v2699 = vadd.f32 %v2545, %v2698
      %v2700 = vpop.f32.mrb[0].mxu0
      %2701 = vmatprep.mubr.f32.mxu0 %v2185
      %2702 = vmatmul.mubr.f32.gmra.mrb[0].mxu0 %v2063
      %v2703 = vpop.f32.mrb[0].mxu0
      %v2704 = vadd.f32 %v2545, %v2703
      %v2705 = vpop.f32.mrb[0].mxu0
      %2706 = vmatprep.mubr.f32.mxu0 %v2187
      %2707 = vmatmul.mubr.f32.gmra.mrb[0].mxu0 %v2064
      %v2708 = vpop.f32.mrb[0].mxu0
      %v2709 = vadd.f32 %v2545, %v2708
      %v2710 = vpop.f32.mrb[0].mxu0
      %2711 = vmatprep.mubr.f32.mxu0 %v2190
      %2712 = vmatmul.mubr.f32.gmra.mrb[0].mxu0 %v2066
      %v2713 = vpop.f32.mrb[0].mxu0
      %v2714 = vadd.f32 %v2545, %v2713
      %v2715 = vpop.f32.mrb[0].mxu0
      %2716 = vmatprep.mubr.f32.mxu0 %v2192
      %2717 = vmatmul.mubr.f32.gmra.mrb[0].mxu0 %v2067
      %v2718 = vpop.f32.mrb[0].mxu0
      %v2719 = vadd.f32 %v2545, %v2718
      %v2720 = vpop.f32.mrb[0].mxu0
      %2721 = vmatprep.mubr.f32.mxu0 %v2195
      %2722 = vmatmul.mubr.f32.gmra.mrb[0].mxu0 %v2069
      %v2723 = vpop.f32.mrb[0].mxu0
      %v2724 = vadd.f32 %v2545, %v2723
      %v2725 = vpop.f32.mrb[0].mxu0
      %2726 = vmatprep.mubr.f32.mxu0 %v2197
      %2727 = vmatmul.mubr.f32.gmra.mrb[0].mxu0 %v2070
      %v2728 = vpop.f32.mrb[0].mxu0
      %v2729 = vadd.f32 %v2545, %v2728
      %v2730 = vpop.f32.mrb[0].mxu0
      %2731 = vmatprep.mubr.f32.mxu0 %v2200
      %2732 = vmatmul.mubr.f32.gmra.mrb[0].mxu0 %v2072
      %v2733 = vpop.f32.mrb[0].mxu0
      %v2734 = vadd.f32 %v2545, %v2733
      %v2735 = vpop.f32.mrb[0].mxu0
      %2736 = vmatprep.mubr.f32.mxu0 %v2202
      %2737 = vmatmul.mubr.f32.gmra.mrb[0].mxu0 %v2073
      %v2738 = vpop.f32.mrb[0].mxu0
      %v2739 = vadd.f32 %v2545, %v2738
      %v2740 = vpop.f32.mrb[0].mxu0
      %2741 = vmatprep.mubr.f32.mxu0 %v2205
      %2742 = vmatmul.mubr.f32.gmra.mrb[0].mxu0 %v2075
      %v2743 = vpop.f32.mrb[0].mxu0
      %v2744 = vadd.f32 %v2545, %v2743
      %v2745 = vpop.f32.mrb[0].mxu0
      %2746 = vmatprep.mubr.f32.mxu0 %v2207
      %2747 = vmatmul.mubr.f32.gmra.mrb[0].mxu0 %v2076
      %v2748 = vpop.f32.mrb[0].mxu0
      %v2749 = vadd.f32 %v2545, %v2748
      %v2750 = vpop.f32.mrb[0].mxu0
      %2751 = vmatprep.mubr.f32.mxu0 %v2210
      %2752 = vmatmul.mubr.f32.gmra.mrb[0].mxu0 %v2078
      %v2753 = vpop.f32.mrb[0].mxu0
      %v2754 = vadd.f32 %v2545, %v2753
      %v2755 = vpop.f32.mrb[0].mxu0
      %2756 = vmatprep.mubr.f32.mxu0 %v2212
      %2757 = vmatmul.mubr.f32.gmra.mrb[0].mxu0 %v2079
      %v2758 = vpop.f32.mrb[0].mxu0
      %v2759 = vadd.f32 %v2545, %v2758
      %v2760 = vpop.f32.mrb[0].mxu0
      %2761 = vmatprep.mubr.f32.mxu0 %v2215
      %2762 = vmatmul.mubr.f32.gmra.mrb[0].mxu0 %v2081
      %v2763 = vpop.f32.mrb[0].mxu0
      %v2764 = vadd.f32 %v2545, %v2763
      %v2765 = vpop.f32.mrb[0].mxu0
      %2766 = vmatprep.mubr.f32.mxu0 %v2217
      %2767 = vmatmul.mubr.f32.gmra.mrb[0].mxu0 %v2082
      %v2768 = vpop.f32.mrb[0].mxu0
      %v2769 = vadd.f32 %v2545, %v2768
      %v2770 = vpop.f32.mrb[0].mxu0
      %2771 = vdwg.mxu0
      %2772 = vmatprep.subr.mxu0 0.0
      %2773 = vmatpush1.msra.mxu0 %v2428
      %2774 = vmatprep.subr.mxu0 0.0
      %2775 = vmatpush1.msra.mxu0 %v2429
      %2776 = vmatprep.subr.mxu0 0.0
      %2777 = vmatpush1.msra.mxu0 %v2430
      %2778 = vmatprep.subr.mxu0 0.0
      %2779 = vmatpush1.msra.mxu0 %v2431
      %2780 = vmatprep.subr.mxu0 0.0
      %2781 = vmatpush1.msra.mxu0 %v2432
      %2782 = vmatprep.subr.mxu0 0.0
      %2783 = vmatpush1.msra.mxu0 %v2433
      %2784 = vmatprep.subr.mxu0 0.0
      %2785 = vmatpush1.msra.mxu0 %v2434
      %2786 = vmatprep.subr.mxu0 0.0
      %2787 = vmatpush1.msra.mxu0 %v2435
      %2788 = vmatprep.subr.mxu0 0.0
      %2789 = vmatpush1.msra.mxu0 %v2436
      %2790 = vmatprep.subr.mxu0 0.0
      %2791 = vmatpush1.msra.mxu0 %v2437
      %2792 = vmatprep.subr.mxu0 0.0
      %2793 = vmatpush1.msra.mxu0 %v2438
      %2794 = vmatprep.subr.mxu0 0.0
      %2795 = vmatpush1.msra.mxu0 %v2439
      %2796 = vmatprep.subr.mxu0 0.0
      %2797 = vmatpush1.msra.mxu0 %v2440
      %2798 = vmatprep.subr.mxu0 0.0
      %2799 = vmatpush1.msra.mxu0 %v2441
      %2800 = vmatprep.subr.mxu0 0.0
      %2801 = vmatpush1.msra.mxu0 %v2442
      %2802 = vmatprep.subr.mxu0 0.0
      %2803 = vmatpush1.msra.mxu0 %v2443
      %2804 = vmatprep.subr.mxu0 0.0
      %2805 = vmatpush1.msra.mxu0 %v2444
      %2806 = vmatprep.subr.mxu0 0.0
      %2807 = vmatpush1.msra.mxu0 %v2445
      %2808 = vmatprep.subr.mxu0 0.0
      %2809 = vmatpush1.msra.mxu0 %v2446
      %2810 = vmatprep.subr.mxu0 0.0
      %2811 = vmatpush1.msra.mxu0 %v2447
      %2812 = vmatprep.subr.mxu0 0.0
      %2813 = vmatpush1.msra.mxu0 %v2448
      %2814 = vmatprep.subr.mxu0 0.0
      %2815 = vmatpush1.msra.mxu0 %v2449
      %2816 = vmatprep.subr.mxu0 0.0
      %2817 = vmatpush1.msra.mxu0 %v2450
      %2818 = vmatprep.subr.mxu0 0.0
      %2819 = vmatpush1.msra.mxu0 %v2451
      %2820 = vmatprep.subr.mxu0 0.0
      %2821 = vmatpush1.msra.mxu0 %v2452
      %2822 = vmatprep.subr.mxu0 0.0
      %2823 = vmatpush1.msra.mxu0 %v2453
      %2824 = vmatprep.subr.mxu0 0.0
      %2825 = vmatpush1.msra.mxu0 %v2454
      %2826 = vmatprep.subr.mxu0 0.0
      %2827 = vmatpush1.msra.mxu0 %v2455
      %2828 = vmatprep.subr.mxu0 0.0
      %2829 = vmatpush1.msra.mxu0 %v2456
      %2830 = vmatprep.subr.mxu0 0.0
      %2831 = vmatpush1.msra.mxu0 %v2457
      %2832 = vmatprep.subr.mxu0 0.0
      %2833 = vmatpush1.msra.mxu0 %v2458
      %2834 = vmatprep.subr.mxu0 0.0
      %2835 = vmatpush1.msra.mxu0 %v2459
      %2836 = vmatprep.mubr.f32.mxu0 %v2039
      %2837 = vmatmul.mubr.f32.gmra.mrb[0].mxu0 %v2252
      %v2838 = vpop.f32.mrb[0].mxu0
      %v2839 = vadd.f32 %v2614, %v2838
      %v2840 = vpop.f32.mrb[0].mxu0
      %2841 = vmatprep.mubr.f32.mxu0 %v2040
      %2842 = vmatmul.mubr.f32.gmra.mrb[0].mxu0 %v2254
      %v2843 = vpop.f32.mrb[0].mxu0
      %v2844 = vadd.f32 %v2619, %v2843
      %v2845 = vpop.f32.mrb[0].mxu0
      %2846 = vmatprep.mubr.f32.mxu0 %v2042
      %2847 = vmatmul.mubr.f32.gmra.mrb[0].mxu0 %v2257
      %v2848 = vpop.f32.mrb[0].mxu0
      %v2849 = vadd.f32 %v2624, %v2848
      %v2850 = vpop.f32.mrb[0].mxu0
      %2851 = vmatprep.mubr.f32.mxu0 %v2043
      %2852 = vmatmul.mubr.f32.gmra.mrb[0].mxu0 %v2259
      %v2853 = vpop.f32.mrb[0].mxu0
      %v2854 = vadd.f32 %v2629, %v2853
      %v2855 = vpop.f32.mrb[0].mxu0
      %2856 = vmatprep.mubr.f32.mxu0 %v2045
      %2857 = vmatmul.mubr.f32.gmra.mrb[0].mxu0 %v2262
      %v2858 = vpop.f32.mrb[0].mxu0
      %v2859 = vadd.f32 %v2634, %v2858
      %v2860 = vpop.f32.mrb[0].mxu0
      %2861 = vmatprep.mubr.f32.mxu0 %v2046
      %2862 = vmatmul.mubr.f32.gmra.mrb[0].mxu0 %v2264
      %v2863 = vpop.f32.mrb[0].mxu0
      %v2864 = vadd.f32 %v2639, %v2863
      %v2865 = vpop.f32.mrb[0].mxu0
      %2866 = vmatprep.mubr.f32.mxu0 %v2048
      %2867 = vmatmul.mubr.f32.gmra.mrb[0].mxu0 %v2267
      %v2868 = vpop.f32.mrb[0].mxu0
      %v2869 = vadd.f32 %v2644, %v2868
      %v2870 = vpop.f32.mrb[0].mxu0
      %2871 = vmatprep.mubr.f32.mxu0 %v2049
      %2872 = vmatmul.mubr.f32.gmra.mrb[0].mxu0 %v2269
      %v2873 = vpop.f32.mrb[0].mxu0
      %v2874 = vadd.f32 %v2649, %v2873
      %v2875 = vpop.f32.mrb[0].mxu0
      %2876 = vmatprep.mubr.f32.mxu0 %v2051
      %2877 = vmatmul.mubr.f32.gmra.mrb[0].mxu0 %v2272
      %v2878 = vpop.f32.mrb[0].mxu0
      %v2879 = vadd.f32 %v2654, %v2878
      %v2880 = vpop.f32.mrb[0].mxu0
      %2881 = vmatprep.mubr.f32.mxu0 %v2052
      %2882 = vmatmul.mubr.f32.gmra.mrb[0].mxu0 %v2274
      %v2883 = vpop.f32.mrb[0].mxu0
      %v2884 = vadd.f32 %v2659, %v2883
      %v2885 = vpop.f32.mrb[0].mxu0
      %2886 = vmatprep.mubr.f32.mxu0 %v2054
      %2887 = vmatmul.mubr.f32.gmra.mrb[0].mxu0 %v2277
      %v2888 = vpop.f32.mrb[0].mxu0
      %v2889 = vadd.f32 %v2664, %v2888
      %v2890 = vpop.f32.mrb[0].mxu0
      %2891 = vmatprep.mubr.f32.mxu0 %v2055
      %2892 = vmatmul.mubr.f32.gmra.mrb[0].mxu0 %v2279
      %v2893 = vpop.f32.mrb[0].mxu0
      %v2894 = vadd.f32 %v2669, %v2893
      %v2895 = vpop.f32.mrb[0].mxu0
      %2896 = vmatprep.mubr.f32.mxu0 %v2057
      %2897 = vmatmul.mubr.f32.gmra.mrb[0].mxu0 %v2282
      %v2898 = vpop.f32.mrb[0].mxu0
      %v2899 = vadd.f32 %v2674, %v2898
      %v2900 = vpop.f32.mrb[0].mxu0
      %2901 = vmatprep.mubr.f32.mxu0 %v2058
      %2902 = vmatmul.mubr.f32.gmra.mrb[0].mxu0 %v2284
      %v2903 = vpop.f32.mrb[0].mxu0
      %v2904 = vadd.f32 %v2679, %v2903
      %v2905 = vpop.f32.mrb[0].mxu0
      %2906 = vmatprep.mubr.f32.mxu0 %v2060
      %2907 = vmatmul.mubr.f32.gmra.mrb[0].mxu0 %v2287
      %v2908 = vpop.f32.mrb[0].mxu0
      %v2909 = vadd.f32 %v2684, %v2908
      %v2910 = vpop.f32.mrb[0].mxu0
      %2911 = vmatprep.mubr.f32.mxu0 %v2061
      %2912 = vmatmul.mubr.f32.gmra.mrb[0].mxu0 %v2289
      %v2913 = vpop.f32.mrb[0].mxu0
      %v2914 = vadd.f32 %v2689, %v2913
      %v2915 = vpop.f32.mrb[0].mxu0
      %2916 = vmatprep.mubr.f32.mxu0 %v2063
      %2917 = vmatmul.mubr.f32.gmra.mrb[0].mxu0 %v2292
      %v2918 = vpop.f32.mrb[0].mxu0
      %v2919 = vadd.f32 %v2694, %v2918
      %v2920 = vpop.f32.mrb[0].mxu0
      %2921 = vmatprep.mubr.f32.mxu0 %v2064
      %2922 = vmatmul.mubr.f32.gmra.mrb[0].mxu0 %v2294
      %v2923 = vpop.f32.mrb[0].mxu0
      %v2924 = vadd.f32 %v2699, %v2923
      %v2925 = vpop.f32.mrb[0].mxu0
      %2926 = vmatprep.mubr.f32.mxu0 %v2066
      %2927 = vmatmul.mubr.f32.gmra.mrb[0].mxu0 %v2297
      %v2928 = vpop.f32.mrb[0].mxu0
      %v2929 = vadd.f32 %v2704, %v2928
      %v2930 = vpop.f32.mrb[0].mxu0
      %2931 = vmatprep.mubr.f32.mxu0 %v2067
      %2932 = vmatmul.mubr.f32.gmra.mrb[0].mxu0 %v2299
      %v2933 = vpop.f32.mrb[0].mxu0
      %v2934 = vadd.f32 %v2709, %v2933
      %v2935 = vpop.f32.mrb[0].mxu0
      %2936 = vmatprep.mubr.f32.mxu0 %v2069
      %2937 = vmatmul.mubr.f32.gmra.mrb[0].mxu0 %v2302
      %v2938 = vpop.f32.mrb[0].mxu0
      %v2939 = vadd.f32 %v2714, %v2938
      %v2940 = vpop.f32.mrb[0].mxu0
      %2941 = vmatprep.mubr.f32.mxu0 %v2070
      %2942 = vmatmul.mubr.f32.gmra.mrb[0].mxu0 %v2304
      %v2943 = vpop.f32.mrb[0].mxu0
      %v2944 = vadd.f32 %v2719, %v2943
      %v2945 = vpop.f32.mrb[0].mxu0
      %2946 = vmatprep.mubr.f32.mxu0 %v2072
      %2947 = vmatmul.mubr.f32.gmra.mrb[0].mxu0 %v2307
      %v2948 = vpop.f32.mrb[0].mxu0
      %v2949 = vadd.f32 %v2724, %v2948
      %v2950 = vpop.f32.mrb[0].mxu0
      %2951 = vmatprep.mubr.f32.mxu0 %v2073
      %2952 = vmatmul.mubr.f32.gmra.mrb[0].mxu0 %v2309
      %v2953 = vpop.f32.mrb[0].mxu0
      %v2954 = vadd.f32 %v2729, %v2953
      %v2955 = vpop.f32.mrb[0].mxu0
      %2956 = vmatprep.mubr.f32.mxu0 %v2075
      %2957 = vmatmul.mubr.f32.gmra.mrb[0].mxu0 %v2312
      %v2958 = vpop.f32.mrb[0].mxu0
      %v2959 = vadd.f32 %v2734, %v2958
      %v2960 = vpop.f32.mrb[0].mxu0
      %2961 = vmatprep.mubr.f32.mxu0 %v2076
      %2962 = vmatmul.mubr.f32.gmra.mrb[0].mxu0 %v2314
      %v2963 = vpop.f32.mrb[0].mxu0
      %v2964 = vadd.f32 %v2739, %v2963
      %v2965 = vpop.f32.mrb[0].mxu0
      %2966 = vmatprep.mubr.f32.mxu0 %v2078
      %2967 = vmatmul.mubr.f32.gmra.mrb[0].mxu0 %v2317
      %v2968 = vpop.f32.mrb[0].mxu0
      %v2969 = vadd.f32 %v2744, %v2968
      %v2970 = vpop.f32.mrb[0].mxu0
      %2971 = vmatprep.mubr.f32.mxu0 %v2079
      %2972 = vmatmul.mubr.f32.gmra.mrb[0].mxu0 %v2319
      %v2973 = vpop.f32.mrb[0].mxu0
      %v2974 = vadd.f32 %v2749, %v2973
      %v2975 = vpop.f32.mrb[0].mxu0
      %2976 = vmatprep.mubr.f32.mxu0 %v2081
      %2977 = vmatmul.mubr.f32.gmra.mrb[0].mxu0 %v2322
      %v2978 = vpop.f32.mrb[0].mxu0
      %v2979 = vadd.f32 %v2754, %v2978
      %v2980 = vpop.f32.mrb[0].mxu0
      %2981 = vmatprep.mubr.f32.mxu0 %v2082
      %2982 = vmatmul.mubr.f32.gmra.mrb[0].mxu0 %v2324
      %v2983 = vpop.f32.mrb[0].mxu0
      %v2984 = vadd.f32 %v2759, %v2983
      %v2985 = vpop.f32.mrb[0].mxu0
      %2986 = vmatprep.mubr.f32.mxu0 %v2084
      %2987 = vmatmul.mubr.f32.gmra.mrb[0].mxu0 %v2327
      %v2988 = vpop.f32.mrb[0].mxu0
      %v2989 = vadd.f32 %v2764, %v2988
      %v2990 = vpop.f32.mrb[0].mxu0
      %2991 = vmatprep.mubr.f32.mxu0 %v2085
      %2992 = vmatmul.mubr.f32.gmra.mrb[0].mxu0 %v2329
      %v2993 = vpop.f32.mrb[0].mxu0
      %v2994 = vadd.f32 %v2769, %v2993
      %v2995 = vpop.f32.mrb[0].mxu0
      %2996 = vdwg.mxu0
      %2997 = vmatprep.subr.mxu0 0.0
      %2998 = vmatpush1.msra.mxu0 %v2460
      %2999 = vmatprep.subr.mxu0 0.0
      %3000 = vmatpush1.msra.mxu0 %v2461
      %3001 = vmatprep.subr.mxu0 0.0
      %3002 = vmatpush1.msra.mxu0 %v2462
      %3003 = vmatprep.subr.mxu0 0.0
      %3004 = vmatpush1.msra.mxu0 %v2463
      %3005 = vmatprep.subr.mxu0 0.0
      %3006 = vmatpush1.msra.mxu0 %v2464
      %3007 = vmatprep.subr.mxu0 0.0
      %3008 = vmatpush1.msra.mxu0 %v2465
      %3009 = vmatprep.subr.mxu0 0.0
      %3010 = vmatpush1.msra.mxu0 %v2466
      %3011 = vmatprep.subr.mxu0 0.0
      %3012 = vmatpush1.msra.mxu0 %v2467
      %3013 = vmatprep.subr.mxu0 0.0
      %3014 = vmatpush1.msra.mxu0 %v2468
      %3015 = vmatprep.subr.mxu0 0.0
      %3016 = vmatpush1.msra.mxu0 %v2469
      %3017 = vmatprep.subr.mxu0 0.0
      %3018 = vmatpush1.msra.mxu0 %v2470
      %3019 = vmatprep.subr.mxu0 0.0
      %3020 = vmatpush1.msra.mxu0 %v2471
      %3021 = vmatprep.subr.mxu0 0.0
      %3022 = vmatpush1.msra.mxu0 %v2472
      %3023 = vmatprep.subr.mxu0 0.0
      %3024 = vmatpush1.msra.mxu0 %v2473
      %3025 = vmatprep.subr.mxu0 0.0
      %3026 = vmatpush1.msra.mxu0 %v2474
      %3027 = vmatprep.subr.mxu0 0.0
      %3028 = vmatpush1.msra.mxu0 %v2475
      %3029 = vmatprep.subr.mxu0 0.0
      %3030 = vmatpush1.msra.mxu0 %v2476
      %3031 = vmatprep.subr.mxu0 0.0
      %3032 = vmatpush1.msra.mxu0 %v2477
      %3033 = vmatprep.subr.mxu0 0.0
      %3034 = vmatpush1.msra.mxu0 %v2478
      %3035 = vmatprep.subr.mxu0 0.0
      %3036 = vmatpush1.msra.mxu0 %v2479
      %3037 = vmatprep.subr.mxu0 0.0
      %3038 = vmatpush1.msra.mxu0 %v2480
      %3039 = vmatprep.subr.mxu0 0.0
      %3040 = vmatpush1.msra.mxu0 %v2481
      %3041 = vmatprep.subr.mxu0 0.0
      %3042 = vmatpush1.msra.mxu0 %v2482
      %3043 = vmatprep.subr.mxu0 0.0
      %3044 = vmatpush1.msra.mxu0 %v2483
      %3045 = vmatprep.subr.mxu0 0.0
      %3046 = vmatpush1.msra.mxu0 %v2484
      %3047 = vmatprep.subr.mxu0 0.0
      %3048 = vmatpush1.msra.mxu0 %v2485
      %3049 = vmatprep.subr.mxu0 0.0
      %3050 = vmatpush1.msra.mxu0 %v2486
      %3051 = vmatprep.subr.mxu0 0.0
      %3052 = vmatpush1.msra.mxu0 %v2487
      %3053 = vmatprep.subr.mxu0 0.0
      %3054 = vmatpush1.msra.mxu0 %v2488
      %3055 = vmatprep.subr.mxu0 0.0
      %3056 = vmatpush1.msra.mxu0 %v2489
      %3057 = vmatprep.subr.mxu0 0.0
      %3058 = vmatpush1.msra.mxu0 %v2490
      %3059 = vmatprep.subr.mxu0 0.0
      %3060 = vmatpush1.msra.mxu0 %v2491
      %3061 = vmatprep.mubr.f32.mxu0 %v2257
      %3062 = vmatmul.mubr.f32.gmra.mrb[0].mxu0 %v2145
      %v3063 = vpop.f32.mrb[0].mxu0
      %v3064 = vadd.f32 %v2839, %v3063
      %v3065 = vpop.f32.mrb[0].mxu0
      %3066 = vmatprep.mubr.f32.mxu0 %v2259
      %3067 = vmatmul.mubr.f32.gmra.mrb[0].mxu0 %v2147
      %v3068 = vpop.f32.mrb[0].mxu0
      %v3069 = vadd.f32 %v2844, %v3068
      %v3070 = vpop.f32.mrb[0].mxu0
      %3071 = vmatprep.mubr.f32.mxu0 %v2262
      %3072 = vmatmul.mubr.f32.gmra.mrb[0].mxu0 %v2150
      %v3073 = vpop.f32.mrb[0].mxu0
      %v3074 = vadd.f32 %v2849, %v3073
      %v3075 = vpop.f32.mrb[0].mxu0
      %3076 = vmatprep.mubr.f32.mxu0 %v2264
      %3077 = vmatmul.mubr.f32.gmra.mrb[0].mxu0 %v2152
      %v3078 = vpop.f32.mrb[0].mxu0
      %v3079 = vadd.f32 %v2854, %v3078
      %v3080 = vpop.f32.mrb[0].mxu0
      %3081 = vmatprep.mubr.f32.mxu0 %v2267
      %3082 = vmatmul.mubr.f32.gmra.mrb[0].mxu0 %v2155
      %v3083 = vpop.f32.mrb[0].mxu0
      %v3084 = vadd.f32 %v2859, %v3083
      %v3085 = vpop.f32.mrb[0].mxu0
      %3086 = vmatprep.mubr.f32.mxu0 %v2269
      %3087 = vmatmul.mubr.f32.gmra.mrb[0].mxu0 %v2157
      %v3088 = vpop.f32.mrb[0].mxu0
      %v3089 = vadd.f32 %v2864, %v3088
      %v3090 = vpop.f32.mrb[0].mxu0
      %3091 = vmatprep.mubr.f32.mxu0 %v2272
      %3092 = vmatmul.mubr.f32.gmra.mrb[0].mxu0 %v2160
      %v3093 = vpop.f32.mrb[0].mxu0
      %v3094 = vadd.f32 %v2869, %v3093
      %v3095 = vpop.f32.mrb[0].mxu0
      %3096 = vmatprep.mubr.f32.mxu0 %v2274
      %3097 = vmatmul.mubr.f32.gmra.mrb[0].mxu0 %v2162
      %v3098 = vpop.f32.mrb[0].mxu0
      %v3099 = vadd.f32 %v2874, %v3098
      %v3100 = vpop.f32.mrb[0].mxu0
      %3101 = vmatprep.mubr.f32.mxu0 %v2277
      %3102 = vmatmul.mubr.f32.gmra.mrb[0].mxu0 %v2165
      %v3103 = vpop.f32.mrb[0].mxu0
      %v3104 = vadd.f32 %v2879, %v3103
      %v3105 = vpop.f32.mrb[0].mxu0
      %3106 = vmatprep.mubr.f32.mxu0 %v2279
      %3107 = vmatmul.mubr.f32.gmra.mrb[0].mxu0 %v2167
      %v3108 = vpop.f32.mrb[0].mxu0
      %v3109 = vadd.f32 %v2884, %v3108
      %v3110 = vpop.f32.mrb[0].mxu0
      %3111 = vmatprep.mubr.f32.mxu0 %v2282
      %3112 = vmatmul.mubr.f32.gmra.mrb[0].mxu0 %v2170
      %v3113 = vpop.f32.mrb[0].mxu0
      %v3114 = vadd.f32 %v2889, %v3113
      %v3115 = vpop.f32.mrb[0].mxu0
      %3116 = vmatprep.mubr.f32.mxu0 %v2284
      %3117 = vmatmul.mubr.f32.gmra.mrb[0].mxu0 %v2172
      %v3118 = vpop.f32.mrb[0].mxu0
      %v3119 = vadd.f32 %v2894, %v3118
      %v3120 = vpop.f32.mrb[0].mxu0
      %3121 = vmatprep.mubr.f32.mxu0 %v2287
      %3122 = vmatmul.mubr.f32.gmra.mrb[0].mxu0 %v2175
      %v3123 = vpop.f32.mrb[0].mxu0
      %v3124 = vadd.f32 %v2899, %v3123
      %v3125 = vpop.f32.mrb[0].mxu0
      %3126 = vmatprep.mubr.f32.mxu0 %v2289
      %3127 = vmatmul.mubr.f32.gmra.mrb[0].mxu0 %v2177
      %v3128 = vpop.f32.mrb[0].mxu0
      %v3129 = vadd.f32 %v2904, %v3128
      %v3130 = vpop.f32.mrb[0].mxu0
      %3131 = vmatprep.mubr.f32.mxu0 %v2292
      %3132 = vmatmul.mubr.f32.gmra.mrb[0].mxu0 %v2180
      %v3133 = vpop.f32.mrb[0].mxu0
      %v3134 = vadd.f32 %v2909, %v3133
      %v3135 = vpop.f32.mrb[0].mxu0
      %3136 = vmatprep.mubr.f32.mxu0 %v2294
      %3137 = vmatmul.mubr.f32.gmra.mrb[0].mxu0 %v2182
      %v3138 = vpop.f32.mrb[0].mxu0
      %v3139 = vadd.f32 %v2914, %v3138
      %v3140 = vpop.f32.mrb[0].mxu0
      %3141 = vmatprep.mubr.f32.mxu0 %v2297
      %3142 = vmatmul.mubr.f32.gmra.mrb[0].mxu0 %v2185
      %v3143 = vpop.f32.mrb[0].mxu0
      %v3144 = vadd.f32 %v2919, %v3143
      %v3145 = vpop.f32.mrb[0].mxu0
      %3146 = vmatprep.mubr.f32.mxu0 %v2299
      %3147 = vmatmul.mubr.f32.gmra.mrb[0].mxu0 %v2187
      %v3148 = vpop.f32.mrb[0].mxu0
      %v3149 = vadd.f32 %v2924, %v3148
      %v3150 = vpop.f32.mrb[0].mxu0
      %3151 = vmatprep.mubr.f32.mxu0 %v2302
      %3152 = vmatmul.mubr.f32.gmra.mrb[0].mxu0 %v2190
      %v3153 = vpop.f32.mrb[0].mxu0
      %v3154 = vadd.f32 %v2929, %v3153
      %v3155 = vpop.f32.mrb[0].mxu0
      %3156 = vmatprep.mubr.f32.mxu0 %v2304
      %3157 = vmatmul.mubr.f32.gmra.mrb[0].mxu0 %v2192
      %v3158 = vpop.f32.mrb[0].mxu0
      %v3159 = vadd.f32 %v2934, %v3158
      %v3160 = vpop.f32.mrb[0].mxu0
      %3161 = vmatprep.mubr.f32.mxu0 %v2307
      %3162 = vmatmul.mubr.f32.gmra.mrb[0].mxu0 %v2195
      %v3163 = vpop.f32.mrb[0].mxu0
      %v3164 = vadd.f32 %v2939, %v3163
      %v3165 = vpop.f32.mrb[0].mxu0
      %3166 = vmatprep.mubr.f32.mxu0 %v2309
      %3167 = vmatmul.mubr.f32.gmra.mrb[0].mxu0 %v2197
      %v3168 = vpop.f32.mrb[0].mxu0
      %v3169 = vadd.f32 %v2944, %v3168
      %v3170 = vpop.f32.mrb[0].mxu0
      %3171 = vmatprep.mubr.f32.mxu0 %v2312
      %3172 = vmatmul.mubr.f32.gmra.mrb[0].mxu0 %v2200
      %v3173 = vpop.f32.mrb[0].mxu0
      %v3174 = vadd.f32 %v2949, %v3173
      %v3175 = vpop.f32.mrb[0].mxu0
      %3176 = vmatprep.mubr.f32.mxu0 %v2314
      %3177 = vmatmul.mubr.f32.gmra.mrb[0].mxu0 %v2202
      %v3178 = vpop.f32.mrb[0].mxu0
      %v3179 = vadd.f32 %v2954, %v3178
      %v3180 = vpop.f32.mrb[0].mxu0
      %3181 = vmatprep.mubr.f32.mxu0 %v2317
      %3182 = vmatmul.mubr.f32.gmra.mrb[0].mxu0 %v2205
      %v3183 = vpop.f32.mrb[0].mxu0
      %v3184 = vadd.f32 %v2959, %v3183
      %v3185 = vpop.f32.mrb[0].mxu0
      %3186 = vmatprep.mubr.f32.mxu0 %v2319
      %3187 = vmatmul.mubr.f32.gmra.mrb[0].mxu0 %v2207
      %v3188 = vpop.f32.mrb[0].mxu0
      %v3189 = vadd.f32 %v2964, %v3188
      %v3190 = vpop.f32.mrb[0].mxu0
      %3191 = vmatprep.mubr.f32.mxu0 %v2322
      %3192 = vmatmul.mubr.f32.gmra.mrb[0].mxu0 %v2210
      %v3193 = vpop.f32.mrb[0].mxu0
      %v3194 = vadd.f32 %v2969, %v3193
      %v3195 = vpop.f32.mrb[0].mxu0
      %3196 = vmatprep.mubr.f32.mxu0 %v2324
      %3197 = vmatmul.mubr.f32.gmra.mrb[0].mxu0 %v2212
      %v3198 = vpop.f32.mrb[0].mxu0
      %v3199 = vadd.f32 %v2974, %v3198
      %v3200 = vpop.f32.mrb[0].mxu0
      %3201 = vmatprep.mubr.f32.mxu0 %v2327
      %3202 = vmatmul.mubr.f32.gmra.mrb[0].mxu0 %v2215
      %v3203 = vpop.f32.mrb[0].mxu0
      %v3204 = vadd.f32 %v2979, %v3203
      %v3205 = vpop.f32.mrb[0].mxu0
      %3206 = vmatprep.mubr.f32.mxu0 %v2329
      %3207 = vmatmul.mubr.f32.gmra.mrb[0].mxu0 %v2217
      %v3208 = vpop.f32.mrb[0].mxu0
      %v3209 = vadd.f32 %v2984, %v3208
      %v3210 = vpop.f32.mrb[0].mxu0
      %3211 = vmatprep.mubr.f32.mxu0 %v2374
      %3212 = vmatmul.mubr.f32.gmra.mrb[0].mxu0 %v2367
      %v3213 = vpop.f32.mrb[0].mxu0
      %v3214 = vadd.f32 %v2989, %v3213
      %v3215 = vpop.f32.mrb[0].mxu0
      %3216 = vmatprep.mubr.f32.mxu0 %v2376
      %3217 = vmatmul.mubr.f32.gmra.mrb[0].mxu0 %v2369
      %v3218 = vpop.f32.mrb[0].mxu0
      %v3219 = vadd.f32 %v2994, %v3218
      %v3220 = vpop.f32.mrb[0].mxu0
      %3221 = vdwg.mxu0
      %3222 = vmatprep.subr.mxu0 0.0
      %3223 = vmatpush1.msra.mxu0 %v2492
      %3224 = vmatprep.subr.mxu0 0.0
      %3225 = vmatpush1.msra.mxu0 %v2493
      %3226 = vmatprep.subr.mxu0 0.0
      %3227 = vmatpush1.msra.mxu0 %v2494
      %3228 = vmatprep.subr.mxu0 0.0
      %3229 = vmatpush1.msra.mxu0 %v2495
      %3230 = vmatprep.subr.mxu0 0.0
      %3231 = vmatpush1.msra.mxu0 %v2496
      %3232 = vmatprep.subr.mxu0 0.0
      %3233 = vmatpush1.msra.mxu0 %v2497
      %3234 = vmatprep.subr.mxu0 0.0
      %3235 = vmatpush1.msra.mxu0 %v2498
      %3236 = vmatprep.subr.mxu0 0.0
      %3237 = vmatpush1.msra.mxu0 %v2499
      %3238 = vmatprep.subr.mxu0 0.0
      %3239 = vmatpush1.msra.mxu0 %v2500
      %3240 = vmatprep.subr.mxu0 0.0
      %3241 = vmatpush1.msra.mxu0 %v2501
      %3242 = vmatprep.subr.mxu0 0.0
      %3243 = vmatpush1.msra.mxu0 %v2502
      %3244 = vmatprep.subr.mxu0 0.0
      %3245 = vmatpush1.msra.mxu0 %v2503
      %3246 = vmatprep.subr.mxu0 0.0
      %3247 = vmatpush1.msra.mxu0 %v2504
      %3248 = vmatprep.subr.mxu0 0.0
      %3249 = vmatpush1.msra.mxu0 %v2505
      %3250 = vmatprep.subr.mxu0 0.0
      %3251 = vmatpush1.msra.mxu0 %v2506
      %3252 = vmatprep.subr.mxu0 0.0
      %3253 = vmatpush1.msra.mxu0 %v2507
      %3254 = vmatprep.subr.mxu0 0.0
      %3255 = vmatpush1.msra.mxu0 %v2508
      %3256 = vmatprep.subr.mxu0 0.0
      %3257 = vmatpush1.msra.mxu0 %v2509
      %3258 = vmatprep.subr.mxu0 0.0
      %3259 = vmatpush1.msra.mxu0 %v2510
      %3260 = vmatprep.subr.mxu0 0.0
      %3261 = vmatpush1.msra.mxu0 %v2511
      %3262 = vmatprep.subr.mxu0 0.0
      %3263 = vmatpush1.msra.mxu0 %v2512
      %3264 = vmatprep.subr.mxu0 0.0
      %3265 = vmatpush1.msra.mxu0 %v2513
      %3266 = vmatprep.subr.mxu0 0.0
      %3267 = vmatpush1.msra.mxu0 %v2514
      %3268 = vmatprep.subr.mxu0 0.0
      %3269 = vmatpush1.msra.mxu0 %v2515
      %3270 = vmatprep.subr.mxu0 0.0
      %3271 = vmatpush1.msra.mxu0 %v2516
      %3272 = vmatprep.subr.mxu0 0.0
      %3273 = vmatpush1.msra.mxu0 %v2517
      %3274 = vmatprep.subr.mxu0 0.0
      %3275 = vmatpush1.msra.mxu0 %v2518
      %3276 = vmatprep.subr.mxu0 0.0
      %3277 = vmatpush1.msra.mxu0 %v2519
      %3278 = vmatprep.subr.mxu0 0.0
      %3279 = vmatpush1.msra.mxu0 %v2520
      %3280 = vmatprep.subr.mxu0 0.0
      %3281 = vmatpush1.msra.mxu0 %v2521
      %3282 = vmatprep.subr.mxu0 0.0
      %3283 = vmatpush1.msra.mxu0 %v2522
      %3284 = vmatprep.subr.mxu0 0.0
      %3285 = vmatpush1.msra.mxu0 %v2523
      %3286 = vmatprep.mubr.f32.mxu0 %v2150
      %3287 = vmatmul.mubr.f32.gmra.mrb[0].mxu0 %v2042
      %v3288 = vpop.f32.mrb[0].mxu0
      %v3289 = vadd.f32 %v3064, %v3288
      %v3290 = vpop.f32.mrb[0].mxu0
      %3291 = vmatprep.mubr.f32.mxu0 %v2152
      %3292 = vmatmul.mubr.f32.gmra.mrb[0].mxu0 %v2043
      %v3293 = vpop.f32.mrb[0].mxu0
      %v3294 = vadd.f32 %v3069, %v3293
      %v3295 = vpop.f32.mrb[0].mxu0
      %3296 = vmatprep.mubr.f32.mxu0 %v2155
      %3297 = vmatmul.mubr.f32.gmra.mrb[0].mxu0 %v2045
      %v3298 = vpop.f32.mrb[0].mxu0
      %v3299 = vadd.f32 %v3074, %v3298
      %v3300 = vpop.f32.mrb[0].mxu0
      %3301 = vmatprep.mubr.f32.mxu0 %v2157
      %3302 = vmatmul.mubr.f32.gmra.mrb[0].mxu0 %v2046
      %v3303 = vpop.f32.mrb[0].mxu0
      %v3304 = vadd.f32 %v3079, %v3303
      %v3305 = vpop.f32.mrb[0].mxu0
      %3306 = vmatprep.mubr.f32.mxu0 %v2160
      %3307 = vmatmul.mubr.f32.gmra.mrb[0].mxu0 %v2048
      %v3308 = vpop.f32.mrb[0].mxu0
      %v3309 = vadd.f32 %v3084, %v3308
      %v3310 = vpop.f32.mrb[0].mxu0
      %3311 = vmatprep.mubr.f32.mxu0 %v2162
      %3312 = vmatmul.mubr.f32.gmra.mrb[0].mxu0 %v2049
      %v3313 = vpop.f32.mrb[0].mxu0
      %v3314 = vadd.f32 %v3089, %v3313
      %v3315 = vpop.f32.mrb[0].mxu0
      %3316 = vmatprep.mubr.f32.mxu0 %v2165
      %3317 = vmatmul.mubr.f32.gmra.mrb[0].mxu0 %v2051
      %v3318 = vpop.f32.mrb[0].mxu0
      %v3319 = vadd.f32 %v3094, %v3318
      %v3320 = vpop.f32.mrb[0].mxu0
      %3321 = vmatprep.mubr.f32.mxu0 %v2167
      %3322 = vmatmul.mubr.f32.gmra.mrb[0].mxu0 %v2052
      %v3323 = vpop.f32.mrb[0].mxu0
      %v3324 = vadd.f32 %v3099, %v3323
      %v3325 = vpop.f32.mrb[0].mxu0
      %3326 = vmatprep.mubr.f32.mxu0 %v2170
      %3327 = vmatmul.mubr.f32.gmra.mrb[0].mxu0 %v2054
      %v3328 = vpop.f32.mrb[0].mxu0
      %v3329 = vadd.f32 %v3104, %v3328
      %v3330 = vpop.f32.mrb[0].mxu0
      %3331 = vmatprep.mubr.f32.mxu0 %v2172
      %3332 = vmatmul.mubr.f32.gmra.mrb[0].mxu0 %v2055
      %v3333 = vpop.f32.mrb[0].mxu0
      %v3334 = vadd.f32 %v3109, %v3333
      %v3335 = vpop.f32.mrb[0].mxu0
      %3336 = vmatprep.mubr.f32.mxu0 %v2175
      %3337 = vmatmul.mubr.f32.gmra.mrb[0].mxu0 %v2057
      %v3338 = vpop.f32.mrb[0].mxu0
      %v3339 = vadd.f32 %v3114, %v3338
      %v3340 = vpop.f32.mrb[0].mxu0
      %3341 = vmatprep.mubr.f32.mxu0 %v2177
      %3342 = vmatmul.mubr.f32.gmra.mrb[0].mxu0 %v2058
      %v3343 = vpop.f32.mrb[0].mxu0
      %v3344 = vadd.f32 %v3119, %v3343
      %v3345 = vpop.f32.mrb[0].mxu0
      %3346 = vmatprep.mubr.f32.mxu0 %v2180
      %3347 = vmatmul.mubr.f32.gmra.mrb[0].mxu0 %v2060
      %v3348 = vpop.f32.mrb[0].mxu0
      %v3349 = vadd.f32 %v3124, %v3348
      %v3350 = vpop.f32.mrb[0].mxu0
      %3351 = vmatprep.mubr.f32.mxu0 %v2182
      %3352 = vmatmul.mubr.f32.gmra.mrb[0].mxu0 %v2061
      %v3353 = vpop.f32.mrb[0].mxu0
      %v3354 = vadd.f32 %v3129, %v3353
      %v3355 = vpop.f32.mrb[0].mxu0
      %3356 = vmatprep.mubr.f32.mxu0 %v2185
      %3357 = vmatmul.mubr.f32.gmra.mrb[0].mxu0 %v2063
      %v3358 = vpop.f32.mrb[0].mxu0
      %v3359 = vadd.f32 %v3134, %v3358
      %v3360 = vpop.f32.mrb[0].mxu0
      %3361 = vmatprep.mubr.f32.mxu0 %v2187
      %3362 = vmatmul.mubr.f32.gmra.mrb[0].mxu0 %v2064
      %v3363 = vpop.f32.mrb[0].mxu0
      %v3364 = vadd.f32 %v3139, %v3363
      %v3365 = vpop.f32.mrb[0].mxu0
      %3366 = vmatprep.mubr.f32.mxu0 %v2190
      %3367 = vmatmul.mubr.f32.gmra.mrb[0].mxu0 %v2066
      %v3368 = vpop.f32.mrb[0].mxu0
      %v3369 = vadd.f32 %v3144, %v3368
      %v3370 = vpop.f32.mrb[0].mxu0
      %3371 = vmatprep.mubr.f32.mxu0 %v2192
      %3372 = vmatmul.mubr.f32.gmra.mrb[0].mxu0 %v2067
      %v3373 = vpop.f32.mrb[0].mxu0
      %v3374 = vadd.f32 %v3149, %v3373
      %v3375 = vpop.f32.mrb[0].mxu0
      %3376 = vmatprep.mubr.f32.mxu0 %v2195
      %3377 = vmatmul.mubr.f32.gmra.mrb[0].mxu0 %v2069
      %v3378 = vpop.f32.mrb[0].mxu0
      %v3379 = vadd.f32 %v3154, %v3378
      %v3380 = vpop.f32.mrb[0].mxu0
      %3381 = vmatprep.mubr.f32.mxu0 %v2197
      %3382 = vmatmul.mubr.f32.gmra.mrb[0].mxu0 %v2070
      %v3383 = vpop.f32.mrb[0].mxu0
      %v3384 = vadd.f32 %v3159, %v3383
      %v3385 = vpop.f32.mrb[0].mxu0
      %3386 = vmatprep.mubr.f32.mxu0 %v2200
      %3387 = vmatmul.mubr.f32.gmra.mrb[0].mxu0 %v2072
      %v3388 = vpop.f32.mrb[0].mxu0
      %v3389 = vadd.f32 %v3164, %v3388
      %v3390 = vpop.f32.mrb[0].mxu0
      %3391 = vmatprep.mubr.f32.mxu0 %v2202
      %3392 = vmatmul.mubr.f32.gmra.mrb[0].mxu0 %v2073
      %v3393 = vpop.f32.mrb[0].mxu0
      %v3394 = vadd.f32 %v3169, %v3393
      %v3395 = vpop.f32.mrb[0].mxu0
      %3396 = vmatprep.mubr.f32.mxu0 %v2205
      %3397 = vmatmul.mubr.f32.gmra.mrb[0].mxu0 %v2075
      %v3398 = vpop.f32.mrb[0].mxu0
      %v3399 = vadd.f32 %v3174, %v3398
      %v3400 = vpop.f32.mrb[0].mxu0
      %3401 = vmatprep.mubr.f32.mxu0 %v2207
      %3402 = vmatmul.mubr.f32.gmra.mrb[0].mxu0 %v2076
      %v3403 = vpop.f32.mrb[0].mxu0
      %v3404 = vadd.f32 %v3179, %v3403
      %v3405 = vpop.f32.mrb[0].mxu0
      %3406 = vmatprep.mubr.f32.mxu0 %v2210
      %3407 = vmatmul.mubr.f32.gmra.mrb[0].mxu0 %v2078
      %v3408 = vpop.f32.mrb[0].mxu0
      %v3409 = vadd.f32 %v3184, %v3408
      %v3410 = vpop.f32.mrb[0].mxu0
      %3411 = vmatprep.mubr.f32.mxu0 %v2212
      %3412 = vmatmul.mubr.f32.gmra.mrb[0].mxu0 %v2079
      %v3413 = vpop.f32.mrb[0].mxu0
      %v3414 = vadd.f32 %v3189, %v3413
      %v3415 = vpop.f32.mrb[0].mxu0
      %3416 = vmatprep.mubr.f32.mxu0 %v2215
      %3417 = vmatmul.mubr.f32.gmra.mrb[0].mxu0 %v2081
      %v3418 = vpop.f32.mrb[0].mxu0
      %v3419 = vadd.f32 %v3194, %v3418
      %v3420 = vpop.f32.mrb[0].mxu0
      %3421 = vmatprep.mubr.f32.mxu0 %v2217
      %3422 = vmatmul.mubr.f32.gmra.mrb[0].mxu0 %v2082
      %v3423 = vpop.f32.mrb[0].mxu0
      %v3424 = vadd.f32 %v3199, %v3423
      %v3425 = vpop.f32.mrb[0].mxu0
      %3426 = vmatprep.mubr.f32.mxu0 %v2367
      %3427 = vmatmul.mubr.f32.gmra.mrb[0].mxu0 %v2084
      %v3428 = vpop.f32.mrb[0].mxu0
      %v3429 = vadd.f32 %v3204, %v3428
      %v3430 = vpop.f32.mrb[0].mxu0
      %3431 = vmatprep.mubr.f32.mxu0 %v2369
      %3432 = vmatmul.mubr.f32.gmra.mrb[0].mxu0 %v2085
      %v3433 = vpop.f32.mrb[0].mxu0
      %v3434 = vadd.f32 %v3209, %v3433
      %v3435 = vpop.f32.mrb[0].mxu0
      %3436 = vmatprep.mubr.f32.mxu0 %v2384
      %3437 = vmatmul.mubr.f32.gmra.mrb[0].mxu0 %v2087
      %v3438 = vpop.f32.mrb[0].mxu0
      %v3439 = vadd.f32 %v3214, %v3438
      %v3440 = vpop.f32.mrb[0].mxu0
      %3441 = vmatprep.mubr.f32.mxu0 %v2386
      %3442 = vmatmul.mubr.f32.gmra.mrb[0].mxu0 %v2088
      %v3443 = vpop.f32.mrb[0].mxu0
      %v3444 = vadd.f32 %v3219, %v3443
      %v3445 = vpop.f32.mrb[0].mxu0
      %3446 = vdwg.mxu0
      %3447 = vmatprep.subr.mxu0 0.0
      %3448 = vmatpush1.msra.mxu0 %v2524
      %3449 = vmatprep.subr.mxu0 0.0
      %3450 = vmatpush1.msra.mxu0 %v2525
      %3451 = vmatprep.subr.mxu0 0.0
      %3452 = vmatpush1.msra.mxu0 %v2526
      %3453 = vmatprep.subr.mxu0 0.0
      %3454 = vmatpush1.msra.mxu0 %v2527
      %3455 = vmatprep.subr.mxu0 0.0
      %3456 = vmatpush1.msra.mxu0 %v2528
      %3457 = vmatprep.subr.mxu0 0.0
      %3458 = vmatpush1.msra.mxu0 %v2529
      %3459 = vmatprep.subr.mxu0 0.0
      %3460 = vmatpush1.msra.mxu0 %v2530
      %3461 = vmatprep.subr.mxu0 0.0
      %3462 = vmatpush1.msra.mxu0 %v2531
      %3463 = vmatprep.subr.mxu0 0.0
      %3464 = vmatpush1.msra.mxu0 %v2532
      %3465 = vmatprep.subr.mxu0 0.0
      %3466 = vmatpush1.msra.mxu0 %v2533
      %3467 = vmatprep.subr.mxu0 0.0
      %3468 = vmatpush1.msra.mxu0 %v2534
      %3469 = vmatprep.subr.mxu0 0.0
      %3470 = vmatpush1.msra.mxu0 %v2535
      %3471 = vmatprep.subr.mxu0 0.0
      %3472 = vmatpush1.msra.mxu0 %v2536
      %3473 = vmatprep.subr.mxu0 0.0
      %3474 = vmatpush1.msra.mxu0 %v2537
      %3475 = vmatprep.subr.mxu0 0.0
      %3476 = vmatpush1.msra.mxu0 %v2538
      %3477 = vmatprep.subr.mxu0 0.0
      %3478 = vmatpush1.msra.mxu0 %v2539
      %3479 = vmatprep.subr.mxu0 0.0
      %3480 = vmatpush1.msra.mxu0 0.0
      %3481 = vmatprep.subr.mxu0 0.0
      %3482 = vmatpush1.msra.mxu0 0.0
      %3483 = vmatprep.subr.mxu0 0.0
      %3484 = vmatpush1.msra.mxu0 0.0
      %3485 = vmatprep.subr.mxu0 0.0
      %3486 = vmatpush1.msra.mxu0 0.0
      %3487 = vmatprep.subr.mxu0 0.0
      %3488 = vmatpush1.msra.mxu0 0.0
      %3489 = vmatprep.subr.mxu0 0.0
      %3490 = vmatpush1.msra.mxu0 0.0
      %3491 = vmatprep.subr.mxu0 0.0
      %3492 = vmatpush1.msra.mxu0 0.0
      %3493 = vmatprep.subr.mxu0 0.0
      %3494 = vmatpush1.msra.mxu0 0.0
      %3495 = vmatprep.subr.mxu0 0.0
      %3496 = vmatpush1.msra.mxu0 0.0
      %3497 = vmatprep.subr.mxu0 0.0
      %3498 = vmatpush1.msra.mxu0 0.0
      %3499 = vmatprep.subr.mxu0 0.0
      %3500 = vmatpush1.msra.mxu0 0.0
      %3501 = vmatprep.subr.mxu0 0.0
      %3502 = vmatpush1.msra.mxu0 0.0
      %3503 = vmatprep.subr.mxu0 0.0
      %3504 = vmatpush1.msra.mxu0 0.0
      %3505 = vmatprep.subr.mxu0 0.0
      %3506 = vmatpush1.msra.mxu0 0.0
      %3507 = vmatprep.subr.mxu0 0.0
      %3508 = vmatpush1.msra.mxu0 0.0
      %3509 = vmatprep.subr.mxu0 0.0
      %3510 = vmatpush1.msra.mxu0 0.0
      %3511 = vmatprep.mubr.f32.mxu0 0.0
      %3512 = vmatmul.mubr.f32.gmra.mrb[0].mxu0 %v2262
      %v3513 = vpop.f32.mrb[0].mxu0
      %v3514 = vadd.f32 %v3289, %v3513
      %v3515 = vpop.f32.mrb[0].mxu0
      %3516 = vmatprep.mubr.f32.mxu0 0.0
      %3517 = vmatmul.mubr.f32.gmra.mrb[0].mxu0 %v2264
      %v3518 = vpop.f32.mrb[0].mxu0
      %v3519 = vadd.f32 %v3294, %v3518
      %v3520 = vpop.f32.mrb[0].mxu0
      %3521 = vmatprep.mubr.f32.mxu0 0.0
      %3522 = vmatmul.mubr.f32.gmra.mrb[0].mxu0 %v2267
      %v3523 = vpop.f32.mrb[0].mxu0
      %v3524 = vadd.f32 %v3299, %v3523
      %v3525 = vpop.f32.mrb[0].mxu0
      %3526 = vmatprep.mubr.f32.mxu0 0.0
      %3527 = vmatmul.mubr.f32.gmra.mrb[0].mxu0 %v2269
      %v3528 = vpop.f32.mrb[0].mxu0
      %v3529 = vadd.f32 %v3304, %v3528
      %v3530 = vpop.f32.mrb[0].mxu0
      %3531 = vmatprep.mubr.f32.mxu0 0.0
      %3532 = vmatmul.mubr.f32.gmra.mrb[0].mxu0 %v2272
      %v3533 = vpop.f32.mrb[0].mxu0
      %v3534 = vadd.f32 %v3309, %v3533
      %v3535 = vpop.f32.mrb[0].mxu0
      %3536 = vmatprep.mubr.f32.mxu0 0.0
      %3537 = vmatmul.mubr.f32.gmra.mrb[0].mxu0 %v2274
      %v3538 = vpop.f32.mrb[0].mxu0
      %v3539 = vadd.f32 %v3314, %v3538
      %v3540 = vpop.f32.mrb[0].mxu0
      %3541 = vmatprep.mubr.f32.mxu0 0.0
      %3542 = vmatmul.mubr.f32.gmra.mrb[0].mxu0 %v2277
      %v3543 = vpop.f32.mrb[0].mxu0
      %v3544 = vadd.f32 %v3319, %v3543
      %v3545 = vpop.f32.mrb[0].mxu0
      %3546 = vmatprep.mubr.f32.mxu0 0.0
      %3547 = vmatmul.mubr.f32.gmra.mrb[0].mxu0 %v2279
      %v3548 = vpop.f32.mrb[0].mxu0
      %v3549 = vadd.f32 %v3324, %v3548
      %v3550 = vpop.f32.mrb[0].mxu0
      %3551 = vmatprep.mubr.f32.mxu0 0.0
      %3552 = vmatmul.mubr.f32.gmra.mrb[0].mxu0 %v2282
      %v3553 = vpop.f32.mrb[0].mxu0
      %v3554 = vadd.f32 %v3329, %v3553
      %v3555 = vpop.f32.mrb[0].mxu0
      %3556 = vmatprep.mubr.f32.mxu0 0.0
      %3557 = vmatmul.mubr.f32.gmra.mrb[0].mxu0 %v2284
      %v3558 = vpop.f32.mrb[0].mxu0
      %v3559 = vadd.f32 %v3334, %v3558
      %v3560 = vpop.f32.mrb[0].mxu0
      %3561 = vmatprep.mubr.f32.mxu0 0.0
      %3562 = vmatmul.mubr.f32.gmra.mrb[0].mxu0 %v2287
      %v3563 = vpop.f32.mrb[0].mxu0
      %v3564 = vadd.f32 %v3339, %v3563
      %v3565 = vpop.f32.mrb[0].mxu0
      %3566 = vmatprep.mubr.f32.mxu0 0.0
      %3567 = vmatmul.mubr.f32.gmra.mrb[0].mxu0 %v2289
      %v3568 = vpop.f32.mrb[0].mxu0
      %v3569 = vadd.f32 %v3344, %v3568
      %v3570 = vpop.f32.mrb[0].mxu0
      %3571 = vmatprep.mubr.f32.mxu0 0.0
      %3572 = vmatmul.mubr.f32.gmra.mrb[0].mxu0 %v2292
      %v3573 = vpop.f32.mrb[0].mxu0
      %v3574 = vadd.f32 %v3349, %v3573
      %v3575 = vpop.f32.mrb[0].mxu0
      %3576 = vmatprep.mubr.f32.mxu0 0.0
      %3577 = vmatmul.mubr.f32.gmra.mrb[0].mxu0 %v2294
      %v3578 = vpop.f32.mrb[0].mxu0
      %v3579 = vadd.f32 %v3354, %v3578
      %v3580 = vpop.f32.mrb[0].mxu0
      %3581 = vmatprep.mubr.f32.mxu0 0.0
      %3582 = vmatmul.mubr.f32.gmra.mrb[0].mxu0 %v2297
      %v3583 = vpop.f32.mrb[0].mxu0
      %v3584 = vadd.f32 %v3359, %v3583
      %v3585 = vpop.f32.mrb[0].mxu0
      %3586 = vmatprep.mubr.f32.mxu0 0.0
      %3587 = vmatmul.mubr.f32.gmra.mrb[0].mxu0 %v2299
      %v3588 = vpop.f32.mrb[0].mxu0
      %v3589 = vadd.f32 %v3364, %v3588
      %v3590 = vpop.f32.mrb[0].mxu0
      %3591 = vmatprep.mubr.f32.mxu0 0.0
      %3592 = vmatmul.mubr.f32.gmra.mrb[0].mxu0 %v2302
      %v3593 = vpop.f32.mrb[0].mxu0
      %v3594 = vadd.f32 %v3369, %v3593
      %v3595 = vpop.f32.mrb[0].mxu0
      %3596 = vmatprep.mubr.f32.mxu0 0.0
      %3597 = vmatmul.mubr.f32.gmra.mrb[0].mxu0 %v2304
      %v3598 = vpop.f32.mrb[0].mxu0
      %v3599 = vadd.f32 %v3374, %v3598
      %v3600 = vpop.f32.mrb[0].mxu0
      %3601 = vmatprep.mubr.f32.mxu0 0.0
      %3602 = vmatmul.mubr.f32.gmra.mrb[0].mxu0 %v2307
      %v3603 = vpop.f32.mrb[0].mxu0
      %v3604 = vadd.f32 %v3379, %v3603
      %v3605 = vpop.f32.mrb[0].mxu0
      %3606 = vmatprep.mubr.f32.mxu0 0.0
      %3607 = vmatmul.mubr.f32.gmra.mrb[0].mxu0 %v2309
      %v3608 = vpop.f32.mrb[0].mxu0
      %v3609 = vadd.f32 %v3384, %v3608
      %v3610 = vpop.f32.mrb[0].mxu0
      %3611 = vmatprep.mubr.f32.mxu0 0.0
      %3612 = vmatmul.mubr.f32.gmra.mrb[0].mxu0 %v2312
      %v3613 = vpop.f32.mrb[0].mxu0
      %v3614 = vadd.f32 %v3389, %v3613
      %v3615 = vpop.f32.mrb[0].mxu0
      %3616 = vmatprep.mubr.f32.mxu0 0.0
      %3617 = vmatmul.mubr.f32.gmra.mrb[0].mxu0 %v2314
      %v3618 = vpop.f32.mrb[0].mxu0
      %v3619 = vadd.f32 %v3394, %v3618
      %v3620 = vpop.f32.mrb[0].mxu0
      %3621 = vmatprep.mubr.f32.mxu0 0.0
      %3622 = vmatmul.mubr.f32.gmra.mrb[0].mxu0 %v2317
      %v3623 = vpop.f32.mrb[0].mxu0
      %v3624 = vadd.f32 %v3399, %v3623
      %v3625 = vpop.f32.mrb[0].mxu0
      %3626 = vmatprep.mubr.f32.mxu0 0.0
      %3627 = vmatmul.mubr.f32.gmra.mrb[0].mxu0 %v2319
      %v3628 = vpop.f32.mrb[0].mxu0
      %v3629 = vadd.f32 %v3404, %v3628
      %v3630 = vpop.f32.mrb[0].mxu0
      %3631 = vmatprep.mubr.f32.mxu0 0.0
      %3632 = vmatmul.mubr.f32.gmra.mrb[0].mxu0 %v2322
      %v3633 = vpop.f32.mrb[0].mxu0
      %v3634 = vadd.f32 %v3409, %v3633
      %v3635 = vpop.f32.mrb[0].mxu0
      %3636 = vmatprep.mubr.f32.mxu0 0.0
      %3637 = vmatmul.mubr.f32.gmra.mrb[0].mxu0 %v2324
      %v3638 = vpop.f32.mrb[0].mxu0
      %v3639 = vadd.f32 %v3414, %v3638
      %v3640 = vpop.f32.mrb[0].mxu0
      %3641 = vmatprep.mubr.f32.mxu0 0.0
      %3642 = vmatmul.mubr.f32.gmra.mrb[0].mxu0 %v2327
      %v3643 = vpop.f32.mrb[0].mxu0
      %v3644 = vadd.f32 %v3419, %v3643
      %v3645 = vpop.f32.mrb[0].mxu0
      %3646 = vmatprep.mubr.f32.mxu0 0.0
      %3647 = vmatmul.mubr.f32.gmra.mrb[0].mxu0 %v2329
      %v3648 = vpop.f32.mrb[0].mxu0
      %v3649 = vadd.f32 %v3424, %v3648
      %v3650 = vpop.f32.mrb[0].mxu0
      %3651 = vmatprep.mubr.f32.mxu0 0.0
      %3652 = vmatmul.mubr.f32.gmra.mrb[0].mxu0 %v2374
      %v3653 = vpop.f32.mrb[0].mxu0
      %v3654 = vadd.f32 %v3429, %v3653
      %v3655 = vpop.f32.mrb[0].mxu0
      %3656 = vmatprep.mubr.f32.mxu0 0.0
      %3657 = vmatmul.mubr.f32.gmra.mrb[0].mxu0 %v2376
      %v3658 = vpop.f32.mrb[0].mxu0
      %v3659 = vadd.f32 %v3434, %v3658
      %v3660 = vpop.f32.mrb[0].mxu0
      %3661 = vmatprep.mubr.f32.mxu0 0.0
      %3662 = vmatmul.mubr.f32.gmra.mrb[0].mxu0 %v2391
      %v3663 = vpop.f32.mrb[0].mxu0
      %v3664 = vadd.f32 %v3439, %v3663
      %v3665 = vpop.f32.mrb[0].mxu0
      %3666 = vmatprep.mubr.f32.mxu0 0.0
      %3667 = vmatmul.mubr.f32.gmra.mrb[0].mxu0 %v2393
      %v3668 = vpop.f32.mrb[0].mxu0
      %v3669 = vadd.f32 %v3444, %v3668
      %v3670 = vpop.f32.mrb[0].mxu0
      %3671 = vdwg.mxu0
      %v3672 = vld [vmem:[%s5] sm:$0xff]
      %v3673 = vld [vmem:[%s5 + $0x8] sm:$0xff]
      %v3674 = vld [vmem:[%s5 + $0x10] sm:$0xff]
      %v3675 = vld [vmem:[%s5 + $0x18] sm:$0xff]
      %v3676 = vld [vmem:[%s5 + $0x20] sm:$0xff]
      %v3677 = vld [vmem:[%s5 + $0x28] sm:$0xff]
      %v3678 = vld [vmem:[%s5 + $0x30] sm:$0xff]
      %v3679 = vld [vmem:[%s5 + $0x38] sm:$0xff]
      %v3680 = vld [vmem:[%s5 + $0x40] sm:$0xff]
      %v3681 = vld [vmem:[%s5 + $0x48] sm:$0xff]
      %v3682 = vld [vmem:[%s5 + $0x50] sm:$0xff]
      %v3683 = vld [vmem:[%s5 + $0x58] sm:$0xff]
      %v3684 = vld [vmem:[%s5 + $0x60] sm:$0xff]
      %v3685 = vld [vmem:[%s5 + $0x68] sm:$0xff]
      %v3686 = vld [vmem:[%s5 + $0x70] sm:$0xff]
      %v3687 = vld [vmem:[%s5 + $0x78] sm:$0xff]
      %v3688 = vld [vmem:[%s6] sm:$0x1]
      %v3690 = vlaneseq
      %v3691 = vshrl.u32 %v3690, 7
      %v3692 = vsub.s32 0, %v3691
      %v3693 = vrot.slane %v3688, %v3692
      %3695 = vmatprep.subr.mxu0 0.0
      %3696 = vmatpush1.msra.mxu0 %v3672
      %3697 = vmatprep.subr.mxu0 0.0
      %3698 = vmatpush1.msra.mxu0 %v3673
      %3699 = vmatprep.subr.mxu0 0.0
      %3700 = vmatpush1.msra.mxu0 %v3674
      %3701 = vmatprep.subr.mxu0 0.0
      %3702 = vmatpush1.msra.mxu0 %v3675
      %3703 = vmatprep.subr.mxu0 0.0
      %3704 = vmatpush1.msra.mxu0 %v3676
      %3705 = vmatprep.subr.mxu0 0.0
      %3706 = vmatpush1.msra.mxu0 %v3677
      %3707 = vmatprep.subr.mxu0 0.0
      %3708 = vmatpush1.msra.mxu0 %v3678
      %3709 = vmatprep.subr.mxu0 0.0
      %3710 = vmatpush1.msra.mxu0 %v3679
      %3711 = vmatprep.subr.mxu0 0.0
      %3712 = vmatpush1.msra.mxu0 %v3680
      %3713 = vmatprep.subr.mxu0 0.0
      %3714 = vmatpush1.msra.mxu0 %v3681
      %3715 = vmatprep.subr.mxu0 0.0
      %3716 = vmatpush1.msra.mxu0 %v3682
      %3717 = vmatprep.subr.mxu0 0.0
      %3718 = vmatpush1.msra.mxu0 %v3683
      %3719 = vmatprep.subr.mxu0 0.0
      %3720 = vmatpush1.msra.mxu0 %v3684
      %3721 = vmatprep.subr.mxu0 0.0
      %3722 = vmatpush1.msra.mxu0 %v3685
      %3723 = vmatprep.subr.mxu0 0.0
      %3724 = vmatpush1.msra.mxu0 %v3686
      %3725 = vmatprep.subr.mxu0 0.0
      %3726 = vmatpush1.msra.mxu0 %v3687
      %3727 = vmatprep.subr.mxu0 0.0
      %3728 = vmatpush1.msra.mxu0 0.0
      %3729 = vmatprep.subr.mxu0 0.0
      %3730 = vmatpush1.msra.mxu0 0.0
      %3731 = vmatprep.subr.mxu0 0.0
      %3732 = vmatpush1.msra.mxu0 0.0
      %3733 = vmatprep.subr.mxu0 0.0
      %3734 = vmatpush1.msra.mxu0 0.0
      %3735 = vmatprep.subr.mxu0 0.0
      %3736 = vmatpush1.msra.mxu0 0.0
      %3737 = vmatprep.subr.mxu0 0.0
      %3738 = vmatpush1.msra.mxu0 0.0
      %3739 = vmatprep.subr.mxu0 0.0
      %3740 = vmatpush1.msra.mxu0 0.0
      %3741 = vmatprep.subr.mxu0 0.0
      %3742 = vmatpush1.msra.mxu0 0.0
      %3743 = vmatprep.subr.mxu0 0.0
      %3744 = vmatpush1.msra.mxu0 0.0
      %3745 = vmatprep.subr.mxu0 0.0
      %3746 = vmatpush1.msra.mxu0 0.0
      %3747 = vmatprep.subr.mxu0 0.0
      %3748 = vmatpush1.msra.mxu0 0.0
      %3749 = vmatprep.subr.mxu0 0.0
      %3750 = vmatpush1.msra.mxu0 0.0
      %3751 = vmatprep.subr.mxu0 0.0
      %3752 = vmatpush1.msra.mxu0 0.0
      %3753 = vmatprep.subr.mxu0 0.0
      %3754 = vmatpush1.msra.mxu0 0.0
      %3755 = vmatprep.subr.mxu0 0.0
      %3756 = vmatpush1.msra.mxu0 0.0
      %3757 = vmatprep.subr.mxu0 0.0
      %3758 = vmatpush1.msra.mxu0 0.0
      %3759 = vmatprep.mubr.f32.mxu0 0.0
      %3760 = vmatmul.mubr.f32.gmra.mrb[0].mxu0 %v389
      %v3761 = vpop.f32.mrb[0].mxu0
      %v3762 = vadd.f32 %v3693, %v3761
      %v3763 = vpop.f32.mrb[0].mxu0
      %3764 = vmatprep.mubr.f32.mxu0 0.0
      %3765 = vmatmul.mubr.f32.gmra.mrb[0].mxu0 %v391
      %v3766 = vpop.f32.mrb[0].mxu0
      %v3767 = vadd.f32 %v3693, %v3766
      %v3768 = vpop.f32.mrb[0].mxu0
      %3769 = vmatprep.mubr.f32.mxu0 0.0
      %3770 = vmatmul.mubr.f32.gmra.mrb[0].mxu0 %v394
      %v3771 = vpop.f32.mrb[0].mxu0
      %v3772 = vadd.f32 %v3693, %v3771
      %v3773 = vpop.f32.mrb[0].mxu0
      %3774 = vmatprep.mubr.f32.mxu0 0.0
      %3775 = vmatmul.mubr.f32.gmra.mrb[0].mxu0 %v396
      %v3776 = vpop.f32.mrb[0].mxu0
      %v3777 = vadd.f32 %v3693, %v3776
      %v3778 = vpop.f32.mrb[0].mxu0
      %3779 = vmatprep.mubr.f32.mxu0 0.0
      %3780 = vmatmul.mubr.f32.gmra.mrb[0].mxu0 %v399
      %v3781 = vpop.f32.mrb[0].mxu0
      %v3782 = vadd.f32 %v3693, %v3781
      %v3783 = vpop.f32.mrb[0].mxu0
      %3784 = vmatprep.mubr.f32.mxu0 0.0
      %3785 = vmatmul.mubr.f32.gmra.mrb[0].mxu0 %v401
      %v3786 = vpop.f32.mrb[0].mxu0
      %v3787 = vadd.f32 %v3693, %v3786
      %v3788 = vpop.f32.mrb[0].mxu0
      %3789 = vmatprep.mubr.f32.mxu0 0.0
      %3790 = vmatmul.mubr.f32.gmra.mrb[0].mxu0 %v404
      %v3791 = vpop.f32.mrb[0].mxu0
      %v3792 = vadd.f32 %v3693, %v3791
      %v3793 = vpop.f32.mrb[0].mxu0
      %3794 = vmatprep.mubr.f32.mxu0 0.0
      %3795 = vmatmul.mubr.f32.gmra.mrb[0].mxu0 %v406
      %v3796 = vpop.f32.mrb[0].mxu0
      %v3797 = vadd.f32 %v3693, %v3796
      %v3798 = vpop.f32.mrb[0].mxu0
      %3799 = vmatprep.mubr.f32.mxu0 0.0
      %3800 = vmatmul.mubr.f32.gmra.mrb[0].mxu0 %v409
      %v3801 = vpop.f32.mrb[0].mxu0
      %v3802 = vadd.f32 %v3693, %v3801
      %v3803 = vpop.f32.mrb[0].mxu0
      %3804 = vmatprep.mubr.f32.mxu0 0.0
      %3805 = vmatmul.mubr.f32.gmra.mrb[0].mxu0 %v411
      %v3806 = vpop.f32.mrb[0].mxu0
      %v3807 = vadd.f32 %v3693, %v3806
      %v3808 = vpop.f32.mrb[0].mxu0
      %3809 = vmatprep.mubr.f32.mxu0 0.0
      %3810 = vmatmul.mubr.f32.gmra.mrb[0].mxu0 %v414
      %v3811 = vpop.f32.mrb[0].mxu0
      %v3812 = vadd.f32 %v3693, %v3811
      %v3813 = vpop.f32.mrb[0].mxu0
      %3814 = vmatprep.mubr.f32.mxu0 0.0
      %3815 = vmatmul.mubr.f32.gmra.mrb[0].mxu0 %v416
      %v3816 = vpop.f32.mrb[0].mxu0
      %v3817 = vadd.f32 %v3693, %v3816
      %v3818 = vpop.f32.mrb[0].mxu0
      %3819 = vmatprep.mubr.f32.mxu0 0.0
      %3820 = vmatmul.mubr.f32.gmra.mrb[0].mxu0 %v419
      %v3821 = vpop.f32.mrb[0].mxu0
      %v3822 = vadd.f32 %v3693, %v3821
      %v3823 = vpop.f32.mrb[0].mxu0
      %3824 = vmatprep.mubr.f32.mxu0 0.0
      %3825 = vmatmul.mubr.f32.gmra.mrb[0].mxu0 %v421
      %v3826 = vpop.f32.mrb[0].mxu0
      %v3827 = vadd.f32 %v3693, %v3826
      %v3828 = vpop.f32.mrb[0].mxu0
      %3829 = vmatprep.mubr.f32.mxu0 0.0
      %3830 = vmatmul.mubr.f32.gmra.mrb[0].mxu0 %v424
      %v3831 = vpop.f32.mrb[0].mxu0
      %v3832 = vadd.f32 %v3693, %v3831
      %v3833 = vpop.f32.mrb[0].mxu0
      %3834 = vmatprep.mubr.f32.mxu0 0.0
      %3835 = vmatmul.mubr.f32.gmra.mrb[0].mxu0 %v426
      %v3836 = vpop.f32.mrb[0].mxu0
      %v3837 = vadd.f32 %v3693, %v3836
      %v3838 = vpop.f32.mrb[0].mxu0
      %3839 = vmatprep.mubr.f32.mxu0 0.0
      %3840 = vmatmul.mubr.f32.gmra.mrb[0].mxu0 %v429
      %v3841 = vpop.f32.mrb[0].mxu0
      %v3842 = vadd.f32 %v3693, %v3841
      %v3843 = vpop.f32.mrb[0].mxu0
      %3844 = vmatprep.mubr.f32.mxu0 0.0
      %3845 = vmatmul.mubr.f32.gmra.mrb[0].mxu0 %v431
      %v3846 = vpop.f32.mrb[0].mxu0
      %v3847 = vadd.f32 %v3693, %v3846
      %v3848 = vpop.f32.mrb[0].mxu0
      %3849 = vmatprep.mubr.f32.mxu0 0.0
      %3850 = vmatmul.mubr.f32.gmra.mrb[0].mxu0 %v434
      %v3851 = vpop.f32.mrb[0].mxu0
      %v3852 = vadd.f32 %v3693, %v3851
      %v3853 = vpop.f32.mrb[0].mxu0
      %3854 = vmatprep.mubr.f32.mxu0 0.0
      %3855 = vmatmul.mubr.f32.gmra.mrb[0].mxu0 %v436
      %v3856 = vpop.f32.mrb[0].mxu0
      %v3857 = vadd.f32 %v3693, %v3856
      %v3858 = vpop.f32.mrb[0].mxu0
      %3859 = vmatprep.mubr.f32.mxu0 0.0
      %3860 = vmatmul.mubr.f32.gmra.mrb[0].mxu0 %v439
      %v3861 = vpop.f32.mrb[0].mxu0
      %v3862 = vadd.f32 %v3693, %v3861
      %v3863 = vpop.f32.mrb[0].mxu0
      %3864 = vmatprep.mubr.f32.mxu0 0.0
      %3865 = vmatmul.mubr.f32.gmra.mrb[0].mxu0 %v441
      %v3866 = vpop.f32.mrb[0].mxu0
      %v3867 = vadd.f32 %v3693, %v3866
      %v3868 = vpop.f32.mrb[0].mxu0
      %3869 = vmatprep.mubr.f32.mxu0 0.0
      %3870 = vmatmul.mubr.f32.gmra.mrb[0].mxu0 %v444
      %v3871 = vpop.f32.mrb[0].mxu0
      %v3872 = vadd.f32 %v3693, %v3871
      %v3873 = vpop.f32.mrb[0].mxu0
      %3874 = vmatprep.mubr.f32.mxu0 0.0
      %3875 = vmatmul.mubr.f32.gmra.mrb[0].mxu0 %v446
      %v3876 = vpop.f32.mrb[0].mxu0
      %v3877 = vadd.f32 %v3693, %v3876
      %v3878 = vpop.f32.mrb[0].mxu0
      %3879 = vmatprep.mubr.f32.mxu0 0.0
      %3880 = vmatmul.mubr.f32.gmra.mrb[0].mxu0 %v449
      %v3881 = vpop.f32.mrb[0].mxu0
      %v3882 = vadd.f32 %v3693, %v3881
      %v3883 = vpop.f32.mrb[0].mxu0
      %3884 = vmatprep.mubr.f32.mxu0 0.0
      %3885 = vmatmul.mubr.f32.gmra.mrb[0].mxu0 %v451
      %v3886 = vpop.f32.mrb[0].mxu0
      %v3887 = vadd.f32 %v3693, %v3886
      %v3888 = vpop.f32.mrb[0].mxu0
      %3889 = vmatprep.mubr.f32.mxu0 0.0
      %3890 = vmatmul.mubr.f32.gmra.mrb[0].mxu0 %v454
      %v3891 = vpop.f32.mrb[0].mxu0
      %v3892 = vadd.f32 %v3693, %v3891
      %v3893 = vpop.f32.mrb[0].mxu0
      %3894 = vmatprep.mubr.f32.mxu0 0.0
      %3895 = vmatmul.mubr.f32.gmra.mrb[0].mxu0 %v456
      %v3896 = vpop.f32.mrb[0].mxu0
      %v3897 = vadd.f32 %v3693, %v3896
      %v3898 = vpop.f32.mrb[0].mxu0
      %3899 = vmatprep.mubr.f32.mxu0 0.0
      %3900 = vmatmul.mubr.f32.gmra.mrb[0].mxu0 %v459
      %v3901 = vpop.f32.mrb[0].mxu0
      %v3902 = vadd.f32 %v3693, %v3901
      %v3903 = vpop.f32.mrb[0].mxu0
      %3904 = vmatprep.mubr.f32.mxu0 0.0
      %3905 = vmatmul.mubr.f32.gmra.mrb[0].mxu0 %v461
      %v3906 = vpop.f32.mrb[0].mxu0
      %v3907 = vadd.f32 %v3693, %v3906
      %v3908 = vpop.f32.mrb[0].mxu0
      %3909 = vmatprep.mubr.f32.mxu0 0.0
      %3910 = vmatmul.mubr.f32.gmra.mrb[0].mxu0 %v612
      %v3911 = vpop.f32.mrb[0].mxu0
      %v3912 = vadd.f32 %v3693, %v3911
      %v3913 = vpop.f32.mrb[0].mxu0
      %3914 = vmatprep.mubr.f32.mxu0 0.0
      %3915 = vmatmul.mubr.f32.gmra.mrb[0].mxu0 %v614
      %v3916 = vpop.f32.mrb[0].mxu0
      %v3917 = vadd.f32 %v3693, %v3916
      %v3918 = vpop.f32.mrb[0].mxu0
      %3919 = vdwg.mxu0
      %v3920 = vadd.f32 %v3514, %v3762
      %v3921 = vadd.f32 %v3519, %v3767
      %v3922 = vadd.f32 %v3524, %v3772
      %v3923 = vadd.f32 %v3529, %v3777
      %v3924 = vadd.f32 %v3534, %v3782
      %v3925 = vadd.f32 %v3539, %v3787
      %v3926 = vadd.f32 %v3544, %v3792
      %v3927 = vadd.f32 %v3549, %v3797
      %v3928 = vadd.f32 %v3554, %v3802
      %v3929 = vadd.f32 %v3559, %v3807
      %v3930 = vadd.f32 %v3564, %v3812
      %v3931 = vadd.f32 %v3569, %v3817
      %v3932 = vadd.f32 %v3574, %v3822
      %v3933 = vadd.f32 %v3579, %v3827
      %v3934 = vadd.f32 %v3584, %v3832
      %v3935 = vadd.f32 %v3589, %v3837
      %v3936 = vadd.f32 %v3594, %v3842
      %v3937 = vadd.f32 %v3599, %v3847
      %v3938 = vadd.f32 %v3604, %v3852
      %v3939 = vadd.f32 %v3609, %v3857
      %v3940 = vadd.f32 %v3614, %v3862
      %v3941 = vadd.f32 %v3619, %v3867
      %v3942 = vadd.f32 %v3624, %v3872
      %v3943 = vadd.f32 %v3629, %v3877
      %v3944 = vadd.f32 %v3634, %v3882
      %v3945 = vadd.f32 %v3639, %v3887
      %v3946 = vadd.f32 %v3644, %v3892
      %v3947 = vadd.f32 %v3649, %v3897
      %v3948 = vadd.f32 %v3654, %v3902
      %v3949 = vadd.f32 %v3659, %v3907
      %v3950 = vadd.f32 %v3664, %v3912
      %v3951 = vadd.f32 %v3669, %v3917
      %v3952 = vmax.f32 %v3920, 0.0
      %v3953 = vmax.f32 %v3921, 0.0
      %v3954 = vmax.f32 %v3922, 0.0
      %v3955 = vmax.f32 %v3923, 0.0
      %v3956 = vmax.f32 %v3924, 0.0
      %v3957 = vmax.f32 %v3925, 0.0
      %v3958 = vmax.f32 %v3926, 0.0
      %v3959 = vmax.f32 %v3927, 0.0
      %v3960 = vmax.f32 %v3928, 0.0
      %v3961 = vmax.f32 %v3929, 0.0
      %v3962 = vmax.f32 %v3930, 0.0
      %v3963 = vmax.f32 %v3931, 0.0
      %v3964 = vmax.f32 %v3932, 0.0
      %v3965 = vmax.f32 %v3933, 0.0
      %v3966 = vmax.f32 %v3934, 0.0
      %v3967 = vmax.f32 %v3935, 0.0
      %v3968 = vmax.f32 %v3936, 0.0
      %v3969 = vmax.f32 %v3937, 0.0
      %v3970 = vmax.f32 %v3938, 0.0
      %v3971 = vmax.f32 %v3939, 0.0
      %v3972 = vmax.f32 %v3940, 0.0
      %v3973 = vmax.f32 %v3941, 0.0
      %v3974 = vmax.f32 %v3942, 0.0
      %v3975 = vmax.f32 %v3943, 0.0
      %v3976 = vmax.f32 %v3944, 0.0
      %v3977 = vmax.f32 %v3945, 0.0
      %v3978 = vmax.f32 %v3946, 0.0
      %v3979 = vmax.f32 %v3947, 0.0
      %v3980 = vmax.f32 %v3948, 0.0
      %v3981 = vmax.f32 %v3949, 0.0
      %v3982 = vmax.f32 %v3950, 0.0
      %v3983 = vmax.f32 %v3951, 0.0
      %3984 = vst [vmem:[%s278] sm:$0xff] %v3952
      %3985 = vst [vmem:[%s278 + $0x8] sm:$0xff] %v3953
      %3986 = vst [vmem:[%s278 + $0x10] sm:$0xff] %v3954
      %3987 = vst [vmem:[%s278 + $0x18] sm:$0xff] %v3955
      %3988 = vst [vmem:[%s278 + $0x20] sm:$0xff] %v3956
      %3989 = vst [vmem:[%s278 + $0x28] sm:$0xff] %v3957
      %3990 = vst [vmem:[%s278 + $0x30] sm:$0xff] %v3958
      %3991 = vst [vmem:[%s278 + $0x38] sm:$0xff] %v3959
      %3992 = vst [vmem:[%s278 + $0x40] sm:$0xff] %v3960
      %3993 = vst [vmem:[%s278 + $0x48] sm:$0xff] %v3961
      %3994 = vst [vmem:[%s278 + $0x50] sm:$0xff] %v3962
      %3995 = vst [vmem:[%s278 + $0x58] sm:$0xff] %v3963
      %3996 = vst [vmem:[%s278 + $0x60] sm:$0xff] %v3964
      %3997 = vst [vmem:[%s278 + $0x68] sm:$0xff] %v3965
      %3998 = vst [vmem:[%s278 + $0x70] sm:$0xff] %v3966
      %3999 = vst [vmem:[%s278 + $0x78] sm:$0xff] %v3967
      %4000 = vst [vmem:[%s278 + $0x80] sm:$0xff] %v3968
      %4001 = vst [vmem:[%s278 + $0x88] sm:$0xff] %v3969
      %4002 = vst [vmem:[%s278 + $0x90] sm:$0xff] %v3970
      %4003 = vst [vmem:[%s278 + $0x98] sm:$0xff] %v3971
      %4004 = vst [vmem:[%s278 + $0xa0] sm:$0xff] %v3972
      %4005 = vst [vmem:[%s278 + $0xa8] sm:$0xff] %v3973
      %4006 = vst [vmem:[%s278 + $0xb0] sm:$0xff] %v3974
      %4007 = vst [vmem:[%s278 + $0xb8] sm:$0xff] %v3975
      %4008 = vst [vmem:[%s278 + $0xc0] sm:$0xff] %v3976
      %4009 = vst [vmem:[%s278 + $0xc8] sm:$0xff] %v3977
      %4010 = vst [vmem:[%s278 + $0xd0] sm:$0xff] %v3978
      %4011 = vst [vmem:[%s278 + $0xd8] sm:$0xff] %v3979
      %4012 = vst [vmem:[%s278 + $0xe0] sm:$0xff] %v3980
      %4013 = vst [vmem:[%s278 + $0xe8] sm:$0xff] %v3981
      %4014 = vst [vmem:[%s278 + $0xf0] sm:$0xff] %v3982
      %4015 = vst [vmem:[%s278 + $0xf8] sm:$0xff] %v3983
      %p4016 = scmp.lt.s32.totalorder %s18, 1
      %s4017 = scalar_select %p4016, %s18, 1
      %s4018 = smul.addr %s4017, 32
      %s4019 = smul.addr %s4018, 8
      %s4020 = scalar_lea.vmem %s7, %s4019
      // Predicated region
      $region49: #{basic_block_forward.1} parent=47 // pred_check
        %p4021 = pneg %p188
      $region50: #{basic_block_forward.1} parent=47 // pred_check_branch
        %4023 = sbr.rel (%p4021) target = $region52
      $region51: #{basic_block_forward.1} parent=47 // pred_region
        _
      $region52: #{basic_block_forward.1} parent=47 // pred_fallthru
        _
    $region48: #{basic_block_forward.1} parent=5 // pred_fallthru
      _
    %p4024 = scmp.le.s32.totalorder 2, %s13
    // Predicated region
    $region53: #{basic_block_forward.1} parent=5 // pred_check
      %p4025 = pneg %p4024
    $region54: #{basic_block_forward.1} parent=5 // pred_check_branch
      %4027 = sbr.rel (%p4025) target = $region56
    $region55: #{basic_block_forward.1} parent=5 // pred_region
      %s4028 = ssub.s32 %s13, 2
      // Predicated region
      $region57: #{basic_block_forward.1} parent=55 // pred_check
        %p4029 = pneg %p194
      $region58: #{basic_block_forward.1} parent=55 // pred_check_branch
        %4031 = sbr.rel (%p4029) target = $region60
      $region59: #{basic_block_forward.1} parent=55 // pred_region
        %p4032 = scmp.lt.s32.totalorder %s19, 1
        %s4033 = scalar_select %p4032, %s19, 1
        %s4034 = smul.addr %s4033, 32
        %s4035 = smul.addr %s4034, 8
        %s4036 = scalar_lea.vmem %s7, %s4035
      $region60: #{basic_block_forward.1} parent=55 // pred_fallthru
        _
    $region56: #{basic_block_forward.1} parent=5 // pred_fallthru
      _
  $region6: #{basic_block_forward.1} parent=0 // loop_footer
    %s17 = sadd.s32 1, %s13
  $region7: #{basic_block_forward.1} parent=0 // loop_footer_branch
    %12 = sbr.rel target = $region3
  $region8: #{basic_block_forward.1} parent=0 // loop_exit
    _

</llo_original>
